<compile_context>
chip_gen: v5e
topology: v5e:2x2
jax: 0.10.0
libtpu: 0.0.40
codegen_flags: <defaults>
</compile_context>

<pallas_src>
import functools

import jax
import jax.numpy as jnp
from jax.experimental import pallas as pl
from jax.experimental.pallas import tpu as pltpu


def _activated_conv_kernel(x_ref, w_ref, s_ref, t_ref, o_ref, patches_ref,
                           *, KH, KW, H_out, W_out):
    """One batch element: im2col -> single MXU matmul -> scale/shift -> store.

    x_ref:       (1, Hp, Wp, Cin)         padded input block (VMEM)
    w_ref:       (KH*KW*Cin, Cout)        reshaped conv weight
    s_ref:       (1, 1, Cout)             per-batch scale  = Linear(betas)
    t_ref:       (1, 1, Cout)             per-batch shift  = scale * conv_bias
    o_ref:       (1, H_out, W_out, Cout)  output block
    patches_ref: (H_out*W_out, KH*KW*Cin) im2col scratch (VMEM)
    """
    Cin = x_ref.shape[-1]
    Cout = o_ref.shape[-1]

    # Build the im2col matrix. Every column block of the scratch is fully
    # overwritten, so no zero-fill of the scratch is ever needed.
    for kh in range(KH):
        for kw in range(KW):
            tap = kh * KW + kw
            win = x_ref[:, kh:kh + H_out, kw:kw + W_out, :]
            patches_ref[:, tap * Cin:(tap + 1) * Cin] = win.reshape(
                H_out * W_out, Cin)

    # One MXU contraction with K = KH*KW*Cin (instead of 9 tiny K=Cin matmuls
    # plus 8 accumulator adds).
    acc = jnp.dot(patches_ref[...], w_ref[...],
                  preferred_element_type=jnp.float32)     # (H_out*W_out, Cout)

    # Hyper-scale and (scale * conv_bias) shift, hoisted to the wrapper;
    # here it is just a VPU broadcast multiply-add.
    acc = acc * s_ref[0] + t_ref[0]

    o_ref[...] = acc.reshape(1, H_out, W_out, Cout)


def _padded_bytes(shape, itemsize=4):
    """VMEM footprint of an f32 block after (8, 128) tile padding."""
    dims = list(shape)
    while len(dims) < 2:
        dims.insert(0, 1)
    dims[-1] = pl.cdiv(dims[-1], 128) * 128
    dims[-2] = pl.cdiv(dims[-2], 8) * 8
    n = 1
    for d in dims:
        n *= d
    return n * itemsize


def activated_conv2d(x_nchw, betas, conv_w, conv_b, hs_w, hs_b, *, padding=0):
    """ActivatedConv2d forward. x: (N, Cin, H, W) NCHW; returns NCHW f32."""
    N, Cin, H, W = x_nchw.shape
    Cout, Cin_w, KH, KW = conv_w.shape
    assert Cin_w == Cin
    H_out = H + 2 * padding - (KH - 1)
    W_out = W + 2 * padding - (KW - 1)
    Hp, Wp = H + 2 * padding, W + 2 * padding

    # NCHW -> NHWC (channels on lanes); spatial zero-pad done once by XLA.
    x = jnp.transpose(x_nchw, (0, 2, 3, 1)).astype(jnp.float32)
    if padding:
        x = jnp.pad(x, ((0, 0), (padding, padding), (padding, padding), (0, 0)))

    # Conv weight OIHW -> (KH*KW*Cin, Cout), matching the in-kernel tap order.
    w_mat = jnp.transpose(conv_w, (2, 3, 1, 0)).reshape(
        KH * KW * Cin, Cout).astype(jnp.float32)

    # Hoisted hyper-scale: Linear(1 -> Cout)(betas); fold conv bias into a
    # per-batch additive shift so the kernel does one mul + one add.
    scale = (betas.astype(jnp.float32) @ hs_w.astype(jnp.float32).T
             + hs_b.astype(jnp.float32)[None, :])                   # (N, Cout)
    shift = scale * conv_b.astype(jnp.float32)[None, :]             # (N, Cout)
    scale3 = scale.reshape(N, 1, Cout)
    shift3 = shift.reshape(N, 1, Cout)

    kernel = functools.partial(_activated_conv_kernel, KH=KH, KW=KW,
                               H_out=H_out, W_out=W_out)

    # Size the scoped VMEM limit from the per-step working set (double-buffered
    # pipeline buffers + im2col scratch), clamped to the v7x 64 MiB budget.
    block_shapes = [
        (1, Hp, Wp, Cin), (KH * KW * Cin, Cout), (1, 1, Cout), (1, 1, Cout),
        (1, H_out, W_out, Cout),
    ]
    vmem_bytes = 2 * sum(_padded_bytes(s) for s in block_shapes)
    vmem_bytes += _padded_bytes((H_out * W_out, KH * KW * Cin))
    vmem_bytes += 2 * 1024 * 1024                                   # headroom
    vmem_bytes = int(min(max(vmem_bytes, 16 * 1024 * 1024), 64 * 1024 * 1024))

    out_nhwc = pl.pallas_call(
        kernel,
        out_shape=jax.ShapeDtypeStruct((N, H_out, W_out, Cout), jnp.float32),
        grid_spec=pltpu.PrefetchScalarGridSpec(
            num_scalar_prefetch=0,
            grid=(N,),
            in_specs=[
                pl.BlockSpec((1, Hp, Wp, Cin), lambda n: (n, 0, 0, 0)),
                pl.BlockSpec((KH * KW * Cin, Cout), lambda n: (0, 0)),
                pl.BlockSpec((1, 1, Cout), lambda n: (n, 0, 0)),
                pl.BlockSpec((1, 1, Cout), lambda n: (n, 0, 0)),
            ],
            out_specs=pl.BlockSpec((1, H_out, W_out, Cout),
                                   lambda n: (n, 0, 0, 0)),
            scratch_shapes=[
                pltpu.VMEM((H_out * W_out, KH * KW * Cin), jnp.float32),
            ],
        ),
        compiler_params=pltpu.CompilerParams(
            dimension_semantics=("parallel",),
            vmem_limit_bytes=vmem_bytes,
        ),
    )(x, w_mat, scale3, shift3)

    return jnp.transpose(out_nhwc, (0, 3, 1, 2))


# ---------------- pure-JAX reference for correctness check ----------------
def reference(x, betas, conv_w, conv_b, hs_w, hs_b, padding):
    Cout = conv_w.shape[0]
    out = jax.lax.conv_general_dilated(
        x, conv_w, window_strides=(1, 1),
        padding=((padding, padding), (padding, padding)),
        dimension_numbers=("NCHW", "OIHW", "NCHW"))
    out = out + conv_b.reshape(1, Cout, 1, 1)
    scale = betas @ hs_w.T + hs_b.reshape(1, Cout)        # (N, Cout)
    return scale[:, :, None, None] * out


if __name__ == "__main__":
    import numpy as np

    key = jax.random.PRNGKey(0)
    ks = jax.random.split(key, 12)

    N, Cin, H, W = 2, 4, 16, 16
    x = jax.random.normal(ks[0], (N, Cin, H, W), jnp.float32)
    betas = jax.random.normal(ks[1], (N, 1), jnp.float32)

    # --- config 1: module defaults (kernel_size=3, stride=1, padding=0) ---
    Cout = 4
    conv_w = 0.2 * jax.random.normal(ks[2], (Cout, Cin, 3, 3), jnp.float32)
    conv_b = 0.1 * jax.random.normal(ks[3], (Cout,), jnp.float32)
    hs_w = (6.0 / (1 + Cout)) ** 0.5 * jax.random.uniform(
        ks[4], (Cout, 1), jnp.float32, -1.0, 1.0)          # xavier-uniform-ish
    hs_b = 0.1 * jax.random.normal(ks[5], (Cout,), jnp.float32)

    out = jax.block_until_ready(
        activated_conv2d(x, betas, conv_w, conv_b, hs_w, hs_b, padding=0))
    ref = jax.block_until_ready(
        reference(x, betas, conv_w, conv_b, hs_w, hs_b, 0))
    assert out.shape == (N, Cout, H - 2, W - 2) and out.dtype == jnp.float32
    np.testing.assert_allclose(np.asarray(out), np.asarray(ref),
                               rtol=1e-4, atol=1e-4)

    # --- config 2: 'same' padding and Cout != Cin ---
    Cout2 = 8
    conv_w2 = 0.2 * jax.random.normal(ks[6], (Cout2, Cin, 3, 3), jnp.float32)
    conv_b2 = 0.1 * jax.random.normal(ks[7], (Cout2,), jnp.float32)
    hs_w2 = (6.0 / (1 + Cout2)) ** 0.5 * jax.random.uniform(
        ks[8], (Cout2, 1), jnp.float32, -1.0, 1.0)
    hs_b2 = 0.1 * jax.random.normal(ks[9], (Cout2,), jnp.float32)

    out2 = jax.block_until_ready(
        activated_conv2d(x, betas, conv_w2, conv_b2, hs_w2, hs_b2, padding=1))
    ref2 = jax.block_until_ready(
        reference(x, betas, conv_w2, conv_b2, hs_w2, hs_b2, 1))
    assert out2.shape == (N, Cout2, H, W)
    np.testing.assert_allclose(np.asarray(out2), np.asarray(ref2),
                               rtol=1e-4, atol=1e-4)

    print("KERNEL_OK")
</pallas_src>

<mosaic_0001>
module attributes {stable_mosaic.version = 11 : i64} {
  func.func @_activated_conv_kernel(%arg0: i32, %arg1: memref<1x16x16x4xf32, #tpu.memory_space<vmem>>, %arg2: memref<36x4xf32, #tpu.memory_space<vmem>>, %arg3: memref<1x1x4xf32, #tpu.memory_space<vmem>>, %arg4: memref<1x1x4xf32, #tpu.memory_space<vmem>>, %arg5: memref<1x14x14x4xf32, #tpu.memory_space<vmem>>, %arg6: memref<196x36xf32, #tpu.memory_space<vmem>>) attributes {dimension_semantics = [#tpu.dimension_semantics<parallel>], iteration_bounds = array<i64: 2>, scalar_prefetch = 0 : i64, scratch_operands = 1 : i64, tpu.core_type = #tpu.core_type<tc>, window_params = [{transform_indices = @transform_0, window_bounds = array<i64: 1, 16, 16, 4>}, {pipeline_mode = #tpu.pipeline_mode<synchronous>, transform_indices = @transform_1, window_bounds = array<i64: 36, 4>}, {transform_indices = @transform_2, window_bounds = array<i64: 1, 1, 4>}, {transform_indices = @transform_3, window_bounds = array<i64: 1, 1, 4>}, {transform_indices = @transform_4, window_bounds = array<i64: 1, 14, 14, 4>}]} {
    %c0 = arith.constant 0 : index
    %c0_0 = arith.constant 0 : index
    %c0_1 = arith.constant 0 : index
    %c0_2 = arith.constant 0 : index
    %0 = vector.load %arg1[%c0, %c0_0, %c0_1, %c0_2] : memref<1x16x16x4xf32, #tpu.memory_space<vmem>>, vector<1x14x14x4xf32>
    %1 = vector.shape_cast %0 : vector<1x14x14x4xf32> to vector<196x4xf32>
    %c0_3 = arith.constant 0 : index
    %c0_4 = arith.constant 0 : index
    %2 = vector.load %arg6[%c0_3, %c0_4] : memref<196x36xf32, #tpu.memory_space<vmem>>, vector<196x4xf32>
    tpu.vector_store %arg6[%c0_3, %c0_4], %1 {strides = array<i32>} : memref<196x36xf32, #tpu.memory_space<vmem>>, vector<196x4xf32>,
    %c0_5 = arith.constant 0 : index
    %c0_6 = arith.constant 0 : index
    %c1 = arith.constant 1 : index
    %c0_7 = arith.constant 0 : index
    %3 = vector.load %arg1[%c0_5, %c0_6, %c1, %c0_7] : memref<1x16x16x4xf32, #tpu.memory_space<vmem>>, vector<1x14x14x4xf32>
    %4 = vector.shape_cast %3 : vector<1x14x14x4xf32> to vector<196x4xf32>
    %c0_8 = arith.constant 0 : index
    %c4 = arith.constant 4 : index
    %5 = vector.load %arg6[%c0_8, %c4] : memref<196x36xf32, #tpu.memory_space<vmem>>, vector<196x4xf32>
    tpu.vector_store %arg6[%c0_8, %c4], %4 {strides = array<i32>} : memref<196x36xf32, #tpu.memory_space<vmem>>, vector<196x4xf32>,
    %c0_9 = arith.constant 0 : index
    %c0_10 = arith.constant 0 : index
    %c2 = arith.constant 2 : index
    %c0_11 = arith.constant 0 : index
    %6 = vector.load %arg1[%c0_9, %c0_10, %c2, %c0_11] : memref<1x16x16x4xf32, #tpu.memory_space<vmem>>, vector<1x14x14x4xf32>
    %7 = vector.shape_cast %6 : vector<1x14x14x4xf32> to vector<196x4xf32>
    %c0_12 = arith.constant 0 : index
    %c8 = arith.constant 8 : index
    %8 = vector.load %arg6[%c0_12, %c8] : memref<196x36xf32, #tpu.memory_space<vmem>>, vector<196x4xf32>
    tpu.vector_store %arg6[%c0_12, %c8], %7 {strides = array<i32>} : memref<196x36xf32, #tpu.memory_space<vmem>>, vector<196x4xf32>,
    %c0_13 = arith.constant 0 : index
    %c1_14 = arith.constant 1 : index
    %c0_15 = arith.constant 0 : index
    %c0_16 = arith.constant 0 : index
    %9 = vector.load %arg1[%c0_13, %c1_14, %c0_15, %c0_16] : memref<1x16x16x4xf32, #tpu.memory_space<vmem>>, vector<1x14x14x4xf32>
    %10 = vector.shape_cast %9 : vector<1x14x14x4xf32> to vector<196x4xf32>
    %c0_17 = arith.constant 0 : index
    %c12 = arith.constant 12 : index
    %11 = vector.load %arg6[%c0_17, %c12] : memref<196x36xf32, #tpu.memory_space<vmem>>, vector<196x4xf32>
    tpu.vector_store %arg6[%c0_17, %c12], %10 {strides = array<i32>} : memref<196x36xf32, #tpu.memory_space<vmem>>, vector<196x4xf32>,
    %c0_18 = arith.constant 0 : index
    %c1_19 = arith.constant 1 : index
    %c1_20 = arith.constant 1 : index
    %c0_21 = arith.constant 0 : index
    %12 = vector.load %arg1[%c0_18, %c1_19, %c1_20, %c0_21] : memref<1x16x16x4xf32, #tpu.memory_space<vmem>>, vector<1x14x14x4xf32>
    %13 = vector.shape_cast %12 : vector<1x14x14x4xf32> to vector<196x4xf32>
    %c0_22 = arith.constant 0 : index
    %c16 = arith.constant 16 : index
    %14 = vector.load %arg6[%c0_22, %c16] : memref<196x36xf32, #tpu.memory_space<vmem>>, vector<196x4xf32>
    tpu.vector_store %arg6[%c0_22, %c16], %13 {strides = array<i32>} : memref<196x36xf32, #tpu.memory_space<vmem>>, vector<196x4xf32>,
    %c0_23 = arith.constant 0 : index
    %c1_24 = arith.constant 1 : index
    %c2_25 = arith.constant 2 : index
    %c0_26 = arith.constant 0 : index
    %15 = vector.load %arg1[%c0_23, %c1_24, %c2_25, %c0_26] : memref<1x16x16x4xf32, #tpu.memory_space<vmem>>, vector<1x14x14x4xf32>
    %16 = vector.shape_cast %15 : vector<1x14x14x4xf32> to vector<196x4xf32>
    %c0_27 = arith.constant 0 : index
    %c20 = arith.constant 20 : index
    %17 = vector.load %arg6[%c0_27, %c20] : memref<196x36xf32, #tpu.memory_space<vmem>>, vector<196x4xf32>
    tpu.vector_store %arg6[%c0_27, %c20], %16 {strides = array<i32>} : memref<196x36xf32, #tpu.memory_space<vmem>>, vector<196x4xf32>,
    %c0_28 = arith.constant 0 : index
    %c2_29 = arith.constant 2 : index
    %c0_30 = arith.constant 0 : index
    %c0_31 = arith.constant 0 : index
    %18 = vector.load %arg1[%c0_28, %c2_29, %c0_30, %c0_31] : memref<1x16x16x4xf32, #tpu.memory_space<vmem>>, vector<1x14x14x4xf32>
    %19 = vector.shape_cast %18 : vector<1x14x14x4xf32> to vector<196x4xf32>
    %c0_32 = arith.constant 0 : index
    %c24 = arith.constant 24 : index
    %20 = vector.load %arg6[%c0_32, %c24] : memref<196x36xf32, #tpu.memory_space<vmem>>, vector<196x4xf32>
    tpu.vector_store %arg6[%c0_32, %c24], %19 {strides = array<i32>} : memref<196x36xf32, #tpu.memory_space<vmem>>, vector<196x4xf32>,
    %c0_33 = arith.constant 0 : index
    %c2_34 = arith.constant 2 : index
    %c1_35 = arith.constant 1 : index
    %c0_36 = arith.constant 0 : index
    %21 = vector.load %arg1[%c0_33, %c2_34, %c1_35, %c0_36] : memref<1x16x16x4xf32, #tpu.memory_space<vmem>>, vector<1x14x14x4xf32>
    %22 = vector.shape_cast %21 : vector<1x14x14x4xf32> to vector<196x4xf32>
    %c0_37 = arith.constant 0 : index
    %c28 = arith.constant 28 : index
    %23 = vector.load %arg6[%c0_37, %c28] : memref<196x36xf32, #tpu.memory_space<vmem>>, vector<196x4xf32>
    tpu.vector_store %arg6[%c0_37, %c28], %22 {strides = array<i32>} : memref<196x36xf32, #tpu.memory_space<vmem>>, vector<196x4xf32>,
    %c0_38 = arith.constant 0 : index
    %c2_39 = arith.constant 2 : index
    %c2_40 = arith.constant 2 : index
    %c0_41 = arith.constant 0 : index
    %24 = vector.load %arg1[%c0_38, %c2_39, %c2_40, %c0_41] : memref<1x16x16x4xf32, #tpu.memory_space<vmem>>, vector<1x14x14x4xf32>
    %25 = vector.shape_cast %24 : vector<1x14x14x4xf32> to vector<196x4xf32>
    %c0_42 = arith.constant 0 : index
    %c32 = arith.constant 32 : index
    %26 = vector.load %arg6[%c0_42, %c32] : memref<196x36xf32, #tpu.memory_space<vmem>>, vector<196x4xf32>
    tpu.vector_store %arg6[%c0_42, %c32], %25 {strides = array<i32>} : memref<196x36xf32, #tpu.memory_space<vmem>>, vector<196x4xf32>,
    %c0_43 = arith.constant 0 : index
    %c0_44 = arith.constant 0 : index
    %27 = vector.load %arg6[%c0_43, %c0_44] : memref<196x36xf32, #tpu.memory_space<vmem>>, vector<196x36xf32>
    %c0_45 = arith.constant 0 : index
    %c0_46 = arith.constant 0 : index
    %28 = vector.load %arg2[%c0_45, %c0_46] : memref<36x4xf32, #tpu.memory_space<vmem>>, vector<36x4xf32>
    %cst = arith.constant dense<0.000000e+00> : vector<196x4xf32>
    %29 = tpu.matmul %27, %28, %cst {dimension_numbers = #tpu.dot_dimension_numbers<[1], [0], [0], [1], [0, 0, 1, 1], [], []>} : vector<196x36xf32>, vector<36x4xf32>, vector<196x4xf32> -> vector<196x4xf32>
    %c0_47 = arith.constant 0 : index
    %c0_48 = arith.constant 0 : index
    %c0_49 = arith.constant 0 : index
    %30 = vector.load %arg3[%c0_47, %c0_48, %c0_49] : memref<1x1x4xf32, #tpu.memory_space<vmem>>, vector<1x1x4xf32>
    %31 = vector.shape_cast %30 : vector<1x1x4xf32> to vector<1x4xf32>
    %32 = vector.broadcast %31 : vector<1x4xf32> to vector<196x4xf32>
    %33 = arith.mulf %29, %32 : vector<196x4xf32>
    %c0_50 = arith.constant 0 : index
    %c0_51 = arith.constant 0 : index
    %c0_52 = arith.constant 0 : index
    %34 = vector.load %arg4[%c0_50, %c0_51, %c0_52] : memref<1x1x4xf32, #tpu.memory_space<vmem>>, vector<1x1x4xf32>
    %35 = vector.shape_cast %34 : vector<1x1x4xf32> to vector<1x4xf32>
    %36 = vector.broadcast %35 : vector<1x4xf32> to vector<196x4xf32>
    %37 = arith.addf %33, %36 : vector<196x4xf32>
    %38 = vector.shape_cast %37 : vector<196x4xf32> to vector<1x14x14x4xf32>
    %c0_53 = arith.constant 0 : index
    %c0_54 = arith.constant 0 : index
    %c0_55 = arith.constant 0 : index
    %c0_56 = arith.constant 0 : index
    %39 = vector.load %arg5[%c0_53, %c0_54, %c0_55, %c0_56] : memref<1x14x14x4xf32, #tpu.memory_space<vmem>>, vector<1x14x14x4xf32>
    tpu.vector_store %arg5[%c0_53, %c0_54, %c0_55, %c0_56], %38 {strides = array<i32>} : memref<1x14x14x4xf32, #tpu.memory_space<vmem>>, vector<1x14x14x4xf32>,
    return
  }
  func.func @transform_0(%arg0: i32) -> (i32, i32, i32, i32) {
    %c0_i32 = arith.constant 0 : i32
    %c0_i32_0 = arith.constant 0 : i32
    %c0_i32_1 = arith.constant 0 : i32
    %c0_i32_2 = arith.constant 0 : i32
    return %arg0, %c0_i32, %c0_i32_0, %c0_i32_1 : i32, i32, i32, i32
  }
  func.func @transform_1(%arg0: i32) -> (i32, i32) {
    %c0_i32 = arith.constant 0 : i32
    %c0_i32_0 = arith.constant 0 : i32
    %c0_i32_1 = arith.constant 0 : i32
    return %c0_i32, %c0_i32_0 : i32, i32
  }
  func.func @transform_2(%arg0: i32) -> (i32, i32, i32) {
    %c0_i32 = arith.constant 0 : i32
    %c0_i32_0 = arith.constant 0 : i32
    %c0_i32_1 = arith.constant 0 : i32
    return %arg0, %c0_i32, %c0_i32_0 : i32, i32, i32
  }
  func.func @transform_3(%arg0: i32) -> (i32, i32, i32) {
    %c0_i32 = arith.constant 0 : i32
    %c0_i32_0 = arith.constant 0 : i32
    %c0_i32_1 = arith.constant 0 : i32
    return %arg0, %c0_i32, %c0_i32_0 : i32, i32, i32
  }
  func.func @transform_4(%arg0: i32) -> (i32, i32, i32, i32) {
    %c0_i32 = arith.constant 0 : i32
    %c0_i32_0 = arith.constant 0 : i32
    %c0_i32_1 = arith.constant 0 : i32
    %c0_i32_2 = arith.constant 0 : i32
    return %arg0, %c0_i32, %c0_i32_0, %c0_i32_1 : i32, i32, i32, i32
  }
}

</mosaic_0001>

<llo_original>
// kernel: tpu_custom_call.1
$region0: #{tpu_custom_call.1}
  #allocation0 [shape = 'u32[]', space=smem, size = 0x4, offset = 0x4, fixed_abs, tag = 'smem constant byte address 0x4 - core index']
  #allocation1 [shape = 'u32[72,128]{1,0:T(1,128)}', space=vmem, size = 0x9000, scoped, tag = 'internal scratch']
  #allocation2 [shape = 'f32[196,36]{1,0:T(8,128)}', space=vmem, size = 0x19000, scoped, tag = 'scratch operand']
  %s0 = inlined_call_operand.vmem [shape: f32[2,16,16,4], index: 0, kind: input, shape index: {}]
  %s1 = inlined_call_operand.vmem [shape: f32[36,4], index: 1, kind: input, shape index: {}]
  %s2 = inlined_call_operand.vmem [shape: f32[2,1,4], index: 2, kind: input, shape index: {}]
  %s3 = inlined_call_operand.vmem [shape: f32[2,1,4], index: 3, kind: input, shape index: {}]
  %s4 = inlined_call_operand.vmem [shape: f32[2,14,14,4], index: 4, kind: output, shape index: {}]
  %s5 = sld [smem:[#allocation0]]
  $region49: #{tpu_custom_call.1} parent=0
    _
  %s7 = ssub.s32 1, %s5
  %s8 = scalar_select 0, %s7, %s5
  loop: start=0, step=1, limit=4
  $region2: #{tpu_custom_call.1} parent=0 // loop_pre_header
    _
  $region3: #{tpu_custom_call.1} parent=0 // loop_header
    %s10 = sphi 0, %s14
    %p11 = scmp.ge.s32.totalorder %s10, 4
    %s20 = sphi 0, %s22
    %s23 = sphi 0, %s20
    %s24 = sphi 0, %s23
    %s40 = sphi 0, %s24
    %s44 = sphi 0, %s44
    %s46 = sphi 0, %s44
    %s47 = sphi 0, %s46
    %s61 = sphi 0, %s47
    %s67 = sphi 0, %s69
    %s70 = sphi 0, %s67
    %s71 = sphi 0, %s70
    %s87 = sphi 0, %s71
    %s93 = sphi 0, %s95
    %s96 = sphi 0, %s93
    %s97 = sphi 0, %s96
    %s113 = sphi 0, %s97
    %s119 = sphi 0, %s121
    %s122 = sphi 0, %s119
    %s123 = sphi 0, %s122
    %s139 = sphi 0, %s123
  $region4: #{tpu_custom_call.1} parent=0 // loop_header_branch
    %13 = sbr.rel (%p11) target = $region8
  $region5: #{tpu_custom_call.1} parent=0 // loop_body
    %s15 = ssub.s32 %s10, 1
    %s16 = ssub.s32 %s10, 2
    %s17 = sadd.s32 %s10, 1
    %s18 = ssub.s32 %s10, %s17
    %p19 = scmp.eq.s32.totalorder %s18, 0
    %s21 = sadd.s32 %s20, 1
    %s22 = scalar_select %p19, %s20, %s21
    %p25 = pneg %p19
    %p26 = scmp.eq.s32.totalorder %s10, 1
    %p27 = por %p25, %p26
    %p28 = scmp.ne.s32.totalorder %s20, %s23
    %p29 = scmp.eq.s32.totalorder %s10, 0
    %p30 = por %p28, %p29
    %p31 = scmp.ne.s32.totalorder %s20, %s23
    %p32 = scmp.eq.s32.totalorder %s15, 1
    %p33 = por %p31, %p32
    %p34 = scmp.ne.s32.totalorder %s23, %s24
    %p35 = scmp.eq.s32.totalorder %s15, 0
    %p36 = por %p34, %p35
    %p37 = scmp.ne.s32.totalorder %s23, %s24
    %p38 = scmp.eq.s32.totalorder %s16, 1
    %p39 = por %p37, %p38
    %p41 = scmp.ne.s32.totalorder %s24, %s40
    %p42 = scmp.eq.s32.totalorder %s16, 0
    %p43 = por %p41, %p42
    %s45 = sadd.s32 %s44, 1
    %p48 = scmp.eq.s32.totalorder %s10, 1
    %p49 = scmp.ne.s32.totalorder %s44, %s46
    %p50 = scmp.eq.s32.totalorder %s10, 0
    %p51 = por %p49, %p50
    %p52 = scmp.ne.s32.totalorder %s44, %s46
    %p53 = scmp.eq.s32.totalorder %s15, 1
    %p54 = por %p52, %p53
    %p55 = scmp.ne.s32.totalorder %s46, %s47
    %p56 = scmp.eq.s32.totalorder %s15, 0
    %p57 = por %p55, %p56
    %p58 = scmp.ne.s32.totalorder %s46, %s47
    %p59 = scmp.eq.s32.totalorder %s16, 1
    %p60 = por %p58, %p59
    %p62 = scmp.ne.s32.totalorder %s47, %s61
    %p63 = scmp.eq.s32.totalorder %s16, 0
    %p64 = por %p62, %p63
    %s65 = ssub.s32 %s10, %s17
    %p66 = scmp.eq.s32.totalorder %s65, 0
    %s68 = sadd.s32 %s67, 1
    %s69 = scalar_select %p66, %s67, %s68
    %p72 = pneg %p66
    %p73 = scmp.eq.s32.totalorder %s10, 1
    %p74 = por %p72, %p73
    %p75 = scmp.ne.s32.totalorder %s67, %s70
    %p76 = scmp.eq.s32.totalorder %s10, 0
    %p77 = por %p75, %p76
    %p78 = scmp.ne.s32.totalorder %s67, %s70
    %p79 = scmp.eq.s32.totalorder %s15, 1
    %p80 = por %p78, %p79
    %p81 = scmp.ne.s32.totalorder %s70, %s71
    %p82 = scmp.eq.s32.totalorder %s15, 0
    %p83 = por %p81, %p82
    %p84 = scmp.ne.s32.totalorder %s70, %s71
    %p85 = scmp.eq.s32.totalorder %s16, 1
    %p86 = por %p84, %p85
    %p88 = scmp.ne.s32.totalorder %s71, %s87
    %p89 = scmp.eq.s32.totalorder %s16, 0
    %p90 = por %p88, %p89
    %s91 = ssub.s32 %s10, %s17
    %p92 = scmp.eq.s32.totalorder %s91, 0
    %s94 = sadd.s32 %s93, 1
    %s95 = scalar_select %p92, %s93, %s94
    %p98 = pneg %p92
    %p99 = scmp.eq.s32.totalorder %s10, 1
    %p100 = por %p98, %p99
    %p101 = scmp.ne.s32.totalorder %s93, %s96
    %p102 = scmp.eq.s32.totalorder %s10, 0
    %p103 = por %p101, %p102
    %p104 = scmp.ne.s32.totalorder %s93, %s96
    %p105 = scmp.eq.s32.totalorder %s15, 1
    %p106 = por %p104, %p105
    %p107 = scmp.ne.s32.totalorder %s96, %s97
    %p108 = scmp.eq.s32.totalorder %s15, 0
    %p109 = por %p107, %p108
    %p110 = scmp.ne.s32.totalorder %s96, %s97
    %p111 = scmp.eq.s32.totalorder %s16, 1
    %p112 = por %p110, %p111
    %p114 = scmp.ne.s32.totalorder %s97, %s113
    %p115 = scmp.eq.s32.totalorder %s16, 0
    %p116 = por %p114, %p115
    %s117 = ssub.s32 %s10, %s17
    %p118 = scmp.eq.s32.totalorder %s117, 0
    %s120 = sadd.s32 %s119, 1
    %s121 = scalar_select %p118, %s119, %s120
    %p124 = pneg %p118
    %p125 = scmp.eq.s32.totalorder %s10, 1
    %p126 = por %p124, %p125
    %p127 = scmp.ne.s32.totalorder %s119, %s122
    %p128 = scmp.eq.s32.totalorder %s10, 0
    %p129 = por %p127, %p128
    %p130 = scmp.ne.s32.totalorder %s119, %s122
    %p131 = scmp.eq.s32.totalorder %s15, 1
    %p132 = por %p130, %p131
    %p133 = scmp.ne.s32.totalorder %s122, %s123
    %p134 = scmp.eq.s32.totalorder %s15, 0
    %p135 = por %p133, %p134
    %p136 = scmp.ne.s32.totalorder %s122, %s123
    %p137 = scmp.eq.s32.totalorder %s16, 1
    %p138 = por %p136, %p137
    %p140 = scmp.ne.s32.totalorder %s123, %s139
    %p141 = scmp.eq.s32.totalorder %s16, 0
    %p142 = por %p140, %p141
    %p143 = scmp.le.s32.totalorder 1, %s10
    %p144 = scmp.lt.s32.totalorder %s10, 3
    %p145 = pnand %p143, %p144
    %p146 = pneg %p145
    // Predicated region
    $region9: #{tpu_custom_call.1} parent=5 // pred_check
      _
    $region10: #{tpu_custom_call.1} parent=5 // pred_check_branch
      %148 = sbr.rel (%p145) target = $region12
    $region11: #{tpu_custom_call.1} parent=5 // pred_region
      %s149 = ssub.s32 %s10, 1
      // Predicated region
      $region13: #{tpu_custom_call.1} parent=11 // pred_check
        %p150 = pneg %p57
      $region14: #{tpu_custom_call.1} parent=11 // pred_check_branch
        %152 = sbr.rel (%p150) target = $region16
      $region15: #{tpu_custom_call.1} parent=11 // pred_region
        _
      $region16: #{tpu_custom_call.1} parent=11 // pred_fallthru
        _
    $region12: #{tpu_custom_call.1} parent=5 // pred_fallthru
      _
    %p153 = scmp.lt.s32.totalorder %s10, 2
    // Predicated region
    $region17: #{tpu_custom_call.1} parent=5 // pred_check
      %p154 = pneg %p153
    $region18: #{tpu_custom_call.1} parent=5 // pred_check_branch
      %156 = sbr.rel (%p154) target = $region20
    $region19: #{tpu_custom_call.1} parent=5 // pred_region
      // Predicated region
      $region21: #{tpu_custom_call.1} parent=19 // pred_check
        %p157 = pneg %p30
      $region22: #{tpu_custom_call.1} parent=19 // pred_check_branch
        %159 = sbr.rel (%p157) target = $region24
      $region23: #{tpu_custom_call.1} parent=19 // pred_region
        %p160 = scmp.lt.s32.totalorder %s10, 1
        %s161 = scalar_select %p160, %s10, 1
        %s162 = smul.addr %s161, 32
        %s163 = smul.addr %s162, 8
        %s164 = scalar_lea.vmem %s0, %s163
      $region24: #{tpu_custom_call.1} parent=19 // pred_fallthru
        _
      // Predicated region
      $region25: #{tpu_custom_call.1} parent=19 // pred_check
        %p165 = pneg %p77
      $region26: #{tpu_custom_call.1} parent=19 // pred_check_branch
        %167 = sbr.rel (%p165) target = $region28
      $region27: #{tpu_custom_call.1} parent=19 // pred_region
        %p168 = scmp.lt.s32.totalorder %s10, 1
        %s169 = scalar_select %p168, %s10, 1
        %s170 = scalar_lea.vmem %s2, %s169
      $region28: #{tpu_custom_call.1} parent=19 // pred_fallthru
        _
      // Predicated region
      $region29: #{tpu_custom_call.1} parent=19 // pred_check
        %p171 = pneg %p103
      $region30: #{tpu_custom_call.1} parent=19 // pred_check_branch
        %173 = sbr.rel (%p171) target = $region32
      $region31: #{tpu_custom_call.1} parent=19 // pred_region
        %p174 = scmp.lt.s32.totalorder %s10, 1
        %s175 = scalar_select %p174, %s10, 1
        %s176 = scalar_lea.vmem %s3, %s175
      $region32: #{tpu_custom_call.1} parent=19 // pred_fallthru
        _
    $region20: #{tpu_custom_call.1} parent=5 // pred_fallthru
      _
    %p177 = scmp.le.s32.totalorder 1, %s10
    %p178 = scmp.lt.s32.totalorder %s10, 3
    %p179 = pnand %p177, %p178
    %p180 = pneg %p179
    // Predicated region
    $region33: #{tpu_custom_call.1} parent=5 // pred_check
      _
    $region34: #{tpu_custom_call.1} parent=5 // pred_check_branch
      %182 = sbr.rel (%p179) target = $region36
    $region35: #{tpu_custom_call.1} parent=5 // pred_region
      %s183 = ssub.s32 %s10, 1
      %p184 = scmp.lt.s32.totalorder %s15, 1
      %s185 = scalar_select %p184, %s15, 1
      %s186 = smul.addr %s185, 32
      %s187 = smul.addr %s186, 8
      %s188 = scalar_lea.vmem %s0, %s187
      %p189 = pneg %p36
      %p190 = pneg %p33
      %p191 = pneg %p57
      %p192 = pneg %p54
      %p193 = scmp.lt.s32.totalorder %s15, 1
      %s194 = scalar_select %p193, %s15, 1
      %s195 = scalar_lea.vmem %s2, %s194
      %p196 = pneg %p83
      %p197 = pneg %p80
      %p198 = scmp.lt.s32.totalorder %s15, 1
      %s199 = scalar_select %p198, %s15, 1
      %s200 = scalar_lea.vmem %s3, %s199
      %p201 = pneg %p109
      %p202 = pneg %p106
      %p203 = pneg %p135
      %p204 = pneg %p132
      %p205 = scmp.lt.s32.totalorder %s15, 1
      %s206 = scalar_select %p205, %s15, 1
      %s207 = smul.addr %s206, 28
      %s208 = smul.addr %s207, 8
      %s209 = scalar_lea.vmem %s4, %s208
      %p210 = scmp.lt.s32.totalorder %s15, 1
      %s211 = scalar_select %p210, %s15, 1
      %s212 = smul.addr %s211, 32
      %s213 = smul.addr %s212, 8
      %s214 = scalar_lea.vmem %s0, %s213
      %p215 = scmp.lt.s32.totalorder %s15, 1
      %s216 = scalar_select %p215, %s15, 1
      %s217 = scalar_lea.vmem %s2, %s216
      %p218 = scmp.lt.s32.totalorder %s15, 1
      %s219 = scalar_select %p218, %s15, 1
      %s220 = scalar_lea.vmem %s3, %s219
      %p221 = scmp.lt.s32.totalorder %s15, 1
      %s222 = scalar_select %p221, %s15, 1
      %s223 = smul.addr %s222, 28
      %s224 = smul.addr %s223, 8
      %s225 = scalar_lea.vmem %s4, %s224
      %v226 = vld [vmem:[%s214] sm:$0xff]
      %v227 = vld [vmem:[%s214 + $0x8] sm:$0x3f]
      %v228 = vld [vmem:[%s214 + $0x10] sm:$0xff]
      %v229 = vld [vmem:[%s214 + $0x18] sm:$0x3f]
      %v230 = vld [vmem:[%s214 + $0x20] sm:$0xff]
      %v231 = vld [vmem:[%s214 + $0x28] sm:$0x3f]
      %v232 = vld [vmem:[%s214 + $0x30] sm:$0xff]
      %v233 = vld [vmem:[%s214 + $0x38] sm:$0x3f]
      %v234 = vld [vmem:[%s214 + $0x40] sm:$0xff]
      %v235 = vld [vmem:[%s214 + $0x48] sm:$0x3f]
      %v236 = vld [vmem:[%s214 + $0x50] sm:$0xff]
      %v237 = vld [vmem:[%s214 + $0x58] sm:$0x3f]
      %v238 = vld [vmem:[%s214 + $0x60] sm:$0xff]
      %v239 = vld [vmem:[%s214 + $0x68] sm:$0x3f]
      %v240 = vld [vmem:[%s214 + $0x70] sm:$0xff]
      %v241 = vld [vmem:[%s214 + $0x78] sm:$0x3f]
      %v242 = vld [vmem:[%s214 + $0x80] sm:$0xff]
      %v243 = vld [vmem:[%s214 + $0x88] sm:$0x3f]
      %v244 = vld [vmem:[%s214 + $0x90] sm:$0xff]
      %v245 = vld [vmem:[%s214 + $0x98] sm:$0x3f]
      %v246 = vld [vmem:[%s214 + $0xa0] sm:$0xff]
      %v247 = vld [vmem:[%s214 + $0xa8] sm:$0x3f]
      %v248 = vld [vmem:[%s214 + $0xb0] sm:$0xff]
      %v249 = vld [vmem:[%s214 + $0xb8] sm:$0x3f]
      %v250 = vld [vmem:[%s214 + $0xc0] sm:$0xff]
      %v251 = vld [vmem:[%s214 + $0xc8] sm:$0x3f]
      %v252 = vld [vmem:[%s214 + $0xd0] sm:$0xff]
      %v253 = vld [vmem:[%s214 + $0xd8] sm:$0x3f]
      %v282 = vrot.slane %v226, 2
      %v283 = vrot.slane %v226, 4
      %v284 = vrot.slane %v226, 6
      %v285 = vrot.slane %v227, 2
      %v286 = vrot.slane %v227, 4
      %v287 = vrot.slane %v228, 2
      %v288 = vrot.slane %v228, 4
      %v289 = vrot.slane %v228, 6
      %v290 = vrot.slane %v229, 2
      %v291 = vrot.slane %v229, 4
      %v292 = vrot.slane %v230, 2
      %v293 = vrot.slane %v230, 4
      %v294 = vrot.slane %v230, 6
      %v295 = vrot.slane %v231, 2
      %v296 = vrot.slane %v231, 4
      %v297 = vrot.slane %v232, 2
      %v298 = vrot.slane %v232, 4
      %v299 = vrot.slane %v232, 6
      %v300 = vrot.slane %v233, 2
      %v301 = vrot.slane %v233, 4
      %v302 = vrot.slane %v234, 2
      %v303 = vrot.slane %v234, 4
      %v304 = vrot.slane %v234, 6
      %v305 = vrot.slane %v235, 2
      %v306 = vrot.slane %v235, 4
      %v307 = vrot.slane %v236, 2
      %v308 = vrot.slane %v236, 4
      %v309 = vrot.slane %v236, 6
      %v310 = vrot.slane %v237, 2
      %v311 = vrot.slane %v237, 4
      %v312 = vrot.slane %v238, 2
      %v313 = vrot.slane %v238, 4
      %v314 = vrot.slane %v238, 6
      %v315 = vrot.slane %v239, 2
      %v316 = vrot.slane %v239, 4
      %v317 = vrot.slane %v240, 2
      %v318 = vrot.slane %v240, 4
      %v319 = vrot.slane %v240, 6
      %v320 = vrot.slane %v241, 2
      %v321 = vrot.slane %v241, 4
      %v322 = vrot.slane %v242, 2
      %v323 = vrot.slane %v242, 4
      %v324 = vrot.slane %v242, 6
      %v325 = vrot.slane %v243, 2
      %v326 = vrot.slane %v243, 4
      %v327 = vrot.slane %v244, 2
      %v328 = vrot.slane %v244, 4
      %v329 = vrot.slane %v244, 6
      %v330 = vrot.slane %v245, 2
      %v331 = vrot.slane %v245, 4
      %v332 = vrot.slane %v246, 2
      %v333 = vrot.slane %v246, 4
      %v334 = vrot.slane %v246, 6
      %v335 = vrot.slane %v247, 2
      %v336 = vrot.slane %v247, 4
      %v337 = vrot.slane %v248, 2
      %v338 = vrot.slane %v248, 4
      %v339 = vrot.slane %v248, 6
      %v340 = vrot.slane %v249, 2
      %v341 = vrot.slane %v249, 4
      %v342 = vrot.slane %v250, 2
      %v343 = vrot.slane %v250, 4
      %v344 = vrot.slane %v250, 6
      %v345 = vrot.slane %v251, 2
      %v346 = vrot.slane %v251, 4
      %v347 = vrot.slane %v252, 2
      %v348 = vrot.slane %v252, 4
      %v349 = vrot.slane %v252, 6
      %v350 = vrot.slane %v253, 2
      %v351 = vrot.slane %v253, 4
      %352 = vst [vmem:[#allocation1] ss:$4 sm:$0xff] %v226
      %s353 = scalar_lea.vmem [#allocation1], 1
      %354 = vst [vmem:[%s353] ss:$4 sm:$0xff] %v282
      %s355 = scalar_lea.vmem [#allocation1], 2
      %356 = vst [vmem:[%s355] ss:$4 sm:$0xff] %v283
      %s357 = scalar_lea.vmem [#allocation1], 3
      %358 = vst [vmem:[%s357] ss:$4 sm:$0xff] %v284
      %s359 = scalar_lea.vmem [#allocation1], 32
      %360 = vst [vmem:[%s359] ss:$4 sm:$0xff] %v227
      %s361 = scalar_lea.vmem [#allocation1], 33
      %362 = vst [vmem:[%s361] ss:$4 sm:$0xff] %v285
      %s363 = scalar_lea.vmem [#allocation1], 34
      %364 = vst [vmem:[%s363] ss:$4 sm:$0xff] %v286
      %s365 = scalar_lea.vmem [#allocation1], 35
      %366 = vst [vmem:[%s365] ss:$4 sm:$0xff] %v228
      %v367 = vld.sshfl [vmem:[#allocation1] sm:$0xff pattern:$0x73625140]
      %v368 = vld.sshfl [vmem:[#allocation1 + $0x20] sm:$0xff pattern:$0x73625140]
      %369 = vst [vmem:[#allocation1] ss:$4 sm:$0xff] %v287
      %370 = vst [vmem:[%s353] ss:$4 sm:$0xff] %v288
      %371 = vst [vmem:[%s355] ss:$4 sm:$0xff] %v289
      %372 = vst [vmem:[%s357] ss:$4 sm:$0xff] %v229
      %373 = vst [vmem:[%s359] ss:$4 sm:$0xff] %v290
      %374 = vst [vmem:[%s361] ss:$4 sm:$0xff] %v291
      %375 = vst [vmem:[%s363] ss:$4 sm:$0xff] %v230
      %376 = vst [vmem:[%s365] ss:$4 sm:$0xff] %v292
      %v377 = vld.sshfl [vmem:[#allocation1] sm:$0xff pattern:$0x73625140]
      %v378 = vld.sshfl [vmem:[#allocation1 + $0x20] sm:$0xff pattern:$0x73625140]
      %379 = vst [vmem:[#allocation1] ss:$4 sm:$0xff] %v293
      %380 = vst [vmem:[%s353] ss:$4 sm:$0xff] %v294
      %381 = vst [vmem:[%s355] ss:$4 sm:$0xff] %v231
      %382 = vst [vmem:[%s357] ss:$4 sm:$0xff] %v295
      %383 = vst [vmem:[%s359] ss:$4 sm:$0xff] %v296
      %384 = vst [vmem:[%s361] ss:$4 sm:$0xff] %v232
      %385 = vst [vmem:[%s363] ss:$4 sm:$0xff] %v297
      %386 = vst [vmem:[%s365] ss:$4 sm:$0xff] %v298
      %v387 = vld.sshfl [vmem:[#allocation1] sm:$0xff pattern:$0x73625140]
      %v388 = vld.sshfl [vmem:[#allocation1 + $0x20] sm:$0xff pattern:$0x73625140]
      %389 = vst [vmem:[#allocation1] ss:$4 sm:$0xff] %v299
      %390 = vst [vmem:[%s353] ss:$4 sm:$0xff] %v233
      %391 = vst [vmem:[%s355] ss:$4 sm:$0xff] %v300
      %392 = vst [vmem:[%s357] ss:$4 sm:$0xff] %v301
      %393 = vst [vmem:[%s359] ss:$4 sm:$0xff] %v234
      %394 = vst [vmem:[%s361] ss:$4 sm:$0xff] %v302
      %395 = vst [vmem:[%s363] ss:$4 sm:$0xff] %v303
      %396 = vst [vmem:[%s365] ss:$4 sm:$0xff] %v304
      %v397 = vld.sshfl [vmem:[#allocation1] sm:$0xff pattern:$0x73625140]
      %v398 = vld.sshfl [vmem:[#allocation1 + $0x20] sm:$0xff pattern:$0x73625140]
      %399 = vst [vmem:[#allocation1] ss:$4 sm:$0xff] %v235
      %400 = vst [vmem:[%s353] ss:$4 sm:$0xff] %v305
      %401 = vst [vmem:[%s355] ss:$4 sm:$0xff] %v306
      %402 = vst [vmem:[%s357] ss:$4 sm:$0xff] %v236
      %403 = vst [vmem:[%s359] ss:$4 sm:$0xff] %v307
      %404 = vst [vmem:[%s361] ss:$4 sm:$0xff] %v308
      %405 = vst [vmem:[%s363] ss:$4 sm:$0xff] %v309
      %406 = vst [vmem:[%s365] ss:$4 sm:$0xff] %v237
      %v407 = vld.sshfl [vmem:[#allocation1] sm:$0xff pattern:$0x73625140]
      %v408 = vld.sshfl [vmem:[#allocation1 + $0x20] sm:$0xff pattern:$0x73625140]
      %409 = vst [vmem:[#allocation1] ss:$4 sm:$0xff] %v310
      %410 = vst [vmem:[%s353] ss:$4 sm:$0xff] %v311
      %411 = vst [vmem:[%s355] ss:$4 sm:$0xff] %v238
      %412 = vst [vmem:[%s357] ss:$4 sm:$0xff] %v312
      %413 = vst [vmem:[%s359] ss:$4 sm:$0xff] %v313
      %414 = vst [vmem:[%s361] ss:$4 sm:$0xff] %v314
      %415 = vst [vmem:[%s363] ss:$4 sm:$0xff] %v239
      %416 = vst [vmem:[%s365] ss:$4 sm:$0xff] %v315
      %v417 = vld.sshfl [vmem:[#allocation1] sm:$0xff pattern:$0x73625140]
      %v418 = vld.sshfl [vmem:[#allocation1 + $0x20] sm:$0xff pattern:$0x73625140]
      %419 = vst [vmem:[#allocation1] ss:$4 sm:$0xff] %v316
      %420 = vst [vmem:[%s353] ss:$4 sm:$0xff] %v240
      %421 = vst [vmem:[%s355] ss:$4 sm:$0xff] %v317
      %422 = vst [vmem:[%s357] ss:$4 sm:$0xff] %v318
      %423 = vst [vmem:[%s359] ss:$4 sm:$0xff] %v319
      %424 = vst [vmem:[%s361] ss:$4 sm:$0xff] %v241
      %425 = vst [vmem:[%s363] ss:$4 sm:$0xff] %v320
      %426 = vst [vmem:[%s365] ss:$4 sm:$0xff] %v321
      %v427 = vld.sshfl [vmem:[#allocation1] sm:$0xff pattern:$0x73625140]
      %v428 = vld.sshfl [vmem:[#allocation1 + $0x20] sm:$0xff pattern:$0x73625140]
      %429 = vst [vmem:[#allocation1] ss:$4 sm:$0xff] %v242
      %430 = vst [vmem:[%s353] ss:$4 sm:$0xff] %v322
      %431 = vst [vmem:[%s355] ss:$4 sm:$0xff] %v323
      %432 = vst [vmem:[%s357] ss:$4 sm:$0xff] %v324
      %433 = vst [vmem:[%s359] ss:$4 sm:$0xff] %v243
      %434 = vst [vmem:[%s361] ss:$4 sm:$0xff] %v325
      %435 = vst [vmem:[%s363] ss:$4 sm:$0xff] %v326
      %436 = vst [vmem:[%s365] ss:$4 sm:$0xff] %v244
      %v437 = vld.sshfl [vmem:[#allocation1] sm:$0xff pattern:$0x73625140]
      %v438 = vld.sshfl [vmem:[#allocation1 + $0x20] sm:$0xff pattern:$0x73625140]
      %439 = vst [vmem:[#allocation1] ss:$4 sm:$0xff] %v327
      %440 = vst [vmem:[%s353] ss:$4 sm:$0xff] %v328
      %441 = vst [vmem:[%s355] ss:$4 sm:$0xff] %v329
      %442 = vst [vmem:[%s357] ss:$4 sm:$0xff] %v245
      %443 = vst [vmem:[%s359] ss:$4 sm:$0xff] %v330
      %444 = vst [vmem:[%s361] ss:$4 sm:$0xff] %v331
      %445 = vst [vmem:[%s363] ss:$4 sm:$0xff] %v246
      %446 = vst [vmem:[%s365] ss:$4 sm:$0xff] %v332
      %v447 = vld.sshfl [vmem:[#allocation1] sm:$0xff pattern:$0x73625140]
      %v448 = vld.sshfl [vmem:[#allocation1 + $0x20] sm:$0xff pattern:$0x73625140]
      %449 = vst [vmem:[#allocation1] ss:$4 sm:$0xff] %v333
      %450 = vst [vmem:[%s353] ss:$4 sm:$0xff] %v334
      %451 = vst [vmem:[%s355] ss:$4 sm:$0xff] %v247
      %452 = vst [vmem:[%s357] ss:$4 sm:$0xff] %v335
      %453 = vst [vmem:[%s359] ss:$4 sm:$0xff] %v336
      %454 = vst [vmem:[%s361] ss:$4 sm:$0xff] %v248
      %455 = vst [vmem:[%s363] ss:$4 sm:$0xff] %v337
      %456 = vst [vmem:[%s365] ss:$4 sm:$0xff] %v338
      %v457 = vld.sshfl [vmem:[#allocation1] sm:$0xff pattern:$0x73625140]
      %v458 = vld.sshfl [vmem:[#allocation1 + $0x20] sm:$0xff pattern:$0x73625140]
      %459 = vst [vmem:[#allocation1] ss:$4 sm:$0xff] %v339
      %460 = vst [vmem:[%s353] ss:$4 sm:$0xff] %v249
      %461 = vst [vmem:[%s355] ss:$4 sm:$0xff] %v340
      %462 = vst [vmem:[%s357] ss:$4 sm:$0xff] %v341
      %463 = vst [vmem:[%s359] ss:$4 sm:$0xff] %v250
      %464 = vst [vmem:[%s361] ss:$4 sm:$0xff] %v342
      %465 = vst [vmem:[%s363] ss:$4 sm:$0xff] %v343
      %466 = vst [vmem:[%s365] ss:$4 sm:$0xff] %v344
      %v467 = vld.sshfl [vmem:[#allocation1] sm:$0xff pattern:$0x73625140]
      %v468 = vld.sshfl [vmem:[#allocation1 + $0x20] sm:$0xff pattern:$0x73625140]
      %469 = vst [vmem:[#allocation1] ss:$4 sm:$0xff] %v251
      %470 = vst [vmem:[%s353] ss:$4 sm:$0xff] %v345
      %471 = vst [vmem:[%s355] ss:$4 sm:$0xff] %v346
      %472 = vst [vmem:[%s357] ss:$4 sm:$0xff] %v252
      %473 = vst [vmem:[%s359] ss:$4 sm:$0xff] %v347
      %474 = vst [vmem:[%s361] ss:$4 sm:$0xff] %v348
      %475 = vst [vmem:[%s363] ss:$4 sm:$0xff] %v349
      %476 = vst [vmem:[%s365] ss:$4 sm:$0xff] %v253
      %v477 = vld.sshfl [vmem:[#allocation1] sm:$0xff pattern:$0x73625140]
      %v478 = vld.sshfl [vmem:[#allocation1 + $0x20] sm:$0xff pattern:$0x73625140]
      %479 = vst [vmem:[#allocation1] ss:$4 sm:$0xff] %v350
      %480 = vst [vmem:[%s353] ss:$4 sm:$0xff] %v351
      %v481 = vld.sshfl [vmem:[#allocation1] sm:$0xff pattern:$0x73625140]
      %vm507 = vcmask 31744
      %508 = vst.msk [vmem:[#allocation2] sm:$0xff] %vm507, %v367
      %509 = vst.msk [vmem:[#allocation2 + $0x8] sm:$0xff] %vm507, %v368
      %510 = vst.msk [vmem:[#allocation2 + $0x10] sm:$0xff] %vm507, %v377
      %511 = vst.msk [vmem:[#allocation2 + $0x18] sm:$0xff] %vm507, %v378
      %512 = vst.msk [vmem:[#allocation2 + $0x20] sm:$0xff] %vm507, %v387
      %513 = vst.msk [vmem:[#allocation2 + $0x28] sm:$0xff] %vm507, %v388
      %514 = vst.msk [vmem:[#allocation2 + $0x30] sm:$0xff] %vm507, %v397
      %515 = vst.msk [vmem:[#allocation2 + $0x38] sm:$0xff] %vm507, %v398
      %516 = vst.msk [vmem:[#allocation2 + $0x40] sm:$0xff] %vm507, %v407
      %517 = vst.msk [vmem:[#allocation2 + $0x48] sm:$0xff] %vm507, %v408
      %518 = vst.msk [vmem:[#allocation2 + $0x50] sm:$0xff] %vm507, %v417
      %519 = vst.msk [vmem:[#allocation2 + $0x58] sm:$0xff] %vm507, %v418
      %520 = vst.msk [vmem:[#allocation2 + $0x60] sm:$0xff] %vm507, %v427
      %521 = vst.msk [vmem:[#allocation2 + $0x68] sm:$0xff] %vm507, %v428
      %522 = vst.msk [vmem:[#allocation2 + $0x70] sm:$0xff] %vm507, %v437
      %523 = vst.msk [vmem:[#allocation2 + $0x78] sm:$0xff] %vm507, %v438
      %524 = vst.msk [vmem:[#allocation2 + $0x80] sm:$0xff] %vm507, %v447
      %525 = vst.msk [vmem:[#allocation2 + $0x88] sm:$0xff] %vm507, %v448
      %526 = vst.msk [vmem:[#allocation2 + $0x90] sm:$0xff] %vm507, %v457
      %527 = vst.msk [vmem:[#allocation2 + $0x98] sm:$0xff] %vm507, %v458
      %528 = vst.msk [vmem:[#allocation2 + $0xa0] sm:$0xff] %vm507, %v467
      %529 = vst.msk [vmem:[#allocation2 + $0xa8] sm:$0xff] %vm507, %v468
      %530 = vst.msk [vmem:[#allocation2 + $0xb0] sm:$0xff] %vm507, %v477
      %531 = vst.msk [vmem:[#allocation2 + $0xb8] sm:$0xff] %vm507, %v478
      %vm532 = vcmask 27648
      %533 = vst.msk [vmem:[#allocation2 + $0xc0] sm:$0xf] %vm532, %v481
      %v534 = vld [vmem:[%s214 + $0x1] sm:$0xff]
      %v535 = vld [vmem:[%s214 + $0x9] sm:$0x3f]
      %v536 = vld [vmem:[%s214 + $0x11] sm:$0xff]
      %v537 = vld [vmem:[%s214 + $0x19] sm:$0x3f]
      %v538 = vld [vmem:[%s214 + $0x21] sm:$0xff]
      %v539 = vld [vmem:[%s214 + $0x29] sm:$0x3f]
      %v540 = vld [vmem:[%s214 + $0x31] sm:$0xff]
      %v541 = vld [vmem:[%s214 + $0x39] sm:$0x3f]
      %v542 = vld [vmem:[%s214 + $0x41] sm:$0xff]
      %v543 = vld [vmem:[%s214 + $0x49] sm:$0x3f]
      %v544 = vld [vmem:[%s214 + $0x51] sm:$0xff]
      %v545 = vld [vmem:[%s214 + $0x59] sm:$0x3f]
      %v546 = vld [vmem:[%s214 + $0x61] sm:$0xff]
      %v547 = vld [vmem:[%s214 + $0x69] sm:$0x3f]
      %v548 = vld [vmem:[%s214 + $0x71] sm:$0xff]
      %v549 = vld [vmem:[%s214 + $0x79] sm:$0x3f]
      %v550 = vld [vmem:[%s214 + $0x81] sm:$0xff]
      %v551 = vld [vmem:[%s214 + $0x89] sm:$0x3f]
      %v552 = vld [vmem:[%s214 + $0x91] sm:$0xff]
      %v553 = vld [vmem:[%s214 + $0x99] sm:$0x3f]
      %v554 = vld [vmem:[%s214 + $0xa1] sm:$0xff]
      %v555 = vld [vmem:[%s214 + $0xa9] sm:$0x3f]
      %v556 = vld [vmem:[%s214 + $0xb1] sm:$0xff]
      %v557 = vld [vmem:[%s214 + $0xb9] sm:$0x3f]
      %v558 = vld [vmem:[%s214 + $0xc1] sm:$0xff]
      %v559 = vld [vmem:[%s214 + $0xc9] sm:$0x3f]
      %v560 = vld [vmem:[%s214 + $0xd1] sm:$0xff]
      %v561 = vld [vmem:[%s214 + $0xd9] sm:$0x3f]
      %v590 = vrot.slane %v534, 2
      %v591 = vrot.slane %v534, 4
      %v592 = vrot.slane %v534, 6
      %v593 = vrot.slane %v535, 2
      %v594 = vrot.slane %v535, 4
      %v595 = vrot.slane %v536, 2
      %v596 = vrot.slane %v536, 4
      %v597 = vrot.slane %v536, 6
      %v598 = vrot.slane %v537, 2
      %v599 = vrot.slane %v537, 4
      %v600 = vrot.slane %v538, 2
      %v601 = vrot.slane %v538, 4
      %v602 = vrot.slane %v538, 6
      %v603 = vrot.slane %v539, 2
      %v604 = vrot.slane %v539, 4
      %v605 = vrot.slane %v540, 2
      %v606 = vrot.slane %v540, 4
      %v607 = vrot.slane %v540, 6
      %v608 = vrot.slane %v541, 2
      %v609 = vrot.slane %v541, 4
      %v610 = vrot.slane %v542, 2
      %v611 = vrot.slane %v542, 4
      %v612 = vrot.slane %v542, 6
      %v613 = vrot.slane %v543, 2
      %v614 = vrot.slane %v543, 4
      %v615 = vrot.slane %v544, 2
      %v616 = vrot.slane %v544, 4
      %v617 = vrot.slane %v544, 6
      %v618 = vrot.slane %v545, 2
      %v619 = vrot.slane %v545, 4
      %v620 = vrot.slane %v546, 2
      %v621 = vrot.slane %v546, 4
      %v622 = vrot.slane %v546, 6
      %v623 = vrot.slane %v547, 2
      %v624 = vrot.slane %v547, 4
      %v625 = vrot.slane %v548, 2
      %v626 = vrot.slane %v548, 4
      %v627 = vrot.slane %v548, 6
      %v628 = vrot.slane %v549, 2
      %v629 = vrot.slane %v549, 4
      %v630 = vrot.slane %v550, 2
      %v631 = vrot.slane %v550, 4
      %v632 = vrot.slane %v550, 6
      %v633 = vrot.slane %v551, 2
      %v634 = vrot.slane %v551, 4
      %v635 = vrot.slane %v552, 2
      %v636 = vrot.slane %v552, 4
      %v637 = vrot.slane %v552, 6
      %v638 = vrot.slane %v553, 2
      %v639 = vrot.slane %v553, 4
      %v640 = vrot.slane %v554, 2
      %v641 = vrot.slane %v554, 4
      %v642 = vrot.slane %v554, 6
      %v643 = vrot.slane %v555, 2
      %v644 = vrot.slane %v555, 4
      %v645 = vrot.slane %v556, 2
      %v646 = vrot.slane %v556, 4
      %v647 = vrot.slane %v556, 6
      %v648 = vrot.slane %v557, 2
      %v649 = vrot.slane %v557, 4
      %v650 = vrot.slane %v558, 2
      %v651 = vrot.slane %v558, 4
      %v652 = vrot.slane %v558, 6
      %v653 = vrot.slane %v559, 2
      %v654 = vrot.slane %v559, 4
      %v655 = vrot.slane %v560, 2
      %v656 = vrot.slane %v560, 4
      %v657 = vrot.slane %v560, 6
      %v658 = vrot.slane %v561, 2
      %v659 = vrot.slane %v561, 4
      %660 = vst [vmem:[#allocation1] ss:$4 sm:$0xff] %v534
      %s661 = scalar_lea.vmem [#allocation1], 1
      %662 = vst [vmem:[%s661] ss:$4 sm:$0xff] %v590
      %s663 = scalar_lea.vmem [#allocation1], 2
      %664 = vst [vmem:[%s663] ss:$4 sm:$0xff] %v591
      %s665 = scalar_lea.vmem [#allocation1], 3
      %666 = vst [vmem:[%s665] ss:$4 sm:$0xff] %v592
      %s667 = scalar_lea.vmem [#allocation1], 32
      %668 = vst [vmem:[%s667] ss:$4 sm:$0xff] %v535
      %s669 = scalar_lea.vmem [#allocation1], 33
      %670 = vst [vmem:[%s669] ss:$4 sm:$0xff] %v593
      %s671 = scalar_lea.vmem [#allocation1], 34
      %672 = vst [vmem:[%s671] ss:$4 sm:$0xff] %v594
      %s673 = scalar_lea.vmem [#allocation1], 35
      %674 = vst [vmem:[%s673] ss:$4 sm:$0xff] %v536
      %v675 = vld.sshfl [vmem:[#allocation1] sm:$0xff pattern:$0x73625140]
      %v676 = vld.sshfl [vmem:[#allocation1 + $0x20] sm:$0xff pattern:$0x73625140]
      %677 = vst [vmem:[#allocation1] ss:$4 sm:$0xff] %v595
      %678 = vst [vmem:[%s661] ss:$4 sm:$0xff] %v596
      %679 = vst [vmem:[%s663] ss:$4 sm:$0xff] %v597
      %680 = vst [vmem:[%s665] ss:$4 sm:$0xff] %v537
      %681 = vst [vmem:[%s667] ss:$4 sm:$0xff] %v598
      %682 = vst [vmem:[%s669] ss:$4 sm:$0xff] %v599
      %683 = vst [vmem:[%s671] ss:$4 sm:$0xff] %v538
      %684 = vst [vmem:[%s673] ss:$4 sm:$0xff] %v600
      %v685 = vld.sshfl [vmem:[#allocation1] sm:$0xff pattern:$0x73625140]
      %v686 = vld.sshfl [vmem:[#allocation1 + $0x20] sm:$0xff pattern:$0x73625140]
      %687 = vst [vmem:[#allocation1] ss:$4 sm:$0xff] %v601
      %688 = vst [vmem:[%s661] ss:$4 sm:$0xff] %v602
      %689 = vst [vmem:[%s663] ss:$4 sm:$0xff] %v539
      %690 = vst [vmem:[%s665] ss:$4 sm:$0xff] %v603
      %691 = vst [vmem:[%s667] ss:$4 sm:$0xff] %v604
      %692 = vst [vmem:[%s669] ss:$4 sm:$0xff] %v540
      %693 = vst [vmem:[%s671] ss:$4 sm:$0xff] %v605
      %694 = vst [vmem:[%s673] ss:$4 sm:$0xff] %v606
      %v695 = vld.sshfl [vmem:[#allocation1] sm:$0xff pattern:$0x73625140]
      %v696 = vld.sshfl [vmem:[#allocation1 + $0x20] sm:$0xff pattern:$0x73625140]
      %697 = vst [vmem:[#allocation1] ss:$4 sm:$0xff] %v607
      %698 = vst [vmem:[%s661] ss:$4 sm:$0xff] %v541
      %699 = vst [vmem:[%s663] ss:$4 sm:$0xff] %v608
      %700 = vst [vmem:[%s665] ss:$4 sm:$0xff] %v609
      %701 = vst [vmem:[%s667] ss:$4 sm:$0xff] %v542
      %702 = vst [vmem:[%s669] ss:$4 sm:$0xff] %v610
      %703 = vst [vmem:[%s671] ss:$4 sm:$0xff] %v611
      %704 = vst [vmem:[%s673] ss:$4 sm:$0xff] %v612
      %v705 = vld.sshfl [vmem:[#allocation1] sm:$0xff pattern:$0x73625140]
      %v706 = vld.sshfl [vmem:[#allocation1 + $0x20] sm:$0xff pattern:$0x73625140]
      %707 = vst [vmem:[#allocation1] ss:$4 sm:$0xff] %v543
      %708 = vst [vmem:[%s661] ss:$4 sm:$0xff] %v613
      %709 = vst [vmem:[%s663] ss:$4 sm:$0xff] %v614
      %710 = vst [vmem:[%s665] ss:$4 sm:$0xff] %v544
      %711 = vst [vmem:[%s667] ss:$4 sm:$0xff] %v615
      %712 = vst [vmem:[%s669] ss:$4 sm:$0xff] %v616
      %713 = vst [vmem:[%s671] ss:$4 sm:$0xff] %v617
      %714 = vst [vmem:[%s673] ss:$4 sm:$0xff] %v545
      %v715 = vld.sshfl [vmem:[#allocation1] sm:$0xff pattern:$0x73625140]
      %v716 = vld.sshfl [vmem:[#allocation1 + $0x20] sm:$0xff pattern:$0x73625140]
      %717 = vst [vmem:[#allocation1] ss:$4 sm:$0xff] %v618
      %718 = vst [vmem:[%s661] ss:$4 sm:$0xff] %v619
      %719 = vst [vmem:[%s663] ss:$4 sm:$0xff] %v546
      %720 = vst [vmem:[%s665] ss:$4 sm:$0xff] %v620
      %721 = vst [vmem:[%s667] ss:$4 sm:$0xff] %v621
      %722 = vst [vmem:[%s669] ss:$4 sm:$0xff] %v622
      %723 = vst [vmem:[%s671] ss:$4 sm:$0xff] %v547
      %724 = vst [vmem:[%s673] ss:$4 sm:$0xff] %v623
      %v725 = vld.sshfl [vmem:[#allocation1] sm:$0xff pattern:$0x73625140]
      %v726 = vld.sshfl [vmem:[#allocation1 + $0x20] sm:$0xff pattern:$0x73625140]
      %727 = vst [vmem:[#allocation1] ss:$4 sm:$0xff] %v624
      %728 = vst [vmem:[%s661] ss:$4 sm:$0xff] %v548
      %729 = vst [vmem:[%s663] ss:$4 sm:$0xff] %v625
      %730 = vst [vmem:[%s665] ss:$4 sm:$0xff] %v626
      %731 = vst [vmem:[%s667] ss:$4 sm:$0xff] %v627
      %732 = vst [vmem:[%s669] ss:$4 sm:$0xff] %v549
      %733 = vst [vmem:[%s671] ss:$4 sm:$0xff] %v628
      %734 = vst [vmem:[%s673] ss:$4 sm:$0xff] %v629
      %v735 = vld.sshfl [vmem:[#allocation1] sm:$0xff pattern:$0x73625140]
      %v736 = vld.sshfl [vmem:[#allocation1 + $0x20] sm:$0xff pattern:$0x73625140]
      %737 = vst [vmem:[#allocation1] ss:$4 sm:$0xff] %v550
      %738 = vst [vmem:[%s661] ss:$4 sm:$0xff] %v630
      %739 = vst [vmem:[%s663] ss:$4 sm:$0xff] %v631
      %740 = vst [vmem:[%s665] ss:$4 sm:$0xff] %v632
      %741 = vst [vmem:[%s667] ss:$4 sm:$0xff] %v551
      %742 = vst [vmem:[%s669] ss:$4 sm:$0xff] %v633
      %743 = vst [vmem:[%s671] ss:$4 sm:$0xff] %v634
      %744 = vst [vmem:[%s673] ss:$4 sm:$0xff] %v552
      %v745 = vld.sshfl [vmem:[#allocation1] sm:$0xff pattern:$0x73625140]
      %v746 = vld.sshfl [vmem:[#allocation1 + $0x20] sm:$0xff pattern:$0x73625140]
      %747 = vst [vmem:[#allocation1] ss:$4 sm:$0xff] %v635
      %748 = vst [vmem:[%s661] ss:$4 sm:$0xff] %v636
      %749 = vst [vmem:[%s663] ss:$4 sm:$0xff] %v637
      %750 = vst [vmem:[%s665] ss:$4 sm:$0xff] %v553
      %751 = vst [vmem:[%s667] ss:$4 sm:$0xff] %v638
      %752 = vst [vmem:[%s669] ss:$4 sm:$0xff] %v639
      %753 = vst [vmem:[%s671] ss:$4 sm:$0xff] %v554
      %754 = vst [vmem:[%s673] ss:$4 sm:$0xff] %v640
      %v755 = vld.sshfl [vmem:[#allocation1] sm:$0xff pattern:$0x73625140]
      %v756 = vld.sshfl [vmem:[#allocation1 + $0x20] sm:$0xff pattern:$0x73625140]
      %757 = vst [vmem:[#allocation1] ss:$4 sm:$0xff] %v641
      %758 = vst [vmem:[%s661] ss:$4 sm:$0xff] %v642
      %759 = vst [vmem:[%s663] ss:$4 sm:$0xff] %v555
      %760 = vst [vmem:[%s665] ss:$4 sm:$0xff] %v643
      %761 = vst [vmem:[%s667] ss:$4 sm:$0xff] %v644
      %762 = vst [vmem:[%s669] ss:$4 sm:$0xff] %v556
      %763 = vst [vmem:[%s671] ss:$4 sm:$0xff] %v645
      %764 = vst [vmem:[%s673] ss:$4 sm:$0xff] %v646
      %v765 = vld.sshfl [vmem:[#allocation1] sm:$0xff pattern:$0x73625140]
      %v766 = vld.sshfl [vmem:[#allocation1 + $0x20] sm:$0xff pattern:$0x73625140]
      %767 = vst [vmem:[#allocation1] ss:$4 sm:$0xff] %v647
      %768 = vst [vmem:[%s661] ss:$4 sm:$0xff] %v557
      %769 = vst [vmem:[%s663] ss:$4 sm:$0xff] %v648
      %770 = vst [vmem:[%s665] ss:$4 sm:$0xff] %v649
      %771 = vst [vmem:[%s667] ss:$4 sm:$0xff] %v558
      %772 = vst [vmem:[%s669] ss:$4 sm:$0xff] %v650
      %773 = vst [vmem:[%s671] ss:$4 sm:$0xff] %v651
      %774 = vst [vmem:[%s673] ss:$4 sm:$0xff] %v652
      %v775 = vld.sshfl [vmem:[#allocation1] sm:$0xff pattern:$0x73625140]
      %v776 = vld.sshfl [vmem:[#allocation1 + $0x20] sm:$0xff pattern:$0x73625140]
      %777 = vst [vmem:[#allocation1] ss:$4 sm:$0xff] %v559
      %778 = vst [vmem:[%s661] ss:$4 sm:$0xff] %v653
      %779 = vst [vmem:[%s663] ss:$4 sm:$0xff] %v654
      %780 = vst [vmem:[%s665] ss:$4 sm:$0xff] %v560
      %781 = vst [vmem:[%s667] ss:$4 sm:$0xff] %v655
      %782 = vst [vmem:[%s669] ss:$4 sm:$0xff] %v656
      %783 = vst [vmem:[%s671] ss:$4 sm:$0xff] %v657
      %784 = vst [vmem:[%s673] ss:$4 sm:$0xff] %v561
      %v785 = vld.sshfl [vmem:[#allocation1] sm:$0xff pattern:$0x73625140]
      %v786 = vld.sshfl [vmem:[#allocation1 + $0x20] sm:$0xff pattern:$0x73625140]
      %787 = vst [vmem:[#allocation1] ss:$4 sm:$0xff] %v658
      %788 = vst [vmem:[%s661] ss:$4 sm:$0xff] %v659
      %v789 = vld.sshfl [vmem:[#allocation1] sm:$0xff pattern:$0x73625140]
      %790 = vrot.lane.b32.xlu0 %v675, 4
      %v791 = vpop.permute.xlu0 %790
      %792 = vrot.lane.b32.xlu0 %v676, 4
      %v793 = vpop.permute.xlu0 %792
      %794 = vrot.lane.b32.xlu0 %v685, 4
      %v795 = vpop.permute.xlu0 %794
      %796 = vrot.lane.b32.xlu0 %v686, 4
      %v797 = vpop.permute.xlu0 %796
      %798 = vrot.lane.b32.xlu0 %v695, 4
      %v799 = vpop.permute.xlu0 %798
      %800 = vrot.lane.b32.xlu0 %v696, 4
      %v801 = vpop.permute.xlu0 %800
      %802 = vrot.lane.b32.xlu0 %v705, 4
      %v803 = vpop.permute.xlu0 %802
      %804 = vrot.lane.b32.xlu0 %v706, 4
      %v805 = vpop.permute.xlu0 %804
      %806 = vrot.lane.b32.xlu0 %v715, 4
      %v807 = vpop.permute.xlu0 %806
      %808 = vrot.lane.b32.xlu0 %v716, 4
      %v809 = vpop.permute.xlu0 %808
      %810 = vrot.lane.b32.xlu0 %v725, 4
      %v811 = vpop.permute.xlu0 %810
      %812 = vrot.lane.b32.xlu0 %v726, 4
      %v813 = vpop.permute.xlu0 %812
      %814 = vrot.lane.b32.xlu0 %v735, 4
      %v815 = vpop.permute.xlu0 %814
      %816 = vrot.lane.b32.xlu0 %v736, 4
      %v817 = vpop.permute.xlu0 %816
      %818 = vrot.lane.b32.xlu0 %v745, 4
      %v819 = vpop.permute.xlu0 %818
      %820 = vrot.lane.b32.xlu0 %v746, 4
      %v821 = vpop.permute.xlu0 %820
      %822 = vrot.lane.b32.xlu0 %v755, 4
      %v823 = vpop.permute.xlu0 %822
      %824 = vrot.lane.b32.xlu0 %v756, 4
      %v825 = vpop.permute.xlu0 %824
      %826 = vrot.lane.b32.xlu0 %v765, 4
      %v827 = vpop.permute.xlu0 %826
      %828 = vrot.lane.b32.xlu0 %v766, 4
      %v829 = vpop.permute.xlu0 %828
      %830 = vrot.lane.b32.xlu0 %v775, 4
      %v831 = vpop.permute.xlu0 %830
      %832 = vrot.lane.b32.xlu0 %v776, 4
      %v833 = vpop.permute.xlu0 %832
      %834 = vrot.lane.b32.xlu0 %v785, 4
      %v835 = vpop.permute.xlu0 %834
      %836 = vrot.lane.b32.xlu0 %v786, 4
      %v837 = vpop.permute.xlu0 %836
      %838 = vrot.lane.b32.xlu0 %v789, 4
      %v839 = vpop.permute.xlu0 %838
      %vm865 = vcmask 64544
      %866 = vst.msk [vmem:[#allocation2] sm:$0xff] %vm865, %v791
      %867 = vst.msk [vmem:[#allocation2 + $0x8] sm:$0xff] %vm865, %v793
      %868 = vst.msk [vmem:[#allocation2 + $0x10] sm:$0xff] %vm865, %v795
      %869 = vst.msk [vmem:[#allocation2 + $0x18] sm:$0xff] %vm865, %v797
      %870 = vst.msk [vmem:[#allocation2 + $0x20] sm:$0xff] %vm865, %v799
      %871 = vst.msk [vmem:[#allocation2 + $0x28] sm:$0xff] %vm865, %v801
      %872 = vst.msk [vmem:[#allocation2 + $0x30] sm:$0xff] %vm865, %v803
      %873 = vst.msk [vmem:[#allocation2 + $0x38] sm:$0xff] %vm865, %v805
      %874 = vst.msk [vmem:[#allocation2 + $0x40] sm:$0xff] %vm865, %v807
      %875 = vst.msk [vmem:[#allocation2 + $0x48] sm:$0xff] %vm865, %v809
      %876 = vst.msk [vmem:[#allocation2 + $0x50] sm:$0xff] %vm865, %v811
      %877 = vst.msk [vmem:[#allocation2 + $0x58] sm:$0xff] %vm865, %v813
      %878 = vst.msk [vmem:[#allocation2 + $0x60] sm:$0xff] %vm865, %v815
      %879 = vst.msk [vmem:[#allocation2 + $0x68] sm:$0xff] %vm865, %v817
      %880 = vst.msk [vmem:[#allocation2 + $0x70] sm:$0xff] %vm865, %v819
      %881 = vst.msk [vmem:[#allocation2 + $0x78] sm:$0xff] %vm865, %v821
      %882 = vst.msk [vmem:[#allocation2 + $0x80] sm:$0xff] %vm865, %v823
      %883 = vst.msk [vmem:[#allocation2 + $0x88] sm:$0xff] %vm865, %v825
      %884 = vst.msk [vmem:[#allocation2 + $0x90] sm:$0xff] %vm865, %v827
      %885 = vst.msk [vmem:[#allocation2 + $0x98] sm:$0xff] %vm865, %v829
      %886 = vst.msk [vmem:[#allocation2 + $0xa0] sm:$0xff] %vm865, %v831
      %887 = vst.msk [vmem:[#allocation2 + $0xa8] sm:$0xff] %vm865, %v833
      %888 = vst.msk [vmem:[#allocation2 + $0xb0] sm:$0xff] %vm865, %v835
      %889 = vst.msk [vmem:[#allocation2 + $0xb8] sm:$0xff] %vm865, %v837
      %vm890 = vcmask 60448
      %891 = vst.msk [vmem:[#allocation2 + $0xc0] sm:$0xf] %vm890, %v839
      %v892 = vld [vmem:[%s214 + $0x2] sm:$0xff]
      %v893 = vld [vmem:[%s214 + $0xa] sm:$0x3f]
      %v894 = vld [vmem:[%s214 + $0x12] sm:$0xff]
      %v895 = vld [vmem:[%s214 + $0x1a] sm:$0x3f]
      %v896 = vld [vmem:[%s214 + $0x22] sm:$0xff]
      %v897 = vld [vmem:[%s214 + $0x2a] sm:$0x3f]
      %v898 = vld [vmem:[%s214 + $0x32] sm:$0xff]
      %v899 = vld [vmem:[%s214 + $0x3a] sm:$0x3f]
      %v900 = vld [vmem:[%s214 + $0x42] sm:$0xff]
      %v901 = vld [vmem:[%s214 + $0x4a] sm:$0x3f]
      %v902 = vld [vmem:[%s214 + $0x52] sm:$0xff]
      %v903 = vld [vmem:[%s214 + $0x5a] sm:$0x3f]
      %v904 = vld [vmem:[%s214 + $0x62] sm:$0xff]
      %v905 = vld [vmem:[%s214 + $0x6a] sm:$0x3f]
      %v906 = vld [vmem:[%s214 + $0x72] sm:$0xff]
      %v907 = vld [vmem:[%s214 + $0x7a] sm:$0x3f]
      %v908 = vld [vmem:[%s214 + $0x82] sm:$0xff]
      %v909 = vld [vmem:[%s214 + $0x8a] sm:$0x3f]
      %v910 = vld [vmem:[%s214 + $0x92] sm:$0xff]
      %v911 = vld [vmem:[%s214 + $0x9a] sm:$0x3f]
      %v912 = vld [vmem:[%s214 + $0xa2] sm:$0xff]
      %v913 = vld [vmem:[%s214 + $0xaa] sm:$0x3f]
      %v914 = vld [vmem:[%s214 + $0xb2] sm:$0xff]
      %v915 = vld [vmem:[%s214 + $0xba] sm:$0x3f]
      %v916 = vld [vmem:[%s214 + $0xc2] sm:$0xff]
      %v917 = vld [vmem:[%s214 + $0xca] sm:$0x3f]
      %v918 = vld [vmem:[%s214 + $0xd2] sm:$0xff]
      %v919 = vld [vmem:[%s214 + $0xda] sm:$0x3f]
      %v948 = vrot.slane %v892, 2
      %v949 = vrot.slane %v892, 4
      %v950 = vrot.slane %v892, 6
      %v951 = vrot.slane %v893, 2
      %v952 = vrot.slane %v893, 4
      %v953 = vrot.slane %v894, 2
      %v954 = vrot.slane %v894, 4
      %v955 = vrot.slane %v894, 6
      %v956 = vrot.slane %v895, 2
      %v957 = vrot.slane %v895, 4
      %v958 = vrot.slane %v896, 2
      %v959 = vrot.slane %v896, 4
      %v960 = vrot.slane %v896, 6
      %v961 = vrot.slane %v897, 2
      %v962 = vrot.slane %v897, 4
      %v963 = vrot.slane %v898, 2
      %v964 = vrot.slane %v898, 4
      %v965 = vrot.slane %v898, 6
      %v966 = vrot.slane %v899, 2
      %v967 = vrot.slane %v899, 4
      %v968 = vrot.slane %v900, 2
      %v969 = vrot.slane %v900, 4
      %v970 = vrot.slane %v900, 6
      %v971 = vrot.slane %v901, 2
      %v972 = vrot.slane %v901, 4
      %v973 = vrot.slane %v902, 2
      %v974 = vrot.slane %v902, 4
      %v975 = vrot.slane %v902, 6
      %v976 = vrot.slane %v903, 2
      %v977 = vrot.slane %v903, 4
      %v978 = vrot.slane %v904, 2
      %v979 = vrot.slane %v904, 4
      %v980 = vrot.slane %v904, 6
      %v981 = vrot.slane %v905, 2
      %v982 = vrot.slane %v905, 4
      %v983 = vrot.slane %v906, 2
      %v984 = vrot.slane %v906, 4
      %v985 = vrot.slane %v906, 6
      %v986 = vrot.slane %v907, 2
      %v987 = vrot.slane %v907, 4
      %v988 = vrot.slane %v908, 2
      %v989 = vrot.slane %v908, 4
      %v990 = vrot.slane %v908, 6
      %v991 = vrot.slane %v909, 2
      %v992 = vrot.slane %v909, 4
      %v993 = vrot.slane %v910, 2
      %v994 = vrot.slane %v910, 4
      %v995 = vrot.slane %v910, 6
      %v996 = vrot.slane %v911, 2
      %v997 = vrot.slane %v911, 4
      %v998 = vrot.slane %v912, 2
      %v999 = vrot.slane %v912, 4
      %v1000 = vrot.slane %v912, 6
      %v1001 = vrot.slane %v913, 2
      %v1002 = vrot.slane %v913, 4
      %v1003 = vrot.slane %v914, 2
      %v1004 = vrot.slane %v914, 4
      %v1005 = vrot.slane %v914, 6
      %v1006 = vrot.slane %v915, 2
      %v1007 = vrot.slane %v915, 4
      %v1008 = vrot.slane %v916, 2
      %v1009 = vrot.slane %v916, 4
      %v1010 = vrot.slane %v916, 6
      %v1011 = vrot.slane %v917, 2
      %v1012 = vrot.slane %v917, 4
      %v1013 = vrot.slane %v918, 2
      %v1014 = vrot.slane %v918, 4
      %v1015 = vrot.slane %v918, 6
      %v1016 = vrot.slane %v919, 2
      %v1017 = vrot.slane %v919, 4
      %1018 = vst [vmem:[#allocation1] ss:$4 sm:$0xff] %v892
      %s1019 = scalar_lea.vmem [#allocation1], 1
      %1020 = vst [vmem:[%s1019] ss:$4 sm:$0xff] %v948
      %s1021 = scalar_lea.vmem [#allocation1], 2
      %1022 = vst [vmem:[%s1021] ss:$4 sm:$0xff] %v949
      %s1023 = scalar_lea.vmem [#allocation1], 3
      %1024 = vst [vmem:[%s1023] ss:$4 sm:$0xff] %v950
      %s1025 = scalar_lea.vmem [#allocation1], 32
      %1026 = vst [vmem:[%s1025] ss:$4 sm:$0xff] %v893
      %s1027 = scalar_lea.vmem [#allocation1], 33
      %1028 = vst [vmem:[%s1027] ss:$4 sm:$0xff] %v951
      %s1029 = scalar_lea.vmem [#allocation1], 34
      %1030 = vst [vmem:[%s1029] ss:$4 sm:$0xff] %v952
      %s1031 = scalar_lea.vmem [#allocation1], 35
      %1032 = vst [vmem:[%s1031] ss:$4 sm:$0xff] %v894
      %v1033 = vld.sshfl [vmem:[#allocation1] sm:$0xff pattern:$0x73625140]
      %v1034 = vld.sshfl [vmem:[#allocation1 + $0x20] sm:$0xff pattern:$0x73625140]
      %1035 = vst [vmem:[#allocation1] ss:$4 sm:$0xff] %v953
      %1036 = vst [vmem:[%s1019] ss:$4 sm:$0xff] %v954
      %1037 = vst [vmem:[%s1021] ss:$4 sm:$0xff] %v955
      %1038 = vst [vmem:[%s1023] ss:$4 sm:$0xff] %v895
      %1039 = vst [vmem:[%s1025] ss:$4 sm:$0xff] %v956
      %1040 = vst [vmem:[%s1027] ss:$4 sm:$0xff] %v957
      %1041 = vst [vmem:[%s1029] ss:$4 sm:$0xff] %v896
      %1042 = vst [vmem:[%s1031] ss:$4 sm:$0xff] %v958
      %v1043 = vld.sshfl [vmem:[#allocation1] sm:$0xff pattern:$0x73625140]
      %v1044 = vld.sshfl [vmem:[#allocation1 + $0x20] sm:$0xff pattern:$0x73625140]
      %1045 = vst [vmem:[#allocation1] ss:$4 sm:$0xff] %v959
      %1046 = vst [vmem:[%s1019] ss:$4 sm:$0xff] %v960
      %1047 = vst [vmem:[%s1021] ss:$4 sm:$0xff] %v897
      %1048 = vst [vmem:[%s1023] ss:$4 sm:$0xff] %v961
      %1049 = vst [vmem:[%s1025] ss:$4 sm:$0xff] %v962
      %1050 = vst [vmem:[%s1027] ss:$4 sm:$0xff] %v898
      %1051 = vst [vmem:[%s1029] ss:$4 sm:$0xff] %v963
      %1052 = vst [vmem:[%s1031] ss:$4 sm:$0xff] %v964
      %v1053 = vld.sshfl [vmem:[#allocation1] sm:$0xff pattern:$0x73625140]
      %v1054 = vld.sshfl [vmem:[#allocation1 + $0x20] sm:$0xff pattern:$0x73625140]
      %1055 = vst [vmem:[#allocation1] ss:$4 sm:$0xff] %v965
      %1056 = vst [vmem:[%s1019] ss:$4 sm:$0xff] %v899
      %1057 = vst [vmem:[%s1021] ss:$4 sm:$0xff] %v966
      %1058 = vst [vmem:[%s1023] ss:$4 sm:$0xff] %v967
      %1059 = vst [vmem:[%s1025] ss:$4 sm:$0xff] %v900
      %1060 = vst [vmem:[%s1027] ss:$4 sm:$0xff] %v968
      %1061 = vst [vmem:[%s1029] ss:$4 sm:$0xff] %v969
      %1062 = vst [vmem:[%s1031] ss:$4 sm:$0xff] %v970
      %v1063 = vld.sshfl [vmem:[#allocation1] sm:$0xff pattern:$0x73625140]
      %v1064 = vld.sshfl [vmem:[#allocation1 + $0x20] sm:$0xff pattern:$0x73625140]
      %1065 = vst [vmem:[#allocation1] ss:$4 sm:$0xff] %v901
      %1066 = vst [vmem:[%s1019] ss:$4 sm:$0xff] %v971
      %1067 = vst [vmem:[%s1021] ss:$4 sm:$0xff] %v972
      %1068 = vst [vmem:[%s1023] ss:$4 sm:$0xff] %v902
      %1069 = vst [vmem:[%s1025] ss:$4 sm:$0xff] %v973
      %1070 = vst [vmem:[%s1027] ss:$4 sm:$0xff] %v974
      %1071 = vst [vmem:[%s1029] ss:$4 sm:$0xff] %v975
      %1072 = vst [vmem:[%s1031] ss:$4 sm:$0xff] %v903
      %v1073 = vld.sshfl [vmem:[#allocation1] sm:$0xff pattern:$0x73625140]
      %v1074 = vld.sshfl [vmem:[#allocation1 + $0x20] sm:$0xff pattern:$0x73625140]
      %1075 = vst [vmem:[#allocation1] ss:$4 sm:$0xff] %v976
      %1076 = vst [vmem:[%s1019] ss:$4 sm:$0xff] %v977
      %1077 = vst [vmem:[%s1021] ss:$4 sm:$0xff] %v904
      %1078 = vst [vmem:[%s1023] ss:$4 sm:$0xff] %v978
      %1079 = vst [vmem:[%s1025] ss:$4 sm:$0xff] %v979
      %1080 = vst [vmem:[%s1027] ss:$4 sm:$0xff] %v980
      %1081 = vst [vmem:[%s1029] ss:$4 sm:$0xff] %v905
      %1082 = vst [vmem:[%s1031] ss:$4 sm:$0xff] %v981
      %v1083 = vld.sshfl [vmem:[#allocation1] sm:$0xff pattern:$0x73625140]
      %v1084 = vld.sshfl [vmem:[#allocation1 + $0x20] sm:$0xff pattern:$0x73625140]
      %1085 = vst [vmem:[#allocation1] ss:$4 sm:$0xff] %v982
      %1086 = vst [vmem:[%s1019] ss:$4 sm:$0xff] %v906
      %1087 = vst [vmem:[%s1021] ss:$4 sm:$0xff] %v983
      %1088 = vst [vmem:[%s1023] ss:$4 sm:$0xff] %v984
      %1089 = vst [vmem:[%s1025] ss:$4 sm:$0xff] %v985
      %1090 = vst [vmem:[%s1027] ss:$4 sm:$0xff] %v907
      %1091 = vst [vmem:[%s1029] ss:$4 sm:$0xff] %v986
      %1092 = vst [vmem:[%s1031] ss:$4 sm:$0xff] %v987
      %v1093 = vld.sshfl [vmem:[#allocation1] sm:$0xff pattern:$0x73625140]
      %v1094 = vld.sshfl [vmem:[#allocation1 + $0x20] sm:$0xff pattern:$0x73625140]
      %1095 = vst [vmem:[#allocation1] ss:$4 sm:$0xff] %v908
      %1096 = vst [vmem:[%s1019] ss:$4 sm:$0xff] %v988
      %1097 = vst [vmem:[%s1021] ss:$4 sm:$0xff] %v989
      %1098 = vst [vmem:[%s1023] ss:$4 sm:$0xff] %v990
      %1099 = vst [vmem:[%s1025] ss:$4 sm:$0xff] %v909
      %1100 = vst [vmem:[%s1027] ss:$4 sm:$0xff] %v991
      %1101 = vst [vmem:[%s1029] ss:$4 sm:$0xff] %v992
      %1102 = vst [vmem:[%s1031] ss:$4 sm:$0xff] %v910
      %v1103 = vld.sshfl [vmem:[#allocation1] sm:$0xff pattern:$0x73625140]
      %v1104 = vld.sshfl [vmem:[#allocation1 + $0x20] sm:$0xff pattern:$0x73625140]
      %1105 = vst [vmem:[#allocation1] ss:$4 sm:$0xff] %v993
      %1106 = vst [vmem:[%s1019] ss:$4 sm:$0xff] %v994
      %1107 = vst [vmem:[%s1021] ss:$4 sm:$0xff] %v995
      %1108 = vst [vmem:[%s1023] ss:$4 sm:$0xff] %v911
      %1109 = vst [vmem:[%s1025] ss:$4 sm:$0xff] %v996
      %1110 = vst [vmem:[%s1027] ss:$4 sm:$0xff] %v997
      %1111 = vst [vmem:[%s1029] ss:$4 sm:$0xff] %v912
      %1112 = vst [vmem:[%s1031] ss:$4 sm:$0xff] %v998
      %v1113 = vld.sshfl [vmem:[#allocation1] sm:$0xff pattern:$0x73625140]
      %v1114 = vld.sshfl [vmem:[#allocation1 + $0x20] sm:$0xff pattern:$0x73625140]
      %1115 = vst [vmem:[#allocation1] ss:$4 sm:$0xff] %v999
      %1116 = vst [vmem:[%s1019] ss:$4 sm:$0xff] %v1000
      %1117 = vst [vmem:[%s1021] ss:$4 sm:$0xff] %v913
      %1118 = vst [vmem:[%s1023] ss:$4 sm:$0xff] %v1001
      %1119 = vst [vmem:[%s1025] ss:$4 sm:$0xff] %v1002
      %1120 = vst [vmem:[%s1027] ss:$4 sm:$0xff] %v914
      %1121 = vst [vmem:[%s1029] ss:$4 sm:$0xff] %v1003
      %1122 = vst [vmem:[%s1031] ss:$4 sm:$0xff] %v1004
      %v1123 = vld.sshfl [vmem:[#allocation1] sm:$0xff pattern:$0x73625140]
      %v1124 = vld.sshfl [vmem:[#allocation1 + $0x20] sm:$0xff pattern:$0x73625140]
      %1125 = vst [vmem:[#allocation1] ss:$4 sm:$0xff] %v1005
      %1126 = vst [vmem:[%s1019] ss:$4 sm:$0xff] %v915
      %1127 = vst [vmem:[%s1021] ss:$4 sm:$0xff] %v1006
      %1128 = vst [vmem:[%s1023] ss:$4 sm:$0xff] %v1007
      %1129 = vst [vmem:[%s1025] ss:$4 sm:$0xff] %v916
      %1130 = vst [vmem:[%s1027] ss:$4 sm:$0xff] %v1008
      %1131 = vst [vmem:[%s1029] ss:$4 sm:$0xff] %v1009
      %1132 = vst [vmem:[%s1031] ss:$4 sm:$0xff] %v1010
      %v1133 = vld.sshfl [vmem:[#allocation1] sm:$0xff pattern:$0x73625140]
      %v1134 = vld.sshfl [vmem:[#allocation1 + $0x20] sm:$0xff pattern:$0x73625140]
      %1135 = vst [vmem:[#allocation1] ss:$4 sm:$0xff] %v917
      %1136 = vst [vmem:[%s1019] ss:$4 sm:$0xff] %v1011
      %1137 = vst [vmem:[%s1021] ss:$4 sm:$0xff] %v1012
      %1138 = vst [vmem:[%s1023] ss:$4 sm:$0xff] %v918
      %1139 = vst [vmem:[%s1025] ss:$4 sm:$0xff] %v1013
      %1140 = vst [vmem:[%s1027] ss:$4 sm:$0xff] %v1014
      %1141 = vst [vmem:[%s1029] ss:$4 sm:$0xff] %v1015
      %1142 = vst [vmem:[%s1031] ss:$4 sm:$0xff] %v919
      %v1143 = vld.sshfl [vmem:[#allocation1] sm:$0xff pattern:$0x73625140]
      %v1144 = vld.sshfl [vmem:[#allocation1 + $0x20] sm:$0xff pattern:$0x73625140]
      %1145 = vst [vmem:[#allocation1] ss:$4 sm:$0xff] %v1016
      %1146 = vst [vmem:[%s1019] ss:$4 sm:$0xff] %v1017
      %v1147 = vld.sshfl [vmem:[#allocation1] sm:$0xff pattern:$0x73625140]
      %1148 = vrot.lane.b32.xlu0 %v1033, 8
      %v1149 = vpop.permute.xlu0 %1148
      %1150 = vrot.lane.b32.xlu0 %v1034, 8
      %v1151 = vpop.permute.xlu0 %1150
      %1152 = vrot.lane.b32.xlu0 %v1043, 8
      %v1153 = vpop.permute.xlu0 %1152
      %1154 = vrot.lane.b32.xlu0 %v1044, 8
      %v1155 = vpop.permute.xlu0 %1154
      %1156 = vrot.lane.b32.xlu0 %v1053, 8
      %v1157 = vpop.permute.xlu0 %1156
      %1158 = vrot.lane.b32.xlu0 %v1054, 8
      %v1159 = vpop.permute.xlu0 %1158
      %1160 = vrot.lane.b32.xlu0 %v1063, 8
      %v1161 = vpop.permute.xlu0 %1160
      %1162 = vrot.lane.b32.xlu0 %v1064, 8
      %v1163 = vpop.permute.xlu0 %1162
      %1164 = vrot.lane.b32.xlu0 %v1073, 8
      %v1165 = vpop.permute.xlu0 %1164
      %1166 = vrot.lane.b32.xlu0 %v1074, 8
      %v1167 = vpop.permute.xlu0 %1166
      %1168 = vrot.lane.b32.xlu0 %v1083, 8
      %v1169 = vpop.permute.xlu0 %1168
      %1170 = vrot.lane.b32.xlu0 %v1084, 8
      %v1171 = vpop.permute.xlu0 %1170
      %1172 = vrot.lane.b32.xlu0 %v1093, 8
      %v1173 = vpop.permute.xlu0 %1172
      %1174 = vrot.lane.b32.xlu0 %v1094, 8
      %v1175 = vpop.permute.xlu0 %1174
      %1176 = vrot.lane.b32.xlu0 %v1103, 8
      %v1177 = vpop.permute.xlu0 %1176
      %1178 = vrot.lane.b32.xlu0 %v1104, 8
      %v1179 = vpop.permute.xlu0 %1178
      %1180 = vrot.lane.b32.xlu0 %v1113, 8
      %v1181 = vpop.permute.xlu0 %1180
      %1182 = vrot.lane.b32.xlu0 %v1114, 8
      %v1183 = vpop.permute.xlu0 %1182
      %1184 = vrot.lane.b32.xlu0 %v1123, 8
      %v1185 = vpop.permute.xlu0 %1184
      %1186 = vrot.lane.b32.xlu0 %v1124, 8
      %v1187 = vpop.permute.xlu0 %1186
      %1188 = vrot.lane.b32.xlu0 %v1133, 8
      %v1189 = vpop.permute.xlu0 %1188
      %1190 = vrot.lane.b32.xlu0 %v1134, 8
      %v1191 = vpop.permute.xlu0 %1190
      %1192 = vrot.lane.b32.xlu0 %v1143, 8
      %v1193 = vpop.permute.xlu0 %1192
      %1194 = vrot.lane.b32.xlu0 %v1144, 8
      %v1195 = vpop.permute.xlu0 %1194
      %1196 = vrot.lane.b32.xlu0 %v1147, 8
      %v1197 = vpop.permute.xlu0 %1196
      %vm1223 = vcmask 97344
      %1224 = vst.msk [vmem:[#allocation2] sm:$0xff] %vm1223, %v1149
      %1225 = vst.msk [vmem:[#allocation2 + $0x8] sm:$0xff] %vm1223, %v1151
      %1226 = vst.msk [vmem:[#allocation2 + $0x10] sm:$0xff] %vm1223, %v1153
      %1227 = vst.msk [vmem:[#allocation2 + $0x18] sm:$0xff] %vm1223, %v1155
      %1228 = vst.msk [vmem:[#allocation2 + $0x20] sm:$0xff] %vm1223, %v1157
      %1229 = vst.msk [vmem:[#allocation2 + $0x28] sm:$0xff] %vm1223, %v1159
      %1230 = vst.msk [vmem:[#allocation2 + $0x30] sm:$0xff] %vm1223, %v1161
      %1231 = vst.msk [vmem:[#allocation2 + $0x38] sm:$0xff] %vm1223, %v1163
      %1232 = vst.msk [vmem:[#allocation2 + $0x40] sm:$0xff] %vm1223, %v1165
      %1233 = vst.msk [vmem:[#allocation2 + $0x48] sm:$0xff] %vm1223, %v1167
      %1234 = vst.msk [vmem:[#allocation2 + $0x50] sm:$0xff] %vm1223, %v1169
      %1235 = vst.msk [vmem:[#allocation2 + $0x58] sm:$0xff] %vm1223, %v1171
      %1236 = vst.msk [vmem:[#allocation2 + $0x60] sm:$0xff] %vm1223, %v1173
      %1237 = vst.msk [vmem:[#allocation2 + $0x68] sm:$0xff] %vm1223, %v1175
      %1238 = vst.msk [vmem:[#allocation2 + $0x70] sm:$0xff] %vm1223, %v1177
      %1239 = vst.msk [vmem:[#allocation2 + $0x78] sm:$0xff] %vm1223, %v1179
      %1240 = vst.msk [vmem:[#allocation2 + $0x80] sm:$0xff] %vm1223, %v1181
      %1241 = vst.msk [vmem:[#allocation2 + $0x88] sm:$0xff] %vm1223, %v1183
      %1242 = vst.msk [vmem:[#allocation2 + $0x90] sm:$0xff] %vm1223, %v1185
      %1243 = vst.msk [vmem:[#allocation2 + $0x98] sm:$0xff] %vm1223, %v1187
      %1244 = vst.msk [vmem:[#allocation2 + $0xa0] sm:$0xff] %vm1223, %v1189
      %1245 = vst.msk [vmem:[#allocation2 + $0xa8] sm:$0xff] %vm1223, %v1191
      %1246 = vst.msk [vmem:[#allocation2 + $0xb0] sm:$0xff] %vm1223, %v1193
      %1247 = vst.msk [vmem:[#allocation2 + $0xb8] sm:$0xff] %vm1223, %v1195
      %vm1248 = vcmask 93248
      %1249 = vst.msk [vmem:[#allocation2 + $0xc0] sm:$0xf] %vm1248, %v1197
      %s1250 = scalar_lea.vmem %s214, 16
      %v1251 = vld [vmem:[%s1250] sm:$0xff]
      %v1252 = vld [vmem:[%s1250 + $0x8] sm:$0x3f]
      %v1253 = vld [vmem:[%s1250 + $0x10] sm:$0xff]
      %v1254 = vld [vmem:[%s1250 + $0x18] sm:$0x3f]
      %v1255 = vld [vmem:[%s1250 + $0x20] sm:$0xff]
      %v1256 = vld [vmem:[%s1250 + $0x28] sm:$0x3f]
      %v1257 = vld [vmem:[%s1250 + $0x30] sm:$0xff]
      %v1258 = vld [vmem:[%s1250 + $0x38] sm:$0x3f]
      %v1259 = vld [vmem:[%s1250 + $0x40] sm:$0xff]
      %v1260 = vld [vmem:[%s1250 + $0x48] sm:$0x3f]
      %v1261 = vld [vmem:[%s1250 + $0x50] sm:$0xff]
      %v1262 = vld [vmem:[%s1250 + $0x58] sm:$0x3f]
      %v1263 = vld [vmem:[%s1250 + $0x60] sm:$0xff]
      %v1264 = vld [vmem:[%s1250 + $0x68] sm:$0x3f]
      %v1265 = vld [vmem:[%s1250 + $0x70] sm:$0xff]
      %v1266 = vld [vmem:[%s1250 + $0x78] sm:$0x3f]
      %v1267 = vld [vmem:[%s1250 + $0x80] sm:$0xff]
      %v1268 = vld [vmem:[%s1250 + $0x88] sm:$0x3f]
      %v1269 = vld [vmem:[%s1250 + $0x90] sm:$0xff]
      %v1270 = vld [vmem:[%s1250 + $0x98] sm:$0x3f]
      %v1271 = vld [vmem:[%s1250 + $0xa0] sm:$0xff]
      %v1272 = vld [vmem:[%s1250 + $0xa8] sm:$0x3f]
      %v1273 = vld [vmem:[%s1250 + $0xb0] sm:$0xff]
      %v1274 = vld [vmem:[%s1250 + $0xb8] sm:$0x3f]
      %v1275 = vld [vmem:[%s1250 + $0xc0] sm:$0xff]
      %v1276 = vld [vmem:[%s1250 + $0xc8] sm:$0x3f]
      %v1277 = vld [vmem:[%s1250 + $0xd0] sm:$0xff]
      %v1278 = vld [vmem:[%s1250 + $0xd8] sm:$0x3f]
      %v1307 = vrot.slane %v1251, 2
      %v1308 = vrot.slane %v1251, 4
      %v1309 = vrot.slane %v1251, 6
      %v1310 = vrot.slane %v1252, 2
      %v1311 = vrot.slane %v1252, 4
      %v1312 = vrot.slane %v1253, 2
      %v1313 = vrot.slane %v1253, 4
      %v1314 = vrot.slane %v1253, 6
      %v1315 = vrot.slane %v1254, 2
      %v1316 = vrot.slane %v1254, 4
      %v1317 = vrot.slane %v1255, 2
      %v1318 = vrot.slane %v1255, 4
      %v1319 = vrot.slane %v1255, 6
      %v1320 = vrot.slane %v1256, 2
      %v1321 = vrot.slane %v1256, 4
      %v1322 = vrot.slane %v1257, 2
      %v1323 = vrot.slane %v1257, 4
      %v1324 = vrot.slane %v1257, 6
      %v1325 = vrot.slane %v1258, 2
      %v1326 = vrot.slane %v1258, 4
      %v1327 = vrot.slane %v1259, 2
      %v1328 = vrot.slane %v1259, 4
      %v1329 = vrot.slane %v1259, 6
      %v1330 = vrot.slane %v1260, 2
      %v1331 = vrot.slane %v1260, 4
      %v1332 = vrot.slane %v1261, 2
      %v1333 = vrot.slane %v1261, 4
      %v1334 = vrot.slane %v1261, 6
      %v1335 = vrot.slane %v1262, 2
      %v1336 = vrot.slane %v1262, 4
      %v1337 = vrot.slane %v1263, 2
      %v1338 = vrot.slane %v1263, 4
      %v1339 = vrot.slane %v1263, 6
      %v1340 = vrot.slane %v1264, 2
      %v1341 = vrot.slane %v1264, 4
      %v1342 = vrot.slane %v1265, 2
      %v1343 = vrot.slane %v1265, 4
      %v1344 = vrot.slane %v1265, 6
      %v1345 = vrot.slane %v1266, 2
      %v1346 = vrot.slane %v1266, 4
      %v1347 = vrot.slane %v1267, 2
      %v1348 = vrot.slane %v1267, 4
      %v1349 = vrot.slane %v1267, 6
      %v1350 = vrot.slane %v1268, 2
      %v1351 = vrot.slane %v1268, 4
      %v1352 = vrot.slane %v1269, 2
      %v1353 = vrot.slane %v1269, 4
      %v1354 = vrot.slane %v1269, 6
      %v1355 = vrot.slane %v1270, 2
      %v1356 = vrot.slane %v1270, 4
      %v1357 = vrot.slane %v1271, 2
      %v1358 = vrot.slane %v1271, 4
      %v1359 = vrot.slane %v1271, 6
      %v1360 = vrot.slane %v1272, 2
      %v1361 = vrot.slane %v1272, 4
      %v1362 = vrot.slane %v1273, 2
      %v1363 = vrot.slane %v1273, 4
      %v1364 = vrot.slane %v1273, 6
      %v1365 = vrot.slane %v1274, 2
      %v1366 = vrot.slane %v1274, 4
      %v1367 = vrot.slane %v1275, 2
      %v1368 = vrot.slane %v1275, 4
      %v1369 = vrot.slane %v1275, 6
      %v1370 = vrot.slane %v1276, 2
      %v1371 = vrot.slane %v1276, 4
      %v1372 = vrot.slane %v1277, 2
      %v1373 = vrot.slane %v1277, 4
      %v1374 = vrot.slane %v1277, 6
      %v1375 = vrot.slane %v1278, 2
      %v1376 = vrot.slane %v1278, 4
      %1377 = vst [vmem:[#allocation1] ss:$4 sm:$0xff] %v1251
      %s1378 = scalar_lea.vmem [#allocation1], 1
      %1379 = vst [vmem:[%s1378] ss:$4 sm:$0xff] %v1307
      %s1380 = scalar_lea.vmem [#allocation1], 2
      %1381 = vst [vmem:[%s1380] ss:$4 sm:$0xff] %v1308
      %s1382 = scalar_lea.vmem [#allocation1], 3
      %1383 = vst [vmem:[%s1382] ss:$4 sm:$0xff] %v1309
      %s1384 = scalar_lea.vmem [#allocation1], 32
      %1385 = vst [vmem:[%s1384] ss:$4 sm:$0xff] %v1252
      %s1386 = scalar_lea.vmem [#allocation1], 33
      %1387 = vst [vmem:[%s1386] ss:$4 sm:$0xff] %v1310
      %s1388 = scalar_lea.vmem [#allocation1], 34
      %1389 = vst [vmem:[%s1388] ss:$4 sm:$0xff] %v1311
      %s1390 = scalar_lea.vmem [#allocation1], 35
      %1391 = vst [vmem:[%s1390] ss:$4 sm:$0xff] %v1253
      %v1392 = vld.sshfl [vmem:[#allocation1] sm:$0xff pattern:$0x73625140]
      %v1393 = vld.sshfl [vmem:[#allocation1 + $0x20] sm:$0xff pattern:$0x73625140]
      %1394 = vst [vmem:[#allocation1] ss:$4 sm:$0xff] %v1312
      %1395 = vst [vmem:[%s1378] ss:$4 sm:$0xff] %v1313
      %1396 = vst [vmem:[%s1380] ss:$4 sm:$0xff] %v1314
      %1397 = vst [vmem:[%s1382] ss:$4 sm:$0xff] %v1254
      %1398 = vst [vmem:[%s1384] ss:$4 sm:$0xff] %v1315
      %1399 = vst [vmem:[%s1386] ss:$4 sm:$0xff] %v1316
      %1400 = vst [vmem:[%s1388] ss:$4 sm:$0xff] %v1255
      %1401 = vst [vmem:[%s1390] ss:$4 sm:$0xff] %v1317
      %v1402 = vld.sshfl [vmem:[#allocation1] sm:$0xff pattern:$0x73625140]
      %v1403 = vld.sshfl [vmem:[#allocation1 + $0x20] sm:$0xff pattern:$0x73625140]
      %1404 = vst [vmem:[#allocation1] ss:$4 sm:$0xff] %v1318
      %1405 = vst [vmem:[%s1378] ss:$4 sm:$0xff] %v1319
      %1406 = vst [vmem:[%s1380] ss:$4 sm:$0xff] %v1256
      %1407 = vst [vmem:[%s1382] ss:$4 sm:$0xff] %v1320
      %1408 = vst [vmem:[%s1384] ss:$4 sm:$0xff] %v1321
      %1409 = vst [vmem:[%s1386] ss:$4 sm:$0xff] %v1257
      %1410 = vst [vmem:[%s1388] ss:$4 sm:$0xff] %v1322
      %1411 = vst [vmem:[%s1390] ss:$4 sm:$0xff] %v1323
      %v1412 = vld.sshfl [vmem:[#allocation1] sm:$0xff pattern:$0x73625140]
      %v1413 = vld.sshfl [vmem:[#allocation1 + $0x20] sm:$0xff pattern:$0x73625140]
      %1414 = vst [vmem:[#allocation1] ss:$4 sm:$0xff] %v1324
      %1415 = vst [vmem:[%s1378] ss:$4 sm:$0xff] %v1258
      %1416 = vst [vmem:[%s1380] ss:$4 sm:$0xff] %v1325
      %1417 = vst [vmem:[%s1382] ss:$4 sm:$0xff] %v1326
      %1418 = vst [vmem:[%s1384] ss:$4 sm:$0xff] %v1259
      %1419 = vst [vmem:[%s1386] ss:$4 sm:$0xff] %v1327
      %1420 = vst [vmem:[%s1388] ss:$4 sm:$0xff] %v1328
      %1421 = vst [vmem:[%s1390] ss:$4 sm:$0xff] %v1329
      %v1422 = vld.sshfl [vmem:[#allocation1] sm:$0xff pattern:$0x73625140]
      %v1423 = vld.sshfl [vmem:[#allocation1 + $0x20] sm:$0xff pattern:$0x73625140]
      %1424 = vst [vmem:[#allocation1] ss:$4 sm:$0xff] %v1260
      %1425 = vst [vmem:[%s1378] ss:$4 sm:$0xff] %v1330
      %1426 = vst [vmem:[%s1380] ss:$4 sm:$0xff] %v1331
      %1427 = vst [vmem:[%s1382] ss:$4 sm:$0xff] %v1261
      %1428 = vst [vmem:[%s1384] ss:$4 sm:$0xff] %v1332
      %1429 = vst [vmem:[%s1386] ss:$4 sm:$0xff] %v1333
      %1430 = vst [vmem:[%s1388] ss:$4 sm:$0xff] %v1334
      %1431 = vst [vmem:[%s1390] ss:$4 sm:$0xff] %v1262
      %v1432 = vld.sshfl [vmem:[#allocation1] sm:$0xff pattern:$0x73625140]
      %v1433 = vld.sshfl [vmem:[#allocation1 + $0x20] sm:$0xff pattern:$0x73625140]
      %1434 = vst [vmem:[#allocation1] ss:$4 sm:$0xff] %v1335
      %1435 = vst [vmem:[%s1378] ss:$4 sm:$0xff] %v1336
      %1436 = vst [vmem:[%s1380] ss:$4 sm:$0xff] %v1263
      %1437 = vst [vmem:[%s1382] ss:$4 sm:$0xff] %v1337
      %1438 = vst [vmem:[%s1384] ss:$4 sm:$0xff] %v1338
      %1439 = vst [vmem:[%s1386] ss:$4 sm:$0xff] %v1339
      %1440 = vst [vmem:[%s1388] ss:$4 sm:$0xff] %v1264
      %1441 = vst [vmem:[%s1390] ss:$4 sm:$0xff] %v1340
      %v1442 = vld.sshfl [vmem:[#allocation1] sm:$0xff pattern:$0x73625140]
      %v1443 = vld.sshfl [vmem:[#allocation1 + $0x20] sm:$0xff pattern:$0x73625140]
      %1444 = vst [vmem:[#allocation1] ss:$4 sm:$0xff] %v1341
      %1445 = vst [vmem:[%s1378] ss:$4 sm:$0xff] %v1265
      %1446 = vst [vmem:[%s1380] ss:$4 sm:$0xff] %v1342
      %1447 = vst [vmem:[%s1382] ss:$4 sm:$0xff] %v1343
      %1448 = vst [vmem:[%s1384] ss:$4 sm:$0xff] %v1344
      %1449 = vst [vmem:[%s1386] ss:$4 sm:$0xff] %v1266
      %1450 = vst [vmem:[%s1388] ss:$4 sm:$0xff] %v1345
      %1451 = vst [vmem:[%s1390] ss:$4 sm:$0xff] %v1346
      %v1452 = vld.sshfl [vmem:[#allocation1] sm:$0xff pattern:$0x73625140]
      %v1453 = vld.sshfl [vmem:[#allocation1 + $0x20] sm:$0xff pattern:$0x73625140]
      %1454 = vst [vmem:[#allocation1] ss:$4 sm:$0xff] %v1267
      %1455 = vst [vmem:[%s1378] ss:$4 sm:$0xff] %v1347
      %1456 = vst [vmem:[%s1380] ss:$4 sm:$0xff] %v1348
      %1457 = vst [vmem:[%s1382] ss:$4 sm:$0xff] %v1349
      %1458 = vst [vmem:[%s1384] ss:$4 sm:$0xff] %v1268
      %1459 = vst [vmem:[%s1386] ss:$4 sm:$0xff] %v1350
      %1460 = vst [vmem:[%s1388] ss:$4 sm:$0xff] %v1351
      %1461 = vst [vmem:[%s1390] ss:$4 sm:$0xff] %v1269
      %v1462 = vld.sshfl [vmem:[#allocation1] sm:$0xff pattern:$0x73625140]
      %v1463 = vld.sshfl [vmem:[#allocation1 + $0x20] sm:$0xff pattern:$0x73625140]
      %1464 = vst [vmem:[#allocation1] ss:$4 sm:$0xff] %v1352
      %1465 = vst [vmem:[%s1378] ss:$4 sm:$0xff] %v1353
      %1466 = vst [vmem:[%s1380] ss:$4 sm:$0xff] %v1354
      %1467 = vst [vmem:[%s1382] ss:$4 sm:$0xff] %v1270
      %1468 = vst [vmem:[%s1384] ss:$4 sm:$0xff] %v1355
      %1469 = vst [vmem:[%s1386] ss:$4 sm:$0xff] %v1356
      %1470 = vst [vmem:[%s1388] ss:$4 sm:$0xff] %v1271
      %1471 = vst [vmem:[%s1390] ss:$4 sm:$0xff] %v1357
      %v1472 = vld.sshfl [vmem:[#allocation1] sm:$0xff pattern:$0x73625140]
      %v1473 = vld.sshfl [vmem:[#allocation1 + $0x20] sm:$0xff pattern:$0x73625140]
      %1474 = vst [vmem:[#allocation1] ss:$4 sm:$0xff] %v1358
      %1475 = vst [vmem:[%s1378] ss:$4 sm:$0xff] %v1359
      %1476 = vst [vmem:[%s1380] ss:$4 sm:$0xff] %v1272
      %1477 = vst [vmem:[%s1382] ss:$4 sm:$0xff] %v1360
      %1478 = vst [vmem:[%s1384] ss:$4 sm:$0xff] %v1361
      %1479 = vst [vmem:[%s1386] ss:$4 sm:$0xff] %v1273
      %1480 = vst [vmem:[%s1388] ss:$4 sm:$0xff] %v1362
      %1481 = vst [vmem:[%s1390] ss:$4 sm:$0xff] %v1363
      %v1482 = vld.sshfl [vmem:[#allocation1] sm:$0xff pattern:$0x73625140]
      %v1483 = vld.sshfl [vmem:[#allocation1 + $0x20] sm:$0xff pattern:$0x73625140]
      %1484 = vst [vmem:[#allocation1] ss:$4 sm:$0xff] %v1364
      %1485 = vst [vmem:[%s1378] ss:$4 sm:$0xff] %v1274
      %1486 = vst [vmem:[%s1380] ss:$4 sm:$0xff] %v1365
      %1487 = vst [vmem:[%s1382] ss:$4 sm:$0xff] %v1366
      %1488 = vst [vmem:[%s1384] ss:$4 sm:$0xff] %v1275
      %1489 = vst [vmem:[%s1386] ss:$4 sm:$0xff] %v1367
      %1490 = vst [vmem:[%s1388] ss:$4 sm:$0xff] %v1368
      %1491 = vst [vmem:[%s1390] ss:$4 sm:$0xff] %v1369
      %v1492 = vld.sshfl [vmem:[#allocation1] sm:$0xff pattern:$0x73625140]
      %v1493 = vld.sshfl [vmem:[#allocation1 + $0x20] sm:$0xff pattern:$0x73625140]
      %1494 = vst [vmem:[#allocation1] ss:$4 sm:$0xff] %v1276
      %1495 = vst [vmem:[%s1378] ss:$4 sm:$0xff] %v1370
      %1496 = vst [vmem:[%s1380] ss:$4 sm:$0xff] %v1371
      %1497 = vst [vmem:[%s1382] ss:$4 sm:$0xff] %v1277
      %1498 = vst [vmem:[%s1384] ss:$4 sm:$0xff] %v1372
      %1499 = vst [vmem:[%s1386] ss:$4 sm:$0xff] %v1373
      %1500 = vst [vmem:[%s1388] ss:$4 sm:$0xff] %v1374
      %1501 = vst [vmem:[%s1390] ss:$4 sm:$0xff] %v1278
      %v1502 = vld.sshfl [vmem:[#allocation1] sm:$0xff pattern:$0x73625140]
      %v1503 = vld.sshfl [vmem:[#allocation1 + $0x20] sm:$0xff pattern:$0x73625140]
      %1504 = vst [vmem:[#allocation1] ss:$4 sm:$0xff] %v1375
      %1505 = vst [vmem:[%s1378] ss:$4 sm:$0xff] %v1376
      %v1506 = vld.sshfl [vmem:[#allocation1] sm:$0xff pattern:$0x73625140]
      %1507 = vrot.lane.b32.xlu0 %v1392, 12
      %v1508 = vpop.permute.xlu0 %1507
      %1509 = vrot.lane.b32.xlu0 %v1393, 12
      %v1510 = vpop.permute.xlu0 %1509
      %1511 = vrot.lane.b32.xlu0 %v1402, 12
      %v1512 = vpop.permute.xlu0 %1511
      %1513 = vrot.lane.b32.xlu0 %v1403, 12
      %v1514 = vpop.permute.xlu0 %1513
      %1515 = vrot.lane.b32.xlu0 %v1412, 12
      %v1516 = vpop.permute.xlu0 %1515
      %1517 = vrot.lane.b32.xlu0 %v1413, 12
      %v1518 = vpop.permute.xlu0 %1517
      %1519 = vrot.lane.b32.xlu0 %v1422, 12
      %v1520 = vpop.permute.xlu0 %1519
      %1521 = vrot.lane.b32.xlu0 %v1423, 12
      %v1522 = vpop.permute.xlu0 %1521
      %1523 = vrot.lane.b32.xlu0 %v1432, 12
      %v1524 = vpop.permute.xlu0 %1523
      %1525 = vrot.lane.b32.xlu0 %v1433, 12
      %v1526 = vpop.permute.xlu0 %1525
      %1527 = vrot.lane.b32.xlu0 %v1442, 12
      %v1528 = vpop.permute.xlu0 %1527
      %1529 = vrot.lane.b32.xlu0 %v1443, 12
      %v1530 = vpop.permute.xlu0 %1529
      %1531 = vrot.lane.b32.xlu0 %v1452, 12
      %v1532 = vpop.permute.xlu0 %1531
      %1533 = vrot.lane.b32.xlu0 %v1453, 12
      %v1534 = vpop.permute.xlu0 %1533
      %1535 = vrot.lane.b32.xlu0 %v1462, 12
      %v1536 = vpop.permute.xlu0 %1535
      %1537 = vrot.lane.b32.xlu0 %v1463, 12
      %v1538 = vpop.permute.xlu0 %1537
      %1539 = vrot.lane.b32.xlu0 %v1472, 12
      %v1540 = vpop.permute.xlu0 %1539
      %1541 = vrot.lane.b32.xlu0 %v1473, 12
      %v1542 = vpop.permute.xlu0 %1541
      %1543 = vrot.lane.b32.xlu0 %v1482, 12
      %v1544 = vpop.permute.xlu0 %1543
      %1545 = vrot.lane.b32.xlu0 %v1483, 12
      %v1546 = vpop.permute.xlu0 %1545
      %1547 = vrot.lane.b32.xlu0 %v1492, 12
      %v1548 = vpop.permute.xlu0 %1547
      %1549 = vrot.lane.b32.xlu0 %v1493, 12
      %v1550 = vpop.permute.xlu0 %1549
      %1551 = vrot.lane.b32.xlu0 %v1502, 12
      %v1552 = vpop.permute.xlu0 %1551
      %1553 = vrot.lane.b32.xlu0 %v1503, 12
      %v1554 = vpop.permute.xlu0 %1553
      %1555 = vrot.lane.b32.xlu0 %v1506, 12
      %v1556 = vpop.permute.xlu0 %1555
      %vm1582 = vcmask 130144
      %1583 = vst.msk [vmem:[#allocation2] sm:$0xff] %vm1582, %v1508
      %1584 = vst.msk [vmem:[#allocation2 + $0x8] sm:$0xff] %vm1582, %v1510
      %1585 = vst.msk [vmem:[#allocation2 + $0x10] sm:$0xff] %vm1582, %v1512
      %1586 = vst.msk [vmem:[#allocation2 + $0x18] sm:$0xff] %vm1582, %v1514
      %1587 = vst.msk [vmem:[#allocation2 + $0x20] sm:$0xff] %vm1582, %v1516
      %1588 = vst.msk [vmem:[#allocation2 + $0x28] sm:$0xff] %vm1582, %v1518
      %1589 = vst.msk [vmem:[#allocation2 + $0x30] sm:$0xff] %vm1582, %v1520
      %1590 = vst.msk [vmem:[#allocation2 + $0x38] sm:$0xff] %vm1582, %v1522
      %1591 = vst.msk [vmem:[#allocation2 + $0x40] sm:$0xff] %vm1582, %v1524
      %1592 = vst.msk [vmem:[#allocation2 + $0x48] sm:$0xff] %vm1582, %v1526
      %1593 = vst.msk [vmem:[#allocation2 + $0x50] sm:$0xff] %vm1582, %v1528
      %1594 = vst.msk [vmem:[#allocation2 + $0x58] sm:$0xff] %vm1582, %v1530
      %1595 = vst.msk [vmem:[#allocation2 + $0x60] sm:$0xff] %vm1582, %v1532
      %1596 = vst.msk [vmem:[#allocation2 + $0x68] sm:$0xff] %vm1582, %v1534
      %1597 = vst.msk [vmem:[#allocation2 + $0x70] sm:$0xff] %vm1582, %v1536
      %1598 = vst.msk [vmem:[#allocation2 + $0x78] sm:$0xff] %vm1582, %v1538
      %1599 = vst.msk [vmem:[#allocation2 + $0x80] sm:$0xff] %vm1582, %v1540
      %1600 = vst.msk [vmem:[#allocation2 + $0x88] sm:$0xff] %vm1582, %v1542
      %1601 = vst.msk [vmem:[#allocation2 + $0x90] sm:$0xff] %vm1582, %v1544
      %1602 = vst.msk [vmem:[#allocation2 + $0x98] sm:$0xff] %vm1582, %v1546
      %1603 = vst.msk [vmem:[#allocation2 + $0xa0] sm:$0xff] %vm1582, %v1548
      %1604 = vst.msk [vmem:[#allocation2 + $0xa8] sm:$0xff] %vm1582, %v1550
      %1605 = vst.msk [vmem:[#allocation2 + $0xb0] sm:$0xff] %vm1582, %v1552
      %1606 = vst.msk [vmem:[#allocation2 + $0xb8] sm:$0xff] %vm1582, %v1554
      %vm1607 = vcmask 126048
      %1608 = vst.msk [vmem:[#allocation2 + $0xc0] sm:$0xf] %vm1607, %v1556
      %v1609 = vld [vmem:[%s1250 + $0x1] sm:$0xff]
      %v1610 = vld [vmem:[%s1250 + $0x9] sm:$0x3f]
      %v1611 = vld [vmem:[%s1250 + $0x11] sm:$0xff]
      %v1612 = vld [vmem:[%s1250 + $0x19] sm:$0x3f]
      %v1613 = vld [vmem:[%s1250 + $0x21] sm:$0xff]
      %v1614 = vld [vmem:[%s1250 + $0x29] sm:$0x3f]
      %v1615 = vld [vmem:[%s1250 + $0x31] sm:$0xff]
      %v1616 = vld [vmem:[%s1250 + $0x39] sm:$0x3f]
      %v1617 = vld [vmem:[%s1250 + $0x41] sm:$0xff]
      %v1618 = vld [vmem:[%s1250 + $0x49] sm:$0x3f]
      %v1619 = vld [vmem:[%s1250 + $0x51] sm:$0xff]
      %v1620 = vld [vmem:[%s1250 + $0x59] sm:$0x3f]
      %v1621 = vld [vmem:[%s1250 + $0x61] sm:$0xff]
      %v1622 = vld [vmem:[%s1250 + $0x69] sm:$0x3f]
      %v1623 = vld [vmem:[%s1250 + $0x71] sm:$0xff]
      %v1624 = vld [vmem:[%s1250 + $0x79] sm:$0x3f]
      %v1625 = vld [vmem:[%s1250 + $0x81] sm:$0xff]
      %v1626 = vld [vmem:[%s1250 + $0x89] sm:$0x3f]
      %v1627 = vld [vmem:[%s1250 + $0x91] sm:$0xff]
      %v1628 = vld [vmem:[%s1250 + $0x99] sm:$0x3f]
      %v1629 = vld [vmem:[%s1250 + $0xa1] sm:$0xff]
      %v1630 = vld [vmem:[%s1250 + $0xa9] sm:$0x3f]
      %v1631 = vld [vmem:[%s1250 + $0xb1] sm:$0xff]
      %v1632 = vld [vmem:[%s1250 + $0xb9] sm:$0x3f]
      %v1633 = vld [vmem:[%s1250 + $0xc1] sm:$0xff]
      %v1634 = vld [vmem:[%s1250 + $0xc9] sm:$0x3f]
      %v1635 = vld [vmem:[%s1250 + $0xd1] sm:$0xff]
      %v1636 = vld [vmem:[%s1250 + $0xd9] sm:$0x3f]
      %v1665 = vrot.slane %v1609, 2
      %v1666 = vrot.slane %v1609, 4
      %v1667 = vrot.slane %v1609, 6
      %v1668 = vrot.slane %v1610, 2
      %v1669 = vrot.slane %v1610, 4
      %v1670 = vrot.slane %v1611, 2
      %v1671 = vrot.slane %v1611, 4
      %v1672 = vrot.slane %v1611, 6
      %v1673 = vrot.slane %v1612, 2
      %v1674 = vrot.slane %v1612, 4
      %v1675 = vrot.slane %v1613, 2
      %v1676 = vrot.slane %v1613, 4
      %v1677 = vrot.slane %v1613, 6
      %v1678 = vrot.slane %v1614, 2
      %v1679 = vrot.slane %v1614, 4
      %v1680 = vrot.slane %v1615, 2
      %v1681 = vrot.slane %v1615, 4
      %v1682 = vrot.slane %v1615, 6
      %v1683 = vrot.slane %v1616, 2
      %v1684 = vrot.slane %v1616, 4
      %v1685 = vrot.slane %v1617, 2
      %v1686 = vrot.slane %v1617, 4
      %v1687 = vrot.slane %v1617, 6
      %v1688 = vrot.slane %v1618, 2
      %v1689 = vrot.slane %v1618, 4
      %v1690 = vrot.slane %v1619, 2
      %v1691 = vrot.slane %v1619, 4
      %v1692 = vrot.slane %v1619, 6
      %v1693 = vrot.slane %v1620, 2
      %v1694 = vrot.slane %v1620, 4
      %v1695 = vrot.slane %v1621, 2
      %v1696 = vrot.slane %v1621, 4
      %v1697 = vrot.slane %v1621, 6
      %v1698 = vrot.slane %v1622, 2
      %v1699 = vrot.slane %v1622, 4
      %v1700 = vrot.slane %v1623, 2
      %v1701 = vrot.slane %v1623, 4
      %v1702 = vrot.slane %v1623, 6
      %v1703 = vrot.slane %v1624, 2
      %v1704 = vrot.slane %v1624, 4
      %v1705 = vrot.slane %v1625, 2
      %v1706 = vrot.slane %v1625, 4
      %v1707 = vrot.slane %v1625, 6
      %v1708 = vrot.slane %v1626, 2
      %v1709 = vrot.slane %v1626, 4
      %v1710 = vrot.slane %v1627, 2
      %v1711 = vrot.slane %v1627, 4
      %v1712 = vrot.slane %v1627, 6
      %v1713 = vrot.slane %v1628, 2
      %v1714 = vrot.slane %v1628, 4
      %v1715 = vrot.slane %v1629, 2
      %v1716 = vrot.slane %v1629, 4
      %v1717 = vrot.slane %v1629, 6
      %v1718 = vrot.slane %v1630, 2
      %v1719 = vrot.slane %v1630, 4
      %v1720 = vrot.slane %v1631, 2
      %v1721 = vrot.slane %v1631, 4
      %v1722 = vrot.slane %v1631, 6
      %v1723 = vrot.slane %v1632, 2
      %v1724 = vrot.slane %v1632, 4
      %v1725 = vrot.slane %v1633, 2
      %v1726 = vrot.slane %v1633, 4
      %v1727 = vrot.slane %v1633, 6
      %v1728 = vrot.slane %v1634, 2
      %v1729 = vrot.slane %v1634, 4
      %v1730 = vrot.slane %v1635, 2
      %v1731 = vrot.slane %v1635, 4
      %v1732 = vrot.slane %v1635, 6
      %v1733 = vrot.slane %v1636, 2
      %v1734 = vrot.slane %v1636, 4
      %1735 = vst [vmem:[#allocation1] ss:$4 sm:$0xff] %v1609
      %s1736 = scalar_lea.vmem [#allocation1], 1
      %1737 = vst [vmem:[%s1736] ss:$4 sm:$0xff] %v1665
      %s1738 = scalar_lea.vmem [#allocation1], 2
      %1739 = vst [vmem:[%s1738] ss:$4 sm:$0xff] %v1666
      %s1740 = scalar_lea.vmem [#allocation1], 3
      %1741 = vst [vmem:[%s1740] ss:$4 sm:$0xff] %v1667
      %s1742 = scalar_lea.vmem [#allocation1], 32
      %1743 = vst [vmem:[%s1742] ss:$4 sm:$0xff] %v1610
      %s1744 = scalar_lea.vmem [#allocation1], 33
      %1745 = vst [vmem:[%s1744] ss:$4 sm:$0xff] %v1668
      %s1746 = scalar_lea.vmem [#allocation1], 34
      %1747 = vst [vmem:[%s1746] ss:$4 sm:$0xff] %v1669
      %s1748 = scalar_lea.vmem [#allocation1], 35
      %1749 = vst [vmem:[%s1748] ss:$4 sm:$0xff] %v1611
      %v1750 = vld.sshfl [vmem:[#allocation1] sm:$0xff pattern:$0x73625140]
      %v1751 = vld.sshfl [vmem:[#allocation1 + $0x20] sm:$0xff pattern:$0x73625140]
      %1752 = vst [vmem:[#allocation1] ss:$4 sm:$0xff] %v1670
      %1753 = vst [vmem:[%s1736] ss:$4 sm:$0xff] %v1671
      %1754 = vst [vmem:[%s1738] ss:$4 sm:$0xff] %v1672
      %1755 = vst [vmem:[%s1740] ss:$4 sm:$0xff] %v1612
      %1756 = vst [vmem:[%s1742] ss:$4 sm:$0xff] %v1673
      %1757 = vst [vmem:[%s1744] ss:$4 sm:$0xff] %v1674
      %1758 = vst [vmem:[%s1746] ss:$4 sm:$0xff] %v1613
      %1759 = vst [vmem:[%s1748] ss:$4 sm:$0xff] %v1675
      %v1760 = vld.sshfl [vmem:[#allocation1] sm:$0xff pattern:$0x73625140]
      %v1761 = vld.sshfl [vmem:[#allocation1 + $0x20] sm:$0xff pattern:$0x73625140]
      %1762 = vst [vmem:[#allocation1] ss:$4 sm:$0xff] %v1676
      %1763 = vst [vmem:[%s1736] ss:$4 sm:$0xff] %v1677
      %1764 = vst [vmem:[%s1738] ss:$4 sm:$0xff] %v1614
      %1765 = vst [vmem:[%s1740] ss:$4 sm:$0xff] %v1678
      %1766 = vst [vmem:[%s1742] ss:$4 sm:$0xff] %v1679
      %1767 = vst [vmem:[%s1744] ss:$4 sm:$0xff] %v1615
      %1768 = vst [vmem:[%s1746] ss:$4 sm:$0xff] %v1680
      %1769 = vst [vmem:[%s1748] ss:$4 sm:$0xff] %v1681
      %v1770 = vld.sshfl [vmem:[#allocation1] sm:$0xff pattern:$0x73625140]
      %v1771 = vld.sshfl [vmem:[#allocation1 + $0x20] sm:$0xff pattern:$0x73625140]
      %1772 = vst [vmem:[#allocation1] ss:$4 sm:$0xff] %v1682
      %1773 = vst [vmem:[%s1736] ss:$4 sm:$0xff] %v1616
      %1774 = vst [vmem:[%s1738] ss:$4 sm:$0xff] %v1683
      %1775 = vst [vmem:[%s1740] ss:$4 sm:$0xff] %v1684
      %1776 = vst [vmem:[%s1742] ss:$4 sm:$0xff] %v1617
      %1777 = vst [vmem:[%s1744] ss:$4 sm:$0xff] %v1685
      %1778 = vst [vmem:[%s1746] ss:$4 sm:$0xff] %v1686
      %1779 = vst [vmem:[%s1748] ss:$4 sm:$0xff] %v1687
      %v1780 = vld.sshfl [vmem:[#allocation1] sm:$0xff pattern:$0x73625140]
      %v1781 = vld.sshfl [vmem:[#allocation1 + $0x20] sm:$0xff pattern:$0x73625140]
      %1782 = vst [vmem:[#allocation1] ss:$4 sm:$0xff] %v1618
      %1783 = vst [vmem:[%s1736] ss:$4 sm:$0xff] %v1688
      %1784 = vst [vmem:[%s1738] ss:$4 sm:$0xff] %v1689
      %1785 = vst [vmem:[%s1740] ss:$4 sm:$0xff] %v1619
      %1786 = vst [vmem:[%s1742] ss:$4 sm:$0xff] %v1690
      %1787 = vst [vmem:[%s1744] ss:$4 sm:$0xff] %v1691
      %1788 = vst [vmem:[%s1746] ss:$4 sm:$0xff] %v1692
      %1789 = vst [vmem:[%s1748] ss:$4 sm:$0xff] %v1620
      %v1790 = vld.sshfl [vmem:[#allocation1] sm:$0xff pattern:$0x73625140]
      %v1791 = vld.sshfl [vmem:[#allocation1 + $0x20] sm:$0xff pattern:$0x73625140]
      %1792 = vst [vmem:[#allocation1] ss:$4 sm:$0xff] %v1693
      %1793 = vst [vmem:[%s1736] ss:$4 sm:$0xff] %v1694
      %1794 = vst [vmem:[%s1738] ss:$4 sm:$0xff] %v1621
      %1795 = vst [vmem:[%s1740] ss:$4 sm:$0xff] %v1695
      %1796 = vst [vmem:[%s1742] ss:$4 sm:$0xff] %v1696
      %1797 = vst [vmem:[%s1744] ss:$4 sm:$0xff] %v1697
      %1798 = vst [vmem:[%s1746] ss:$4 sm:$0xff] %v1622
      %1799 = vst [vmem:[%s1748] ss:$4 sm:$0xff] %v1698
      %v1800 = vld.sshfl [vmem:[#allocation1] sm:$0xff pattern:$0x73625140]
      %v1801 = vld.sshfl [vmem:[#allocation1 + $0x20] sm:$0xff pattern:$0x73625140]
      %1802 = vst [vmem:[#allocation1] ss:$4 sm:$0xff] %v1699
      %1803 = vst [vmem:[%s1736] ss:$4 sm:$0xff] %v1623
      %1804 = vst [vmem:[%s1738] ss:$4 sm:$0xff] %v1700
      %1805 = vst [vmem:[%s1740] ss:$4 sm:$0xff] %v1701
      %1806 = vst [vmem:[%s1742] ss:$4 sm:$0xff] %v1702
      %1807 = vst [vmem:[%s1744] ss:$4 sm:$0xff] %v1624
      %1808 = vst [vmem:[%s1746] ss:$4 sm:$0xff] %v1703
      %1809 = vst [vmem:[%s1748] ss:$4 sm:$0xff] %v1704
      %v1810 = vld.sshfl [vmem:[#allocation1] sm:$0xff pattern:$0x73625140]
      %v1811 = vld.sshfl [vmem:[#allocation1 + $0x20] sm:$0xff pattern:$0x73625140]
      %1812 = vst [vmem:[#allocation1] ss:$4 sm:$0xff] %v1625
      %1813 = vst [vmem:[%s1736] ss:$4 sm:$0xff] %v1705
      %1814 = vst [vmem:[%s1738] ss:$4 sm:$0xff] %v1706
      %1815 = vst [vmem:[%s1740] ss:$4 sm:$0xff] %v1707
      %1816 = vst [vmem:[%s1742] ss:$4 sm:$0xff] %v1626
      %1817 = vst [vmem:[%s1744] ss:$4 sm:$0xff] %v1708
      %1818 = vst [vmem:[%s1746] ss:$4 sm:$0xff] %v1709
      %1819 = vst [vmem:[%s1748] ss:$4 sm:$0xff] %v1627
      %v1820 = vld.sshfl [vmem:[#allocation1] sm:$0xff pattern:$0x73625140]
      %v1821 = vld.sshfl [vmem:[#allocation1 + $0x20] sm:$0xff pattern:$0x73625140]
      %1822 = vst [vmem:[#allocation1] ss:$4 sm:$0xff] %v1710
      %1823 = vst [vmem:[%s1736] ss:$4 sm:$0xff] %v1711
      %1824 = vst [vmem:[%s1738] ss:$4 sm:$0xff] %v1712
      %1825 = vst [vmem:[%s1740] ss:$4 sm:$0xff] %v1628
      %1826 = vst [vmem:[%s1742] ss:$4 sm:$0xff] %v1713
      %1827 = vst [vmem:[%s1744] ss:$4 sm:$0xff] %v1714
      %1828 = vst [vmem:[%s1746] ss:$4 sm:$0xff] %v1629
      %1829 = vst [vmem:[%s1748] ss:$4 sm:$0xff] %v1715
      %v1830 = vld.sshfl [vmem:[#allocation1] sm:$0xff pattern:$0x73625140]
      %v1831 = vld.sshfl [vmem:[#allocation1 + $0x20] sm:$0xff pattern:$0x73625140]
      %1832 = vst [vmem:[#allocation1] ss:$4 sm:$0xff] %v1716
      %1833 = vst [vmem:[%s1736] ss:$4 sm:$0xff] %v1717
      %1834 = vst [vmem:[%s1738] ss:$4 sm:$0xff] %v1630
      %1835 = vst [vmem:[%s1740] ss:$4 sm:$0xff] %v1718
      %1836 = vst [vmem:[%s1742] ss:$4 sm:$0xff] %v1719
      %1837 = vst [vmem:[%s1744] ss:$4 sm:$0xff] %v1631
      %1838 = vst [vmem:[%s1746] ss:$4 sm:$0xff] %v1720
      %1839 = vst [vmem:[%s1748] ss:$4 sm:$0xff] %v1721
      %v1840 = vld.sshfl [vmem:[#allocation1] sm:$0xff pattern:$0x73625140]
      %v1841 = vld.sshfl [vmem:[#allocation1 + $0x20] sm:$0xff pattern:$0x73625140]
      %1842 = vst [vmem:[#allocation1] ss:$4 sm:$0xff] %v1722
      %1843 = vst [vmem:[%s1736] ss:$4 sm:$0xff] %v1632
      %1844 = vst [vmem:[%s1738] ss:$4 sm:$0xff] %v1723
      %1845 = vst [vmem:[%s1740] ss:$4 sm:$0xff] %v1724
      %1846 = vst [vmem:[%s1742] ss:$4 sm:$0xff] %v1633
      %1847 = vst [vmem:[%s1744] ss:$4 sm:$0xff] %v1725
      %1848 = vst [vmem:[%s1746] ss:$4 sm:$0xff] %v1726
      %1849 = vst [vmem:[%s1748] ss:$4 sm:$0xff] %v1727
      %v1850 = vld.sshfl [vmem:[#allocation1] sm:$0xff pattern:$0x73625140]
      %v1851 = vld.sshfl [vmem:[#allocation1 + $0x20] sm:$0xff pattern:$0x73625140]
      %1852 = vst [vmem:[#allocation1] ss:$4 sm:$0xff] %v1634
      %1853 = vst [vmem:[%s1736] ss:$4 sm:$0xff] %v1728
      %1854 = vst [vmem:[%s1738] ss:$4 sm:$0xff] %v1729
      %1855 = vst [vmem:[%s1740] ss:$4 sm:$0xff] %v1635
      %1856 = vst [vmem:[%s1742] ss:$4 sm:$0xff] %v1730
      %1857 = vst [vmem:[%s1744] ss:$4 sm:$0xff] %v1731
      %1858 = vst [vmem:[%s1746] ss:$4 sm:$0xff] %v1732
      %1859 = vst [vmem:[%s1748] ss:$4 sm:$0xff] %v1636
      %v1860 = vld.sshfl [vmem:[#allocation1] sm:$0xff pattern:$0x73625140]
      %v1861 = vld.sshfl [vmem:[#allocation1 + $0x20] sm:$0xff pattern:$0x73625140]
      %1862 = vst [vmem:[#allocation1] ss:$4 sm:$0xff] %v1733
      %1863 = vst [vmem:[%s1736] ss:$4 sm:$0xff] %v1734
      %v1864 = vld.sshfl [vmem:[#allocation1] sm:$0xff pattern:$0x73625140]
      %1865 = vrot.lane.b32.xlu0 %v1750, 16
      %v1866 = vpop.permute.xlu0 %1865
      %1867 = vrot.lane.b32.xlu0 %v1751, 16
      %v1868 = vpop.permute.xlu0 %1867
      %1869 = vrot.lane.b32.xlu0 %v1760, 16
      %v1870 = vpop.permute.xlu0 %1869
      %1871 = vrot.lane.b32.xlu0 %v1761, 16
      %v1872 = vpop.permute.xlu0 %1871
      %1873 = vrot.lane.b32.xlu0 %v1770, 16
      %v1874 = vpop.permute.xlu0 %1873
      %1875 = vrot.lane.b32.xlu0 %v1771, 16
      %v1876 = vpop.permute.xlu0 %1875
      %1877 = vrot.lane.b32.xlu0 %v1780, 16
      %v1878 = vpop.permute.xlu0 %1877
      %1879 = vrot.lane.b32.xlu0 %v1781, 16
      %v1880 = vpop.permute.xlu0 %1879
      %1881 = vrot.lane.b32.xlu0 %v1790, 16
      %v1882 = vpop.permute.xlu0 %1881
      %1883 = vrot.lane.b32.xlu0 %v1791, 16
      %v1884 = vpop.permute.xlu0 %1883
      %1885 = vrot.lane.b32.xlu0 %v1800, 16
      %v1886 = vpop.permute.xlu0 %1885
      %1887 = vrot.lane.b32.xlu0 %v1801, 16
      %v1888 = vpop.permute.xlu0 %1887
      %1889 = vrot.lane.b32.xlu0 %v1810, 16
      %v1890 = vpop.permute.xlu0 %1889
      %1891 = vrot.lane.b32.xlu0 %v1811, 16
      %v1892 = vpop.permute.xlu0 %1891
      %1893 = vrot.lane.b32.xlu0 %v1820, 16
      %v1894 = vpop.permute.xlu0 %1893
      %1895 = vrot.lane.b32.xlu0 %v1821, 16
      %v1896 = vpop.permute.xlu0 %1895
      %1897 = vrot.lane.b32.xlu0 %v1830, 16
      %v1898 = vpop.permute.xlu0 %1897
      %1899 = vrot.lane.b32.xlu0 %v1831, 16
      %v1900 = vpop.permute.xlu0 %1899
      %1901 = vrot.lane.b32.xlu0 %v1840, 16
      %v1902 = vpop.permute.xlu0 %1901
      %1903 = vrot.lane.b32.xlu0 %v1841, 16
      %v1904 = vpop.permute.xlu0 %1903
      %1905 = vrot.lane.b32.xlu0 %v1850, 16
      %v1906 = vpop.permute.xlu0 %1905
      %1907 = vrot.lane.b32.xlu0 %v1851, 16
      %v1908 = vpop.permute.xlu0 %1907
      %1909 = vrot.lane.b32.xlu0 %v1860, 16
      %v1910 = vpop.permute.xlu0 %1909
      %1911 = vrot.lane.b32.xlu0 %v1861, 16
      %v1912 = vpop.permute.xlu0 %1911
      %1913 = vrot.lane.b32.xlu0 %v1864, 16
      %v1914 = vpop.permute.xlu0 %1913
      %vm1940 = vcmask 162944
      %1941 = vst.msk [vmem:[#allocation2] sm:$0xff] %vm1940, %v1866
      %1942 = vst.msk [vmem:[#allocation2 + $0x8] sm:$0xff] %vm1940, %v1868
      %1943 = vst.msk [vmem:[#allocation2 + $0x10] sm:$0xff] %vm1940, %v1870
      %1944 = vst.msk [vmem:[#allocation2 + $0x18] sm:$0xff] %vm1940, %v1872
      %1945 = vst.msk [vmem:[#allocation2 + $0x20] sm:$0xff] %vm1940, %v1874
      %1946 = vst.msk [vmem:[#allocation2 + $0x28] sm:$0xff] %vm1940, %v1876
      %1947 = vst.msk [vmem:[#allocation2 + $0x30] sm:$0xff] %vm1940, %v1878
      %1948 = vst.msk [vmem:[#allocation2 + $0x38] sm:$0xff] %vm1940, %v1880
      %1949 = vst.msk [vmem:[#allocation2 + $0x40] sm:$0xff] %vm1940, %v1882
      %1950 = vst.msk [vmem:[#allocation2 + $0x48] sm:$0xff] %vm1940, %v1884
      %1951 = vst.msk [vmem:[#allocation2 + $0x50] sm:$0xff] %vm1940, %v1886
      %1952 = vst.msk [vmem:[#allocation2 + $0x58] sm:$0xff] %vm1940, %v1888
      %1953 = vst.msk [vmem:[#allocation2 + $0x60] sm:$0xff] %vm1940, %v1890
      %1954 = vst.msk [vmem:[#allocation2 + $0x68] sm:$0xff] %vm1940, %v1892
      %1955 = vst.msk [vmem:[#allocation2 + $0x70] sm:$0xff] %vm1940, %v1894
      %1956 = vst.msk [vmem:[#allocation2 + $0x78] sm:$0xff] %vm1940, %v1896
      %1957 = vst.msk [vmem:[#allocation2 + $0x80] sm:$0xff] %vm1940, %v1898
      %1958 = vst.msk [vmem:[#allocation2 + $0x88] sm:$0xff] %vm1940, %v1900
      %1959 = vst.msk [vmem:[#allocation2 + $0x90] sm:$0xff] %vm1940, %v1902
      %1960 = vst.msk [vmem:[#allocation2 + $0x98] sm:$0xff] %vm1940, %v1904
      %1961 = vst.msk [vmem:[#allocation2 + $0xa0] sm:$0xff] %vm1940, %v1906
      %1962 = vst.msk [vmem:[#allocation2 + $0xa8] sm:$0xff] %vm1940, %v1908
      %1963 = vst.msk [vmem:[#allocation2 + $0xb0] sm:$0xff] %vm1940, %v1910
      %1964 = vst.msk [vmem:[#allocation2 + $0xb8] sm:$0xff] %vm1940, %v1912
      %vm1965 = vcmask 158848
      %1966 = vst.msk [vmem:[#allocation2 + $0xc0] sm:$0xf] %vm1965, %v1914
      %v1967 = vld [vmem:[%s1250 + $0x2] sm:$0xff]
      %v1968 = vld [vmem:[%s1250 + $0xa] sm:$0x3f]
      %v1969 = vld [vmem:[%s1250 + $0x12] sm:$0xff]
      %v1970 = vld [vmem:[%s1250 + $0x1a] sm:$0x3f]
      %v1971 = vld [vmem:[%s1250 + $0x22] sm:$0xff]
      %v1972 = vld [vmem:[%s1250 + $0x2a] sm:$0x3f]
      %v1973 = vld [vmem:[%s1250 + $0x32] sm:$0xff]
      %v1974 = vld [vmem:[%s1250 + $0x3a] sm:$0x3f]
      %v1975 = vld [vmem:[%s1250 + $0x42] sm:$0xff]
      %v1976 = vld [vmem:[%s1250 + $0x4a] sm:$0x3f]
      %v1977 = vld [vmem:[%s1250 + $0x52] sm:$0xff]
      %v1978 = vld [vmem:[%s1250 + $0x5a] sm:$0x3f]
      %v1979 = vld [vmem:[%s1250 + $0x62] sm:$0xff]
      %v1980 = vld [vmem:[%s1250 + $0x6a] sm:$0x3f]
      %v1981 = vld [vmem:[%s1250 + $0x72] sm:$0xff]
      %v1982 = vld [vmem:[%s1250 + $0x7a] sm:$0x3f]
      %v1983 = vld [vmem:[%s1250 + $0x82] sm:$0xff]
      %v1984 = vld [vmem:[%s1250 + $0x8a] sm:$0x3f]
      %v1985 = vld [vmem:[%s1250 + $0x92] sm:$0xff]
      %v1986 = vld [vmem:[%s1250 + $0x9a] sm:$0x3f]
      %v1987 = vld [vmem:[%s1250 + $0xa2] sm:$0xff]
      %v1988 = vld [vmem:[%s1250 + $0xaa] sm:$0x3f]
      %v1989 = vld [vmem:[%s1250 + $0xb2] sm:$0xff]
      %v1990 = vld [vmem:[%s1250 + $0xba] sm:$0x3f]
      %v1991 = vld [vmem:[%s1250 + $0xc2] sm:$0xff]
      %v1992 = vld [vmem:[%s1250 + $0xca] sm:$0x3f]
      %v1993 = vld [vmem:[%s1250 + $0xd2] sm:$0xff]
      %v1994 = vld [vmem:[%s1250 + $0xda] sm:$0x3f]
      %v2023 = vrot.slane %v1967, 2
      %v2024 = vrot.slane %v1967, 4
      %v2025 = vrot.slane %v1967, 6
      %v2026 = vrot.slane %v1968, 2
      %v2027 = vrot.slane %v1968, 4
      %v2028 = vrot.slane %v1969, 2
      %v2029 = vrot.slane %v1969, 4
      %v2030 = vrot.slane %v1969, 6
      %v2031 = vrot.slane %v1970, 2
      %v2032 = vrot.slane %v1970, 4
      %v2033 = vrot.slane %v1971, 2
      %v2034 = vrot.slane %v1971, 4
      %v2035 = vrot.slane %v1971, 6
      %v2036 = vrot.slane %v1972, 2
      %v2037 = vrot.slane %v1972, 4
      %v2038 = vrot.slane %v1973, 2
      %v2039 = vrot.slane %v1973, 4
      %v2040 = vrot.slane %v1973, 6
      %v2041 = vrot.slane %v1974, 2
      %v2042 = vrot.slane %v1974, 4
      %v2043 = vrot.slane %v1975, 2
      %v2044 = vrot.slane %v1975, 4
      %v2045 = vrot.slane %v1975, 6
      %v2046 = vrot.slane %v1976, 2
      %v2047 = vrot.slane %v1976, 4
      %v2048 = vrot.slane %v1977, 2
      %v2049 = vrot.slane %v1977, 4
      %v2050 = vrot.slane %v1977, 6
      %v2051 = vrot.slane %v1978, 2
      %v2052 = vrot.slane %v1978, 4
      %v2053 = vrot.slane %v1979, 2
      %v2054 = vrot.slane %v1979, 4
      %v2055 = vrot.slane %v1979, 6
      %v2056 = vrot.slane %v1980, 2
      %v2057 = vrot.slane %v1980, 4
      %v2058 = vrot.slane %v1981, 2
      %v2059 = vrot.slane %v1981, 4
      %v2060 = vrot.slane %v1981, 6
      %v2061 = vrot.slane %v1982, 2
      %v2062 = vrot.slane %v1982, 4
      %v2063 = vrot.slane %v1983, 2
      %v2064 = vrot.slane %v1983, 4
      %v2065 = vrot.slane %v1983, 6
      %v2066 = vrot.slane %v1984, 2
      %v2067 = vrot.slane %v1984, 4
      %v2068 = vrot.slane %v1985, 2
      %v2069 = vrot.slane %v1985, 4
      %v2070 = vrot.slane %v1985, 6
      %v2071 = vrot.slane %v1986, 2
      %v2072 = vrot.slane %v1986, 4
      %v2073 = vrot.slane %v1987, 2
      %v2074 = vrot.slane %v1987, 4
      %v2075 = vrot.slane %v1987, 6
      %v2076 = vrot.slane %v1988, 2
      %v2077 = vrot.slane %v1988, 4
      %v2078 = vrot.slane %v1989, 2
      %v2079 = vrot.slane %v1989, 4
      %v2080 = vrot.slane %v1989, 6
      %v2081 = vrot.slane %v1990, 2
      %v2082 = vrot.slane %v1990, 4
      %v2083 = vrot.slane %v1991, 2
      %v2084 = vrot.slane %v1991, 4
      %v2085 = vrot.slane %v1991, 6
      %v2086 = vrot.slane %v1992, 2
      %v2087 = vrot.slane %v1992, 4
      %v2088 = vrot.slane %v1993, 2
      %v2089 = vrot.slane %v1993, 4
      %v2090 = vrot.slane %v1993, 6
      %v2091 = vrot.slane %v1994, 2
      %v2092 = vrot.slane %v1994, 4
      %2093 = vst [vmem:[#allocation1] ss:$4 sm:$0xff] %v1967
      %s2094 = scalar_lea.vmem [#allocation1], 1
      %2095 = vst [vmem:[%s2094] ss:$4 sm:$0xff] %v2023
      %s2096 = scalar_lea.vmem [#allocation1], 2
      %2097 = vst [vmem:[%s2096] ss:$4 sm:$0xff] %v2024
      %s2098 = scalar_lea.vmem [#allocation1], 3
      %2099 = vst [vmem:[%s2098] ss:$4 sm:$0xff] %v2025
      %s2100 = scalar_lea.vmem [#allocation1], 32
      %2101 = vst [vmem:[%s2100] ss:$4 sm:$0xff] %v1968
      %s2102 = scalar_lea.vmem [#allocation1], 33
      %2103 = vst [vmem:[%s2102] ss:$4 sm:$0xff] %v2026
      %s2104 = scalar_lea.vmem [#allocation1], 34
      %2105 = vst [vmem:[%s2104] ss:$4 sm:$0xff] %v2027
      %s2106 = scalar_lea.vmem [#allocation1], 35
      %2107 = vst [vmem:[%s2106] ss:$4 sm:$0xff] %v1969
      %v2108 = vld.sshfl [vmem:[#allocation1] sm:$0xff pattern:$0x73625140]
      %v2109 = vld.sshfl [vmem:[#allocation1 + $0x20] sm:$0xff pattern:$0x73625140]
      %2110 = vst [vmem:[#allocation1] ss:$4 sm:$0xff] %v2028
      %2111 = vst [vmem:[%s2094] ss:$4 sm:$0xff] %v2029
      %2112 = vst [vmem:[%s2096] ss:$4 sm:$0xff] %v2030
      %2113 = vst [vmem:[%s2098] ss:$4 sm:$0xff] %v1970
      %2114 = vst [vmem:[%s2100] ss:$4 sm:$0xff] %v2031
      %2115 = vst [vmem:[%s2102] ss:$4 sm:$0xff] %v2032
      %2116 = vst [vmem:[%s2104] ss:$4 sm:$0xff] %v1971
      %2117 = vst [vmem:[%s2106] ss:$4 sm:$0xff] %v2033
      %v2118 = vld.sshfl [vmem:[#allocation1] sm:$0xff pattern:$0x73625140]
      %v2119 = vld.sshfl [vmem:[#allocation1 + $0x20] sm:$0xff pattern:$0x73625140]
      %2120 = vst [vmem:[#allocation1] ss:$4 sm:$0xff] %v2034
      %2121 = vst [vmem:[%s2094] ss:$4 sm:$0xff] %v2035
      %2122 = vst [vmem:[%s2096] ss:$4 sm:$0xff] %v1972
      %2123 = vst [vmem:[%s2098] ss:$4 sm:$0xff] %v2036
      %2124 = vst [vmem:[%s2100] ss:$4 sm:$0xff] %v2037
      %2125 = vst [vmem:[%s2102] ss:$4 sm:$0xff] %v1973
      %2126 = vst [vmem:[%s2104] ss:$4 sm:$0xff] %v2038
      %2127 = vst [vmem:[%s2106] ss:$4 sm:$0xff] %v2039
      %v2128 = vld.sshfl [vmem:[#allocation1] sm:$0xff pattern:$0x73625140]
      %v2129 = vld.sshfl [vmem:[#allocation1 + $0x20] sm:$0xff pattern:$0x73625140]
      %2130 = vst [vmem:[#allocation1] ss:$4 sm:$0xff] %v2040
      %2131 = vst [vmem:[%s2094] ss:$4 sm:$0xff] %v1974
      %2132 = vst [vmem:[%s2096] ss:$4 sm:$0xff] %v2041
      %2133 = vst [vmem:[%s2098] ss:$4 sm:$0xff] %v2042
      %2134 = vst [vmem:[%s2100] ss:$4 sm:$0xff] %v1975
      %2135 = vst [vmem:[%s2102] ss:$4 sm:$0xff] %v2043
      %2136 = vst [vmem:[%s2104] ss:$4 sm:$0xff] %v2044
      %2137 = vst [vmem:[%s2106] ss:$4 sm:$0xff] %v2045
      %v2138 = vld.sshfl [vmem:[#allocation1] sm:$0xff pattern:$0x73625140]
      %v2139 = vld.sshfl [vmem:[#allocation1 + $0x20] sm:$0xff pattern:$0x73625140]
      %2140 = vst [vmem:[#allocation1] ss:$4 sm:$0xff] %v1976
      %2141 = vst [vmem:[%s2094] ss:$4 sm:$0xff] %v2046
      %2142 = vst [vmem:[%s2096] ss:$4 sm:$0xff] %v2047
      %2143 = vst [vmem:[%s2098] ss:$4 sm:$0xff] %v1977
      %2144 = vst [vmem:[%s2100] ss:$4 sm:$0xff] %v2048
      %2145 = vst [vmem:[%s2102] ss:$4 sm:$0xff] %v2049
      %2146 = vst [vmem:[%s2104] ss:$4 sm:$0xff] %v2050
      %2147 = vst [vmem:[%s2106] ss:$4 sm:$0xff] %v1978
      %v2148 = vld.sshfl [vmem:[#allocation1] sm:$0xff pattern:$0x73625140]
      %v2149 = vld.sshfl [vmem:[#allocation1 + $0x20] sm:$0xff pattern:$0x73625140]
      %2150 = vst [vmem:[#allocation1] ss:$4 sm:$0xff] %v2051
      %2151 = vst [vmem:[%s2094] ss:$4 sm:$0xff] %v2052
      %2152 = vst [vmem:[%s2096] ss:$4 sm:$0xff] %v1979
      %2153 = vst [vmem:[%s2098] ss:$4 sm:$0xff] %v2053
      %2154 = vst [vmem:[%s2100] ss:$4 sm:$0xff] %v2054
      %2155 = vst [vmem:[%s2102] ss:$4 sm:$0xff] %v2055
      %2156 = vst [vmem:[%s2104] ss:$4 sm:$0xff] %v1980
      %2157 = vst [vmem:[%s2106] ss:$4 sm:$0xff] %v2056
      %v2158 = vld.sshfl [vmem:[#allocation1] sm:$0xff pattern:$0x73625140]
      %v2159 = vld.sshfl [vmem:[#allocation1 + $0x20] sm:$0xff pattern:$0x73625140]
      %2160 = vst [vmem:[#allocation1] ss:$4 sm:$0xff] %v2057
      %2161 = vst [vmem:[%s2094] ss:$4 sm:$0xff] %v1981
      %2162 = vst [vmem:[%s2096] ss:$4 sm:$0xff] %v2058
      %2163 = vst [vmem:[%s2098] ss:$4 sm:$0xff] %v2059
      %2164 = vst [vmem:[%s2100] ss:$4 sm:$0xff] %v2060
      %2165 = vst [vmem:[%s2102] ss:$4 sm:$0xff] %v1982
      %2166 = vst [vmem:[%s2104] ss:$4 sm:$0xff] %v2061
      %2167 = vst [vmem:[%s2106] ss:$4 sm:$0xff] %v2062
      %v2168 = vld.sshfl [vmem:[#allocation1] sm:$0xff pattern:$0x73625140]
      %v2169 = vld.sshfl [vmem:[#allocation1 + $0x20] sm:$0xff pattern:$0x73625140]
      %2170 = vst [vmem:[#allocation1] ss:$4 sm:$0xff] %v1983
      %2171 = vst [vmem:[%s2094] ss:$4 sm:$0xff] %v2063
      %2172 = vst [vmem:[%s2096] ss:$4 sm:$0xff] %v2064
      %2173 = vst [vmem:[%s2098] ss:$4 sm:$0xff] %v2065
      %2174 = vst [vmem:[%s2100] ss:$4 sm:$0xff] %v1984
      %2175 = vst [vmem:[%s2102] ss:$4 sm:$0xff] %v2066
      %2176 = vst [vmem:[%s2104] ss:$4 sm:$0xff] %v2067
      %2177 = vst [vmem:[%s2106] ss:$4 sm:$0xff] %v1985
      %v2178 = vld.sshfl [vmem:[#allocation1] sm:$0xff pattern:$0x73625140]
      %v2179 = vld.sshfl [vmem:[#allocation1 + $0x20] sm:$0xff pattern:$0x73625140]
      %2180 = vst [vmem:[#allocation1] ss:$4 sm:$0xff] %v2068
      %2181 = vst [vmem:[%s2094] ss:$4 sm:$0xff] %v2069
      %2182 = vst [vmem:[%s2096] ss:$4 sm:$0xff] %v2070
      %2183 = vst [vmem:[%s2098] ss:$4 sm:$0xff] %v1986
      %2184 = vst [vmem:[%s2100] ss:$4 sm:$0xff] %v2071
      %2185 = vst [vmem:[%s2102] ss:$4 sm:$0xff] %v2072
      %2186 = vst [vmem:[%s2104] ss:$4 sm:$0xff] %v1987
      %2187 = vst [vmem:[%s2106] ss:$4 sm:$0xff] %v2073
      %v2188 = vld.sshfl [vmem:[#allocation1] sm:$0xff pattern:$0x73625140]
      %v2189 = vld.sshfl [vmem:[#allocation1 + $0x20] sm:$0xff pattern:$0x73625140]
      %2190 = vst [vmem:[#allocation1] ss:$4 sm:$0xff] %v2074
      %2191 = vst [vmem:[%s2094] ss:$4 sm:$0xff] %v2075
      %2192 = vst [vmem:[%s2096] ss:$4 sm:$0xff] %v1988
      %2193 = vst [vmem:[%s2098] ss:$4 sm:$0xff] %v2076
      %2194 = vst [vmem:[%s2100] ss:$4 sm:$0xff] %v2077
      %2195 = vst [vmem:[%s2102] ss:$4 sm:$0xff] %v1989
      %2196 = vst [vmem:[%s2104] ss:$4 sm:$0xff] %v2078
      %2197 = vst [vmem:[%s2106] ss:$4 sm:$0xff] %v2079
      %v2198 = vld.sshfl [vmem:[#allocation1] sm:$0xff pattern:$0x73625140]
      %v2199 = vld.sshfl [vmem:[#allocation1 + $0x20] sm:$0xff pattern:$0x73625140]
      %2200 = vst [vmem:[#allocation1] ss:$4 sm:$0xff] %v2080
      %2201 = vst [vmem:[%s2094] ss:$4 sm:$0xff] %v1990
      %2202 = vst [vmem:[%s2096] ss:$4 sm:$0xff] %v2081
      %2203 = vst [vmem:[%s2098] ss:$4 sm:$0xff] %v2082
      %2204 = vst [vmem:[%s2100] ss:$4 sm:$0xff] %v1991
      %2205 = vst [vmem:[%s2102] ss:$4 sm:$0xff] %v2083
      %2206 = vst [vmem:[%s2104] ss:$4 sm:$0xff] %v2084
      %2207 = vst [vmem:[%s2106] ss:$4 sm:$0xff] %v2085
      %v2208 = vld.sshfl [vmem:[#allocation1] sm:$0xff pattern:$0x73625140]
      %v2209 = vld.sshfl [vmem:[#allocation1 + $0x20] sm:$0xff pattern:$0x73625140]
      %2210 = vst [vmem:[#allocation1] ss:$4 sm:$0xff] %v1992
      %2211 = vst [vmem:[%s2094] ss:$4 sm:$0xff] %v2086
      %2212 = vst [vmem:[%s2096] ss:$4 sm:$0xff] %v2087
      %2213 = vst [vmem:[%s2098] ss:$4 sm:$0xff] %v1993
      %2214 = vst [vmem:[%s2100] ss:$4 sm:$0xff] %v2088
      %2215 = vst [vmem:[%s2102] ss:$4 sm:$0xff] %v2089
      %2216 = vst [vmem:[%s2104] ss:$4 sm:$0xff] %v2090
      %2217 = vst [vmem:[%s2106] ss:$4 sm:$0xff] %v1994
      %v2218 = vld.sshfl [vmem:[#allocation1] sm:$0xff pattern:$0x73625140]
      %v2219 = vld.sshfl [vmem:[#allocation1 + $0x20] sm:$0xff pattern:$0x73625140]
      %2220 = vst [vmem:[#allocation1] ss:$4 sm:$0xff] %v2091
      %2221 = vst [vmem:[%s2094] ss:$4 sm:$0xff] %v2092
      %v2222 = vld.sshfl [vmem:[#allocation1] sm:$0xff pattern:$0x73625140]
      %2223 = vrot.lane.b32.xlu0 %v2108, 20
      %v2224 = vpop.permute.xlu0 %2223
      %2225 = vrot.lane.b32.xlu0 %v2109, 20
      %v2226 = vpop.permute.xlu0 %2225
      %2227 = vrot.lane.b32.xlu0 %v2118, 20
      %v2228 = vpop.permute.xlu0 %2227
      %2229 = vrot.lane.b32.xlu0 %v2119, 20
      %v2230 = vpop.permute.xlu0 %2229
      %2231 = vrot.lane.b32.xlu0 %v2128, 20
      %v2232 = vpop.permute.xlu0 %2231
      %2233 = vrot.lane.b32.xlu0 %v2129, 20
      %v2234 = vpop.permute.xlu0 %2233
      %2235 = vrot.lane.b32.xlu0 %v2138, 20
      %v2236 = vpop.permute.xlu0 %2235
      %2237 = vrot.lane.b32.xlu0 %v2139, 20
      %v2238 = vpop.permute.xlu0 %2237
      %2239 = vrot.lane.b32.xlu0 %v2148, 20
      %v2240 = vpop.permute.xlu0 %2239
      %2241 = vrot.lane.b32.xlu0 %v2149, 20
      %v2242 = vpop.permute.xlu0 %2241
      %2243 = vrot.lane.b32.xlu0 %v2158, 20
      %v2244 = vpop.permute.xlu0 %2243
      %2245 = vrot.lane.b32.xlu0 %v2159, 20
      %v2246 = vpop.permute.xlu0 %2245
      %2247 = vrot.lane.b32.xlu0 %v2168, 20
      %v2248 = vpop.permute.xlu0 %2247
      %2249 = vrot.lane.b32.xlu0 %v2169, 20
      %v2250 = vpop.permute.xlu0 %2249
      %2251 = vrot.lane.b32.xlu0 %v2178, 20
      %v2252 = vpop.permute.xlu0 %2251
      %2253 = vrot.lane.b32.xlu0 %v2179, 20
      %v2254 = vpop.permute.xlu0 %2253
      %2255 = vrot.lane.b32.xlu0 %v2188, 20
      %v2256 = vpop.permute.xlu0 %2255
      %2257 = vrot.lane.b32.xlu0 %v2189, 20
      %v2258 = vpop.permute.xlu0 %2257
      %2259 = vrot.lane.b32.xlu0 %v2198, 20
      %v2260 = vpop.permute.xlu0 %2259
      %2261 = vrot.lane.b32.xlu0 %v2199, 20
      %v2262 = vpop.permute.xlu0 %2261
      %2263 = vrot.lane.b32.xlu0 %v2208, 20
      %v2264 = vpop.permute.xlu0 %2263
      %2265 = vrot.lane.b32.xlu0 %v2209, 20
      %v2266 = vpop.permute.xlu0 %2265
      %2267 = vrot.lane.b32.xlu0 %v2218, 20
      %v2268 = vpop.permute.xlu0 %2267
      %2269 = vrot.lane.b32.xlu0 %v2219, 20
      %v2270 = vpop.permute.xlu0 %2269
      %2271 = vrot.lane.b32.xlu0 %v2222, 20
      %v2272 = vpop.permute.xlu0 %2271
      %vm2298 = vcmask 195744
      %2299 = vst.msk [vmem:[#allocation2] sm:$0xff] %vm2298, %v2224
      %2300 = vst.msk [vmem:[#allocation2 + $0x8] sm:$0xff] %vm2298, %v2226
      %2301 = vst.msk [vmem:[#allocation2 + $0x10] sm:$0xff] %vm2298, %v2228
      %2302 = vst.msk [vmem:[#allocation2 + $0x18] sm:$0xff] %vm2298, %v2230
      %2303 = vst.msk [vmem:[#allocation2 + $0x20] sm:$0xff] %vm2298, %v2232
      %2304 = vst.msk [vmem:[#allocation2 + $0x28] sm:$0xff] %vm2298, %v2234
      %2305 = vst.msk [vmem:[#allocation2 + $0x30] sm:$0xff] %vm2298, %v2236
      %2306 = vst.msk [vmem:[#allocation2 + $0x38] sm:$0xff] %vm2298, %v2238
      %2307 = vst.msk [vmem:[#allocation2 + $0x40] sm:$0xff] %vm2298, %v2240
      %2308 = vst.msk [vmem:[#allocation2 + $0x48] sm:$0xff] %vm2298, %v2242
      %2309 = vst.msk [vmem:[#allocation2 + $0x50] sm:$0xff] %vm2298, %v2244
      %2310 = vst.msk [vmem:[#allocation2 + $0x58] sm:$0xff] %vm2298, %v2246
      %2311 = vst.msk [vmem:[#allocation2 + $0x60] sm:$0xff] %vm2298, %v2248
      %2312 = vst.msk [vmem:[#allocation2 + $0x68] sm:$0xff] %vm2298, %v2250
      %2313 = vst.msk [vmem:[#allocation2 + $0x70] sm:$0xff] %vm2298, %v2252
      %2314 = vst.msk [vmem:[#allocation2 + $0x78] sm:$0xff] %vm2298, %v2254
      %2315 = vst.msk [vmem:[#allocation2 + $0x80] sm:$0xff] %vm2298, %v2256
      %2316 = vst.msk [vmem:[#allocation2 + $0x88] sm:$0xff] %vm2298, %v2258
      %2317 = vst.msk [vmem:[#allocation2 + $0x90] sm:$0xff] %vm2298, %v2260
      %2318 = vst.msk [vmem:[#allocation2 + $0x98] sm:$0xff] %vm2298, %v2262
      %2319 = vst.msk [vmem:[#allocation2 + $0xa0] sm:$0xff] %vm2298, %v2264
      %2320 = vst.msk [vmem:[#allocation2 + $0xa8] sm:$0xff] %vm2298, %v2266
      %2321 = vst.msk [vmem:[#allocation2 + $0xb0] sm:$0xff] %vm2298, %v2268
      %2322 = vst.msk [vmem:[#allocation2 + $0xb8] sm:$0xff] %vm2298, %v2270
      %vm2323 = vcmask 191648
      %2324 = vst.msk [vmem:[#allocation2 + $0xc0] sm:$0xf] %vm2323, %v2272
      %s2325 = scalar_lea.vmem %s214, 32
      %v2326 = vld [vmem:[%s2325] sm:$0xff]
      %v2327 = vld [vmem:[%s2325 + $0x8] sm:$0x3f]
      %v2328 = vld [vmem:[%s2325 + $0x10] sm:$0xff]
      %v2329 = vld [vmem:[%s2325 + $0x18] sm:$0x3f]
      %v2330 = vld [vmem:[%s2325 + $0x20] sm:$0xff]
      %v2331 = vld [vmem:[%s2325 + $0x28] sm:$0x3f]
      %v2332 = vld [vmem:[%s2325 + $0x30] sm:$0xff]
      %v2333 = vld [vmem:[%s2325 + $0x38] sm:$0x3f]
      %v2334 = vld [vmem:[%s2325 + $0x40] sm:$0xff]
      %v2335 = vld [vmem:[%s2325 + $0x48] sm:$0x3f]
      %v2336 = vld [vmem:[%s2325 + $0x50] sm:$0xff]
      %v2337 = vld [vmem:[%s2325 + $0x58] sm:$0x3f]
      %v2338 = vld [vmem:[%s2325 + $0x60] sm:$0xff]
      %v2339 = vld [vmem:[%s2325 + $0x68] sm:$0x3f]
      %v2340 = vld [vmem:[%s2325 + $0x70] sm:$0xff]
      %v2341 = vld [vmem:[%s2325 + $0x78] sm:$0x3f]
      %v2342 = vld [vmem:[%s2325 + $0x80] sm:$0xff]
      %v2343 = vld [vmem:[%s2325 + $0x88] sm:$0x3f]
      %v2344 = vld [vmem:[%s2325 + $0x90] sm:$0xff]
      %v2345 = vld [vmem:[%s2325 + $0x98] sm:$0x3f]
      %v2346 = vld [vmem:[%s2325 + $0xa0] sm:$0xff]
      %v2347 = vld [vmem:[%s2325 + $0xa8] sm:$0x3f]
      %v2348 = vld [vmem:[%s2325 + $0xb0] sm:$0xff]
      %v2349 = vld [vmem:[%s2325 + $0xb8] sm:$0x3f]
      %v2350 = vld [vmem:[%s2325 + $0xc0] sm:$0xff]
      %v2351 = vld [vmem:[%s2325 + $0xc8] sm:$0x3f]
      %v2352 = vld [vmem:[%s2325 + $0xd0] sm:$0xff]
      %v2353 = vld [vmem:[%s2325 + $0xd8] sm:$0x3f]
      %v2382 = vrot.slane %v2326, 2
      %v2383 = vrot.slane %v2326, 4
      %v2384 = vrot.slane %v2326, 6
      %v2385 = vrot.slane %v2327, 2
      %v2386 = vrot.slane %v2327, 4
      %v2387 = vrot.slane %v2328, 2
      %v2388 = vrot.slane %v2328, 4
      %v2389 = vrot.slane %v2328, 6
      %v2390 = vrot.slane %v2329, 2
      %v2391 = vrot.slane %v2329, 4
      %v2392 = vrot.slane %v2330, 2
      %v2393 = vrot.slane %v2330, 4
      %v2394 = vrot.slane %v2330, 6
      %v2395 = vrot.slane %v2331, 2
      %v2396 = vrot.slane %v2331, 4
      %v2397 = vrot.slane %v2332, 2
      %v2398 = vrot.slane %v2332, 4
      %v2399 = vrot.slane %v2332, 6
      %v2400 = vrot.slane %v2333, 2
      %v2401 = vrot.slane %v2333, 4
      %v2402 = vrot.slane %v2334, 2
      %v2403 = vrot.slane %v2334, 4
      %v2404 = vrot.slane %v2334, 6
      %v2405 = vrot.slane %v2335, 2
      %v2406 = vrot.slane %v2335, 4
      %v2407 = vrot.slane %v2336, 2
      %v2408 = vrot.slane %v2336, 4
      %v2409 = vrot.slane %v2336, 6
      %v2410 = vrot.slane %v2337, 2
      %v2411 = vrot.slane %v2337, 4
      %v2412 = vrot.slane %v2338, 2
      %v2413 = vrot.slane %v2338, 4
      %v2414 = vrot.slane %v2338, 6
      %v2415 = vrot.slane %v2339, 2
      %v2416 = vrot.slane %v2339, 4
      %v2417 = vrot.slane %v2340, 2
      %v2418 = vrot.slane %v2340, 4
      %v2419 = vrot.slane %v2340, 6
      %v2420 = vrot.slane %v2341, 2
      %v2421 = vrot.slane %v2341, 4
      %v2422 = vrot.slane %v2342, 2
      %v2423 = vrot.slane %v2342, 4
      %v2424 = vrot.slane %v2342, 6
      %v2425 = vrot.slane %v2343, 2
      %v2426 = vrot.slane %v2343, 4
      %v2427 = vrot.slane %v2344, 2
      %v2428 = vrot.slane %v2344, 4
      %v2429 = vrot.slane %v2344, 6
      %v2430 = vrot.slane %v2345, 2
      %v2431 = vrot.slane %v2345, 4
      %v2432 = vrot.slane %v2346, 2
      %v2433 = vrot.slane %v2346, 4
      %v2434 = vrot.slane %v2346, 6
      %v2435 = vrot.slane %v2347, 2
      %v2436 = vrot.slane %v2347, 4
      %v2437 = vrot.slane %v2348, 2
      %v2438 = vrot.slane %v2348, 4
      %v2439 = vrot.slane %v2348, 6
      %v2440 = vrot.slane %v2349, 2
      %v2441 = vrot.slane %v2349, 4
      %v2442 = vrot.slane %v2350, 2
      %v2443 = vrot.slane %v2350, 4
      %v2444 = vrot.slane %v2350, 6
      %v2445 = vrot.slane %v2351, 2
      %v2446 = vrot.slane %v2351, 4
      %v2447 = vrot.slane %v2352, 2
      %v2448 = vrot.slane %v2352, 4
      %v2449 = vrot.slane %v2352, 6
      %v2450 = vrot.slane %v2353, 2
      %v2451 = vrot.slane %v2353, 4
      %2452 = vst [vmem:[#allocation1] ss:$4 sm:$0xff] %v2326
      %s2453 = scalar_lea.vmem [#allocation1], 1
      %2454 = vst [vmem:[%s2453] ss:$4 sm:$0xff] %v2382
      %s2455 = scalar_lea.vmem [#allocation1], 2
      %2456 = vst [vmem:[%s2455] ss:$4 sm:$0xff] %v2383
      %s2457 = scalar_lea.vmem [#allocation1], 3
      %2458 = vst [vmem:[%s2457] ss:$4 sm:$0xff] %v2384
      %s2459 = scalar_lea.vmem [#allocation1], 32
      %2460 = vst [vmem:[%s2459] ss:$4 sm:$0xff] %v2327
      %s2461 = scalar_lea.vmem [#allocation1], 33
      %2462 = vst [vmem:[%s2461] ss:$4 sm:$0xff] %v2385
      %s2463 = scalar_lea.vmem [#allocation1], 34
      %2464 = vst [vmem:[%s2463] ss:$4 sm:$0xff] %v2386
      %s2465 = scalar_lea.vmem [#allocation1], 35
      %2466 = vst [vmem:[%s2465] ss:$4 sm:$0xff] %v2328
      %v2467 = vld.sshfl [vmem:[#allocation1] sm:$0xff pattern:$0x73625140]
      %v2468 = vld.sshfl [vmem:[#allocation1 + $0x20] sm:$0xff pattern:$0x73625140]
      %2469 = vst [vmem:[#allocation1] ss:$4 sm:$0xff] %v2387
      %2470 = vst [vmem:[%s2453] ss:$4 sm:$0xff] %v2388
      %2471 = vst [vmem:[%s2455] ss:$4 sm:$0xff] %v2389
      %2472 = vst [vmem:[%s2457] ss:$4 sm:$0xff] %v2329
      %2473 = vst [vmem:[%s2459] ss:$4 sm:$0xff] %v2390
      %2474 = vst [vmem:[%s2461] ss:$4 sm:$0xff] %v2391
      %2475 = vst [vmem:[%s2463] ss:$4 sm:$0xff] %v2330
      %2476 = vst [vmem:[%s2465] ss:$4 sm:$0xff] %v2392
      %v2477 = vld.sshfl [vmem:[#allocation1] sm:$0xff pattern:$0x73625140]
      %v2478 = vld.sshfl [vmem:[#allocation1 + $0x20] sm:$0xff pattern:$0x73625140]
      %2479 = vst [vmem:[#allocation1] ss:$4 sm:$0xff] %v2393
      %2480 = vst [vmem:[%s2453] ss:$4 sm:$0xff] %v2394
      %2481 = vst [vmem:[%s2455] ss:$4 sm:$0xff] %v2331
      %2482 = vst [vmem:[%s2457] ss:$4 sm:$0xff] %v2395
      %2483 = vst [vmem:[%s2459] ss:$4 sm:$0xff] %v2396
      %2484 = vst [vmem:[%s2461] ss:$4 sm:$0xff] %v2332
      %2485 = vst [vmem:[%s2463] ss:$4 sm:$0xff] %v2397
      %2486 = vst [vmem:[%s2465] ss:$4 sm:$0xff] %v2398
      %v2487 = vld.sshfl [vmem:[#allocation1] sm:$0xff pattern:$0x73625140]
      %v2488 = vld.sshfl [vmem:[#allocation1 + $0x20] sm:$0xff pattern:$0x73625140]
      %2489 = vst [vmem:[#allocation1] ss:$4 sm:$0xff] %v2399
      %2490 = vst [vmem:[%s2453] ss:$4 sm:$0xff] %v2333
      %2491 = vst [vmem:[%s2455] ss:$4 sm:$0xff] %v2400
      %2492 = vst [vmem:[%s2457] ss:$4 sm:$0xff] %v2401
      %2493 = vst [vmem:[%s2459] ss:$4 sm:$0xff] %v2334
      %2494 = vst [vmem:[%s2461] ss:$4 sm:$0xff] %v2402
      %2495 = vst [vmem:[%s2463] ss:$4 sm:$0xff] %v2403
      %2496 = vst [vmem:[%s2465] ss:$4 sm:$0xff] %v2404
      %v2497 = vld.sshfl [vmem:[#allocation1] sm:$0xff pattern:$0x73625140]
      %v2498 = vld.sshfl [vmem:[#allocation1 + $0x20] sm:$0xff pattern:$0x73625140]
      %2499 = vst [vmem:[#allocation1] ss:$4 sm:$0xff] %v2335
      %2500 = vst [vmem:[%s2453] ss:$4 sm:$0xff] %v2405
      %2501 = vst [vmem:[%s2455] ss:$4 sm:$0xff] %v2406
      %2502 = vst [vmem:[%s2457] ss:$4 sm:$0xff] %v2336
      %2503 = vst [vmem:[%s2459] ss:$4 sm:$0xff] %v2407
      %2504 = vst [vmem:[%s2461] ss:$4 sm:$0xff] %v2408
      %2505 = vst [vmem:[%s2463] ss:$4 sm:$0xff] %v2409
      %2506 = vst [vmem:[%s2465] ss:$4 sm:$0xff] %v2337
      %v2507 = vld.sshfl [vmem:[#allocation1] sm:$0xff pattern:$0x73625140]
      %v2508 = vld.sshfl [vmem:[#allocation1 + $0x20] sm:$0xff pattern:$0x73625140]
      %2509 = vst [vmem:[#allocation1] ss:$4 sm:$0xff] %v2410
      %2510 = vst [vmem:[%s2453] ss:$4 sm:$0xff] %v2411
      %2511 = vst [vmem:[%s2455] ss:$4 sm:$0xff] %v2338
      %2512 = vst [vmem:[%s2457] ss:$4 sm:$0xff] %v2412
      %2513 = vst [vmem:[%s2459] ss:$4 sm:$0xff] %v2413
      %2514 = vst [vmem:[%s2461] ss:$4 sm:$0xff] %v2414
      %2515 = vst [vmem:[%s2463] ss:$4 sm:$0xff] %v2339
      %2516 = vst [vmem:[%s2465] ss:$4 sm:$0xff] %v2415
      %v2517 = vld.sshfl [vmem:[#allocation1] sm:$0xff pattern:$0x73625140]
      %v2518 = vld.sshfl [vmem:[#allocation1 + $0x20] sm:$0xff pattern:$0x73625140]
      %2519 = vst [vmem:[#allocation1] ss:$4 sm:$0xff] %v2416
      %2520 = vst [vmem:[%s2453] ss:$4 sm:$0xff] %v2340
      %2521 = vst [vmem:[%s2455] ss:$4 sm:$0xff] %v2417
      %2522 = vst [vmem:[%s2457] ss:$4 sm:$0xff] %v2418
      %2523 = vst [vmem:[%s2459] ss:$4 sm:$0xff] %v2419
      %2524 = vst [vmem:[%s2461] ss:$4 sm:$0xff] %v2341
      %2525 = vst [vmem:[%s2463] ss:$4 sm:$0xff] %v2420
      %2526 = vst [vmem:[%s2465] ss:$4 sm:$0xff] %v2421
      %v2527 = vld.sshfl [vmem:[#allocation1] sm:$0xff pattern:$0x73625140]
      %v2528 = vld.sshfl [vmem:[#allocation1 + $0x20] sm:$0xff pattern:$0x73625140]
      %2529 = vst [vmem:[#allocation1] ss:$4 sm:$0xff] %v2342
      %2530 = vst [vmem:[%s2453] ss:$4 sm:$0xff] %v2422
      %2531 = vst [vmem:[%s2455] ss:$4 sm:$0xff] %v2423
      %2532 = vst [vmem:[%s2457] ss:$4 sm:$0xff] %v2424
      %2533 = vst [vmem:[%s2459] ss:$4 sm:$0xff] %v2343
      %2534 = vst [vmem:[%s2461] ss:$4 sm:$0xff] %v2425
      %2535 = vst [vmem:[%s2463] ss:$4 sm:$0xff] %v2426
      %2536 = vst [vmem:[%s2465] ss:$4 sm:$0xff] %v2344
      %v2537 = vld.sshfl [vmem:[#allocation1] sm:$0xff pattern:$0x73625140]
      %v2538 = vld.sshfl [vmem:[#allocation1 + $0x20] sm:$0xff pattern:$0x73625140]
      %2539 = vst [vmem:[#allocation1] ss:$4 sm:$0xff] %v2427
      %2540 = vst [vmem:[%s2453] ss:$4 sm:$0xff] %v2428
      %2541 = vst [vmem:[%s2455] ss:$4 sm:$0xff] %v2429
      %2542 = vst [vmem:[%s2457] ss:$4 sm:$0xff] %v2345
      %2543 = vst [vmem:[%s2459] ss:$4 sm:$0xff] %v2430
      %2544 = vst [vmem:[%s2461] ss:$4 sm:$0xff] %v2431
      %2545 = vst [vmem:[%s2463] ss:$4 sm:$0xff] %v2346
      %2546 = vst [vmem:[%s2465] ss:$4 sm:$0xff] %v2432
      %v2547 = vld.sshfl [vmem:[#allocation1] sm:$0xff pattern:$0x73625140]
      %v2548 = vld.sshfl [vmem:[#allocation1 + $0x20] sm:$0xff pattern:$0x73625140]
      %2549 = vst [vmem:[#allocation1] ss:$4 sm:$0xff] %v2433
      %2550 = vst [vmem:[%s2453] ss:$4 sm:$0xff] %v2434
      %2551 = vst [vmem:[%s2455] ss:$4 sm:$0xff] %v2347
      %2552 = vst [vmem:[%s2457] ss:$4 sm:$0xff] %v2435
      %2553 = vst [vmem:[%s2459] ss:$4 sm:$0xff] %v2436
      %2554 = vst [vmem:[%s2461] ss:$4 sm:$0xff] %v2348
      %2555 = vst [vmem:[%s2463] ss:$4 sm:$0xff] %v2437
      %2556 = vst [vmem:[%s2465] ss:$4 sm:$0xff] %v2438
      %v2557 = vld.sshfl [vmem:[#allocation1] sm:$0xff pattern:$0x73625140]
      %v2558 = vld.sshfl [vmem:[#allocation1 + $0x20] sm:$0xff pattern:$0x73625140]
      %2559 = vst [vmem:[#allocation1] ss:$4 sm:$0xff] %v2439
      %2560 = vst [vmem:[%s2453] ss:$4 sm:$0xff] %v2349
      %2561 = vst [vmem:[%s2455] ss:$4 sm:$0xff] %v2440
      %2562 = vst [vmem:[%s2457] ss:$4 sm:$0xff] %v2441
      %2563 = vst [vmem:[%s2459] ss:$4 sm:$0xff] %v2350
      %2564 = vst [vmem:[%s2461] ss:$4 sm:$0xff] %v2442
      %2565 = vst [vmem:[%s2463] ss:$4 sm:$0xff] %v2443
      %2566 = vst [vmem:[%s2465] ss:$4 sm:$0xff] %v2444
      %v2567 = vld.sshfl [vmem:[#allocation1] sm:$0xff pattern:$0x73625140]
      %v2568 = vld.sshfl [vmem:[#allocation1 + $0x20] sm:$0xff pattern:$0x73625140]
      %2569 = vst [vmem:[#allocation1] ss:$4 sm:$0xff] %v2351
      %2570 = vst [vmem:[%s2453] ss:$4 sm:$0xff] %v2445
      %2571 = vst [vmem:[%s2455] ss:$4 sm:$0xff] %v2446
      %2572 = vst [vmem:[%s2457] ss:$4 sm:$0xff] %v2352
      %2573 = vst [vmem:[%s2459] ss:$4 sm:$0xff] %v2447
      %2574 = vst [vmem:[%s2461] ss:$4 sm:$0xff] %v2448
      %2575 = vst [vmem:[%s2463] ss:$4 sm:$0xff] %v2449
      %2576 = vst [vmem:[%s2465] ss:$4 sm:$0xff] %v2353
      %v2577 = vld.sshfl [vmem:[#allocation1] sm:$0xff pattern:$0x73625140]
      %v2578 = vld.sshfl [vmem:[#allocation1 + $0x20] sm:$0xff pattern:$0x73625140]
      %2579 = vst [vmem:[#allocation1] ss:$4 sm:$0xff] %v2450
      %2580 = vst [vmem:[%s2453] ss:$4 sm:$0xff] %v2451
      %v2581 = vld.sshfl [vmem:[#allocation1] sm:$0xff pattern:$0x73625140]
      %2582 = vrot.lane.b32.xlu0 %v2467, 24
      %v2583 = vpop.permute.xlu0 %2582
      %2584 = vrot.lane.b32.xlu0 %v2468, 24
      %v2585 = vpop.permute.xlu0 %2584
      %2586 = vrot.lane.b32.xlu0 %v2477, 24
      %v2587 = vpop.permute.xlu0 %2586
      %2588 = vrot.lane.b32.xlu0 %v2478, 24
      %v2589 = vpop.permute.xlu0 %2588
      %2590 = vrot.lane.b32.xlu0 %v2487, 24
      %v2591 = vpop.permute.xlu0 %2590
      %2592 = vrot.lane.b32.xlu0 %v2488, 24
      %v2593 = vpop.permute.xlu0 %2592
      %2594 = vrot.lane.b32.xlu0 %v2497, 24
      %v2595 = vpop.permute.xlu0 %2594
      %2596 = vrot.lane.b32.xlu0 %v2498, 24
      %v2597 = vpop.permute.xlu0 %2596
      %2598 = vrot.lane.b32.xlu0 %v2507, 24
      %v2599 = vpop.permute.xlu0 %2598
      %2600 = vrot.lane.b32.xlu0 %v2508, 24
      %v2601 = vpop.permute.xlu0 %2600
      %2602 = vrot.lane.b32.xlu0 %v2517, 24
      %v2603 = vpop.permute.xlu0 %2602
      %2604 = vrot.lane.b32.xlu0 %v2518, 24
      %v2605 = vpop.permute.xlu0 %2604
      %2606 = vrot.lane.b32.xlu0 %v2527, 24
      %v2607 = vpop.permute.xlu0 %2606
      %2608 = vrot.lane.b32.xlu0 %v2528, 24
      %v2609 = vpop.permute.xlu0 %2608
      %2610 = vrot.lane.b32.xlu0 %v2537, 24
      %v2611 = vpop.permute.xlu0 %2610
      %2612 = vrot.lane.b32.xlu0 %v2538, 24
      %v2613 = vpop.permute.xlu0 %2612
      %2614 = vrot.lane.b32.xlu0 %v2547, 24
      %v2615 = vpop.permute.xlu0 %2614
      %2616 = vrot.lane.b32.xlu0 %v2548, 24
      %v2617 = vpop.permute.xlu0 %2616
      %2618 = vrot.lane.b32.xlu0 %v2557, 24
      %v2619 = vpop.permute.xlu0 %2618
      %2620 = vrot.lane.b32.xlu0 %v2558, 24
      %v2621 = vpop.permute.xlu0 %2620
      %2622 = vrot.lane.b32.xlu0 %v2567, 24
      %v2623 = vpop.permute.xlu0 %2622
      %2624 = vrot.lane.b32.xlu0 %v2568, 24
      %v2625 = vpop.permute.xlu0 %2624
      %2626 = vrot.lane.b32.xlu0 %v2577, 24
      %v2627 = vpop.permute.xlu0 %2626
      %2628 = vrot.lane.b32.xlu0 %v2578, 24
      %v2629 = vpop.permute.xlu0 %2628
      %2630 = vrot.lane.b32.xlu0 %v2581, 24
      %v2631 = vpop.permute.xlu0 %2630
      %vm2657 = vcmask 228544
      %2658 = vst.msk [vmem:[#allocation2] sm:$0xff] %vm2657, %v2583
      %2659 = vst.msk [vmem:[#allocation2 + $0x8] sm:$0xff] %vm2657, %v2585
      %2660 = vst.msk [vmem:[#allocation2 + $0x10] sm:$0xff] %vm2657, %v2587
      %2661 = vst.msk [vmem:[#allocation2 + $0x18] sm:$0xff] %vm2657, %v2589
      %2662 = vst.msk [vmem:[#allocation2 + $0x20] sm:$0xff] %vm2657, %v2591
      %2663 = vst.msk [vmem:[#allocation2 + $0x28] sm:$0xff] %vm2657, %v2593
      %2664 = vst.msk [vmem:[#allocation2 + $0x30] sm:$0xff] %vm2657, %v2595
      %2665 = vst.msk [vmem:[#allocation2 + $0x38] sm:$0xff] %vm2657, %v2597
      %2666 = vst.msk [vmem:[#allocation2 + $0x40] sm:$0xff] %vm2657, %v2599
      %2667 = vst.msk [vmem:[#allocation2 + $0x48] sm:$0xff] %vm2657, %v2601
      %2668 = vst.msk [vmem:[#allocation2 + $0x50] sm:$0xff] %vm2657, %v2603
      %2669 = vst.msk [vmem:[#allocation2 + $0x58] sm:$0xff] %vm2657, %v2605
      %2670 = vst.msk [vmem:[#allocation2 + $0x60] sm:$0xff] %vm2657, %v2607
      %2671 = vst.msk [vmem:[#allocation2 + $0x68] sm:$0xff] %vm2657, %v2609
      %2672 = vst.msk [vmem:[#allocation2 + $0x70] sm:$0xff] %vm2657, %v2611
      %2673 = vst.msk [vmem:[#allocation2 + $0x78] sm:$0xff] %vm2657, %v2613
      %2674 = vst.msk [vmem:[#allocation2 + $0x80] sm:$0xff] %vm2657, %v2615
      %2675 = vst.msk [vmem:[#allocation2 + $0x88] sm:$0xff] %vm2657, %v2617
      %2676 = vst.msk [vmem:[#allocation2 + $0x90] sm:$0xff] %vm2657, %v2619
      %2677 = vst.msk [vmem:[#allocation2 + $0x98] sm:$0xff] %vm2657, %v2621
      %2678 = vst.msk [vmem:[#allocation2 + $0xa0] sm:$0xff] %vm2657, %v2623
      %2679 = vst.msk [vmem:[#allocation2 + $0xa8] sm:$0xff] %vm2657, %v2625
      %2680 = vst.msk [vmem:[#allocation2 + $0xb0] sm:$0xff] %vm2657, %v2627
      %2681 = vst.msk [vmem:[#allocation2 + $0xb8] sm:$0xff] %vm2657, %v2629
      %vm2682 = vcmask 224448
      %2683 = vst.msk [vmem:[#allocation2 + $0xc0] sm:$0xf] %vm2682, %v2631
      %v2684 = vld [vmem:[%s2325 + $0x1] sm:$0xff]
      %v2685 = vld [vmem:[%s2325 + $0x9] sm:$0x3f]
      %v2686 = vld [vmem:[%s2325 + $0x11] sm:$0xff]
      %v2687 = vld [vmem:[%s2325 + $0x19] sm:$0x3f]
      %v2688 = vld [vmem:[%s2325 + $0x21] sm:$0xff]
      %v2689 = vld [vmem:[%s2325 + $0x29] sm:$0x3f]
      %v2690 = vld [vmem:[%s2325 + $0x31] sm:$0xff]
      %v2691 = vld [vmem:[%s2325 + $0x39] sm:$0x3f]
      %v2692 = vld [vmem:[%s2325 + $0x41] sm:$0xff]
      %v2693 = vld [vmem:[%s2325 + $0x49] sm:$0x3f]
      %v2694 = vld [vmem:[%s2325 + $0x51] sm:$0xff]
      %v2695 = vld [vmem:[%s2325 + $0x59] sm:$0x3f]
      %v2696 = vld [vmem:[%s2325 + $0x61] sm:$0xff]
      %v2697 = vld [vmem:[%s2325 + $0x69] sm:$0x3f]
      %v2698 = vld [vmem:[%s2325 + $0x71] sm:$0xff]
      %v2699 = vld [vmem:[%s2325 + $0x79] sm:$0x3f]
      %v2700 = vld [vmem:[%s2325 + $0x81] sm:$0xff]
      %v2701 = vld [vmem:[%s2325 + $0x89] sm:$0x3f]
      %v2702 = vld [vmem:[%s2325 + $0x91] sm:$0xff]
      %v2703 = vld [vmem:[%s2325 + $0x99] sm:$0x3f]
      %v2704 = vld [vmem:[%s2325 + $0xa1] sm:$0xff]
      %v2705 = vld [vmem:[%s2325 + $0xa9] sm:$0x3f]
      %v2706 = vld [vmem:[%s2325 + $0xb1] sm:$0xff]
      %v2707 = vld [vmem:[%s2325 + $0xb9] sm:$0x3f]
      %v2708 = vld [vmem:[%s2325 + $0xc1] sm:$0xff]
      %v2709 = vld [vmem:[%s2325 + $0xc9] sm:$0x3f]
      %v2710 = vld [vmem:[%s2325 + $0xd1] sm:$0xff]
      %v2711 = vld [vmem:[%s2325 + $0xd9] sm:$0x3f]
      %v2740 = vrot.slane %v2684, 2
      %v2741 = vrot.slane %v2684, 4
      %v2742 = vrot.slane %v2684, 6
      %v2743 = vrot.slane %v2685, 2
      %v2744 = vrot.slane %v2685, 4
      %v2745 = vrot.slane %v2686, 2
      %v2746 = vrot.slane %v2686, 4
      %v2747 = vrot.slane %v2686, 6
      %v2748 = vrot.slane %v2687, 2
      %v2749 = vrot.slane %v2687, 4
      %v2750 = vrot.slane %v2688, 2
      %v2751 = vrot.slane %v2688, 4
      %v2752 = vrot.slane %v2688, 6
      %v2753 = vrot.slane %v2689, 2
      %v2754 = vrot.slane %v2689, 4
      %v2755 = vrot.slane %v2690, 2
      %v2756 = vrot.slane %v2690, 4
      %v2757 = vrot.slane %v2690, 6
      %v2758 = vrot.slane %v2691, 2
      %v2759 = vrot.slane %v2691, 4
      %v2760 = vrot.slane %v2692, 2
      %v2761 = vrot.slane %v2692, 4
      %v2762 = vrot.slane %v2692, 6
      %v2763 = vrot.slane %v2693, 2
      %v2764 = vrot.slane %v2693, 4
      %v2765 = vrot.slane %v2694, 2
      %v2766 = vrot.slane %v2694, 4
      %v2767 = vrot.slane %v2694, 6
      %v2768 = vrot.slane %v2695, 2
      %v2769 = vrot.slane %v2695, 4
      %v2770 = vrot.slane %v2696, 2
      %v2771 = vrot.slane %v2696, 4
      %v2772 = vrot.slane %v2696, 6
      %v2773 = vrot.slane %v2697, 2
      %v2774 = vrot.slane %v2697, 4
      %v2775 = vrot.slane %v2698, 2
      %v2776 = vrot.slane %v2698, 4
      %v2777 = vrot.slane %v2698, 6
      %v2778 = vrot.slane %v2699, 2
      %v2779 = vrot.slane %v2699, 4
      %v2780 = vrot.slane %v2700, 2
      %v2781 = vrot.slane %v2700, 4
      %v2782 = vrot.slane %v2700, 6
      %v2783 = vrot.slane %v2701, 2
      %v2784 = vrot.slane %v2701, 4
      %v2785 = vrot.slane %v2702, 2
      %v2786 = vrot.slane %v2702, 4
      %v2787 = vrot.slane %v2702, 6
      %v2788 = vrot.slane %v2703, 2
      %v2789 = vrot.slane %v2703, 4
      %v2790 = vrot.slane %v2704, 2
      %v2791 = vrot.slane %v2704, 4
      %v2792 = vrot.slane %v2704, 6
      %v2793 = vrot.slane %v2705, 2
      %v2794 = vrot.slane %v2705, 4
      %v2795 = vrot.slane %v2706, 2
      %v2796 = vrot.slane %v2706, 4
      %v2797 = vrot.slane %v2706, 6
      %v2798 = vrot.slane %v2707, 2
      %v2799 = vrot.slane %v2707, 4
      %v2800 = vrot.slane %v2708, 2
      %v2801 = vrot.slane %v2708, 4
      %v2802 = vrot.slane %v2708, 6
      %v2803 = vrot.slane %v2709, 2
      %v2804 = vrot.slane %v2709, 4
      %v2805 = vrot.slane %v2710, 2
      %v2806 = vrot.slane %v2710, 4
      %v2807 = vrot.slane %v2710, 6
      %v2808 = vrot.slane %v2711, 2
      %v2809 = vrot.slane %v2711, 4
      %2810 = vst [vmem:[#allocation1] ss:$4 sm:$0xff] %v2684
      %s2811 = scalar_lea.vmem [#allocation1], 1
      %2812 = vst [vmem:[%s2811] ss:$4 sm:$0xff] %v2740
      %s2813 = scalar_lea.vmem [#allocation1], 2
      %2814 = vst [vmem:[%s2813] ss:$4 sm:$0xff] %v2741
      %s2815 = scalar_lea.vmem [#allocation1], 3
      %2816 = vst [vmem:[%s2815] ss:$4 sm:$0xff] %v2742
      %s2817 = scalar_lea.vmem [#allocation1], 32
      %2818 = vst [vmem:[%s2817] ss:$4 sm:$0xff] %v2685
      %s2819 = scalar_lea.vmem [#allocation1], 33
      %2820 = vst [vmem:[%s2819] ss:$4 sm:$0xff] %v2743
      %s2821 = scalar_lea.vmem [#allocation1], 34
      %2822 = vst [vmem:[%s2821] ss:$4 sm:$0xff] %v2744
      %s2823 = scalar_lea.vmem [#allocation1], 35
      %2824 = vst [vmem:[%s2823] ss:$4 sm:$0xff] %v2686
      %v2825 = vld.sshfl [vmem:[#allocation1] sm:$0xff pattern:$0x73625140]
      %v2826 = vld.sshfl [vmem:[#allocation1 + $0x20] sm:$0xff pattern:$0x73625140]
      %2827 = vst [vmem:[#allocation1] ss:$4 sm:$0xff] %v2745
      %2828 = vst [vmem:[%s2811] ss:$4 sm:$0xff] %v2746
      %2829 = vst [vmem:[%s2813] ss:$4 sm:$0xff] %v2747
      %2830 = vst [vmem:[%s2815] ss:$4 sm:$0xff] %v2687
      %2831 = vst [vmem:[%s2817] ss:$4 sm:$0xff] %v2748
      %2832 = vst [vmem:[%s2819] ss:$4 sm:$0xff] %v2749
      %2833 = vst [vmem:[%s2821] ss:$4 sm:$0xff] %v2688
      %2834 = vst [vmem:[%s2823] ss:$4 sm:$0xff] %v2750
      %v2835 = vld.sshfl [vmem:[#allocation1] sm:$0xff pattern:$0x73625140]
      %v2836 = vld.sshfl [vmem:[#allocation1 + $0x20] sm:$0xff pattern:$0x73625140]
      %2837 = vst [vmem:[#allocation1] ss:$4 sm:$0xff] %v2751
      %2838 = vst [vmem:[%s2811] ss:$4 sm:$0xff] %v2752
      %2839 = vst [vmem:[%s2813] ss:$4 sm:$0xff] %v2689
      %2840 = vst [vmem:[%s2815] ss:$4 sm:$0xff] %v2753
      %2841 = vst [vmem:[%s2817] ss:$4 sm:$0xff] %v2754
      %2842 = vst [vmem:[%s2819] ss:$4 sm:$0xff] %v2690
      %2843 = vst [vmem:[%s2821] ss:$4 sm:$0xff] %v2755
      %2844 = vst [vmem:[%s2823] ss:$4 sm:$0xff] %v2756
      %v2845 = vld.sshfl [vmem:[#allocation1] sm:$0xff pattern:$0x73625140]
      %v2846 = vld.sshfl [vmem:[#allocation1 + $0x20] sm:$0xff pattern:$0x73625140]
      %2847 = vst [vmem:[#allocation1] ss:$4 sm:$0xff] %v2757
      %2848 = vst [vmem:[%s2811] ss:$4 sm:$0xff] %v2691
      %2849 = vst [vmem:[%s2813] ss:$4 sm:$0xff] %v2758
      %2850 = vst [vmem:[%s2815] ss:$4 sm:$0xff] %v2759
      %2851 = vst [vmem:[%s2817] ss:$4 sm:$0xff] %v2692
      %2852 = vst [vmem:[%s2819] ss:$4 sm:$0xff] %v2760
      %2853 = vst [vmem:[%s2821] ss:$4 sm:$0xff] %v2761
      %2854 = vst [vmem:[%s2823] ss:$4 sm:$0xff] %v2762
      %v2855 = vld.sshfl [vmem:[#allocation1] sm:$0xff pattern:$0x73625140]
      %v2856 = vld.sshfl [vmem:[#allocation1 + $0x20] sm:$0xff pattern:$0x73625140]
      %2857 = vst [vmem:[#allocation1] ss:$4 sm:$0xff] %v2693
      %2858 = vst [vmem:[%s2811] ss:$4 sm:$0xff] %v2763
      %2859 = vst [vmem:[%s2813] ss:$4 sm:$0xff] %v2764
      %2860 = vst [vmem:[%s2815] ss:$4 sm:$0xff] %v2694
      %2861 = vst [vmem:[%s2817] ss:$4 sm:$0xff] %v2765
      %2862 = vst [vmem:[%s2819] ss:$4 sm:$0xff] %v2766
      %2863 = vst [vmem:[%s2821] ss:$4 sm:$0xff] %v2767
      %2864 = vst [vmem:[%s2823] ss:$4 sm:$0xff] %v2695
      %v2865 = vld.sshfl [vmem:[#allocation1] sm:$0xff pattern:$0x73625140]
      %v2866 = vld.sshfl [vmem:[#allocation1 + $0x20] sm:$0xff pattern:$0x73625140]
      %2867 = vst [vmem:[#allocation1] ss:$4 sm:$0xff] %v2768
      %2868 = vst [vmem:[%s2811] ss:$4 sm:$0xff] %v2769
      %2869 = vst [vmem:[%s2813] ss:$4 sm:$0xff] %v2696
      %2870 = vst [vmem:[%s2815] ss:$4 sm:$0xff] %v2770
      %2871 = vst [vmem:[%s2817] ss:$4 sm:$0xff] %v2771
      %2872 = vst [vmem:[%s2819] ss:$4 sm:$0xff] %v2772
      %2873 = vst [vmem:[%s2821] ss:$4 sm:$0xff] %v2697
      %2874 = vst [vmem:[%s2823] ss:$4 sm:$0xff] %v2773
      %v2875 = vld.sshfl [vmem:[#allocation1] sm:$0xff pattern:$0x73625140]
      %v2876 = vld.sshfl [vmem:[#allocation1 + $0x20] sm:$0xff pattern:$0x73625140]
      %2877 = vst [vmem:[#allocation1] ss:$4 sm:$0xff] %v2774
      %2878 = vst [vmem:[%s2811] ss:$4 sm:$0xff] %v2698
      %2879 = vst [vmem:[%s2813] ss:$4 sm:$0xff] %v2775
      %2880 = vst [vmem:[%s2815] ss:$4 sm:$0xff] %v2776
      %2881 = vst [vmem:[%s2817] ss:$4 sm:$0xff] %v2777
      %2882 = vst [vmem:[%s2819] ss:$4 sm:$0xff] %v2699
      %2883 = vst [vmem:[%s2821] ss:$4 sm:$0xff] %v2778
      %2884 = vst [vmem:[%s2823] ss:$4 sm:$0xff] %v2779
      %v2885 = vld.sshfl [vmem:[#allocation1] sm:$0xff pattern:$0x73625140]
      %v2886 = vld.sshfl [vmem:[#allocation1 + $0x20] sm:$0xff pattern:$0x73625140]
      %2887 = vst [vmem:[#allocation1] ss:$4 sm:$0xff] %v2700
      %2888 = vst [vmem:[%s2811] ss:$4 sm:$0xff] %v2780
      %2889 = vst [vmem:[%s2813] ss:$4 sm:$0xff] %v2781
      %2890 = vst [vmem:[%s2815] ss:$4 sm:$0xff] %v2782
      %2891 = vst [vmem:[%s2817] ss:$4 sm:$0xff] %v2701
      %2892 = vst [vmem:[%s2819] ss:$4 sm:$0xff] %v2783
      %2893 = vst [vmem:[%s2821] ss:$4 sm:$0xff] %v2784
      %2894 = vst [vmem:[%s2823] ss:$4 sm:$0xff] %v2702
      %v2895 = vld.sshfl [vmem:[#allocation1] sm:$0xff pattern:$0x73625140]
      %v2896 = vld.sshfl [vmem:[#allocation1 + $0x20] sm:$0xff pattern:$0x73625140]
      %2897 = vst [vmem:[#allocation1] ss:$4 sm:$0xff] %v2785
      %2898 = vst [vmem:[%s2811] ss:$4 sm:$0xff] %v2786
      %2899 = vst [vmem:[%s2813] ss:$4 sm:$0xff] %v2787
      %2900 = vst [vmem:[%s2815] ss:$4 sm:$0xff] %v2703
      %2901 = vst [vmem:[%s2817] ss:$4 sm:$0xff] %v2788
      %2902 = vst [vmem:[%s2819] ss:$4 sm:$0xff] %v2789
      %2903 = vst [vmem:[%s2821] ss:$4 sm:$0xff] %v2704
      %2904 = vst [vmem:[%s2823] ss:$4 sm:$0xff] %v2790
      %v2905 = vld.sshfl [vmem:[#allocation1] sm:$0xff pattern:$0x73625140]
      %v2906 = vld.sshfl [vmem:[#allocation1 + $0x20] sm:$0xff pattern:$0x73625140]
      %2907 = vst [vmem:[#allocation1] ss:$4 sm:$0xff] %v2791
      %2908 = vst [vmem:[%s2811] ss:$4 sm:$0xff] %v2792
      %2909 = vst [vmem:[%s2813] ss:$4 sm:$0xff] %v2705
      %2910 = vst [vmem:[%s2815] ss:$4 sm:$0xff] %v2793
      %2911 = vst [vmem:[%s2817] ss:$4 sm:$0xff] %v2794
      %2912 = vst [vmem:[%s2819] ss:$4 sm:$0xff] %v2706
      %2913 = vst [vmem:[%s2821] ss:$4 sm:$0xff] %v2795
      %2914 = vst [vmem:[%s2823] ss:$4 sm:$0xff] %v2796
      %v2915 = vld.sshfl [vmem:[#allocation1] sm:$0xff pattern:$0x73625140]
      %v2916 = vld.sshfl [vmem:[#allocation1 + $0x20] sm:$0xff pattern:$0x73625140]
      %2917 = vst [vmem:[#allocation1] ss:$4 sm:$0xff] %v2797
      %2918 = vst [vmem:[%s2811] ss:$4 sm:$0xff] %v2707
      %2919 = vst [vmem:[%s2813] ss:$4 sm:$0xff] %v2798
      %2920 = vst [vmem:[%s2815] ss:$4 sm:$0xff] %v2799
      %2921 = vst [vmem:[%s2817] ss:$4 sm:$0xff] %v2708
      %2922 = vst [vmem:[%s2819] ss:$4 sm:$0xff] %v2800
      %2923 = vst [vmem:[%s2821] ss:$4 sm:$0xff] %v2801
      %2924 = vst [vmem:[%s2823] ss:$4 sm:$0xff] %v2802
      %v2925 = vld.sshfl [vmem:[#allocation1] sm:$0xff pattern:$0x73625140]
      %v2926 = vld.sshfl [vmem:[#allocation1 + $0x20] sm:$0xff pattern:$0x73625140]
      %2927 = vst [vmem:[#allocation1] ss:$4 sm:$0xff] %v2709
      %2928 = vst [vmem:[%s2811] ss:$4 sm:$0xff] %v2803
      %2929 = vst [vmem:[%s2813] ss:$4 sm:$0xff] %v2804
      %2930 = vst [vmem:[%s2815] ss:$4 sm:$0xff] %v2710
      %2931 = vst [vmem:[%s2817] ss:$4 sm:$0xff] %v2805
      %2932 = vst [vmem:[%s2819] ss:$4 sm:$0xff] %v2806
      %2933 = vst [vmem:[%s2821] ss:$4 sm:$0xff] %v2807
      %2934 = vst [vmem:[%s2823] ss:$4 sm:$0xff] %v2711
      %v2935 = vld.sshfl [vmem:[#allocation1] sm:$0xff pattern:$0x73625140]
      %v2936 = vld.sshfl [vmem:[#allocation1 + $0x20] sm:$0xff pattern:$0x73625140]
      %2937 = vst [vmem:[#allocation1] ss:$4 sm:$0xff] %v2808
      %2938 = vst [vmem:[%s2811] ss:$4 sm:$0xff] %v2809
      %v2939 = vld.sshfl [vmem:[#allocation1] sm:$0xff pattern:$0x73625140]
      %2940 = vrot.lane.b32.xlu0 %v2825, 28
      %v2941 = vpop.permute.xlu0 %2940
      %2942 = vrot.lane.b32.xlu0 %v2826, 28
      %v2943 = vpop.permute.xlu0 %2942
      %2944 = vrot.lane.b32.xlu0 %v2835, 28
      %v2945 = vpop.permute.xlu0 %2944
      %2946 = vrot.lane.b32.xlu0 %v2836, 28
      %v2947 = vpop.permute.xlu0 %2946
      %2948 = vrot.lane.b32.xlu0 %v2845, 28
      %v2949 = vpop.permute.xlu0 %2948
      %2950 = vrot.lane.b32.xlu0 %v2846, 28
      %v2951 = vpop.permute.xlu0 %2950
      %2952 = vrot.lane.b32.xlu0 %v2855, 28
      %v2953 = vpop.permute.xlu0 %2952
      %2954 = vrot.lane.b32.xlu0 %v2856, 28
      %v2955 = vpop.permute.xlu0 %2954
      %2956 = vrot.lane.b32.xlu0 %v2865, 28
      %v2957 = vpop.permute.xlu0 %2956
      %2958 = vrot.lane.b32.xlu0 %v2866, 28
      %v2959 = vpop.permute.xlu0 %2958
      %2960 = vrot.lane.b32.xlu0 %v2875, 28
      %v2961 = vpop.permute.xlu0 %2960
      %2962 = vrot.lane.b32.xlu0 %v2876, 28
      %v2963 = vpop.permute.xlu0 %2962
      %2964 = vrot.lane.b32.xlu0 %v2885, 28
      %v2965 = vpop.permute.xlu0 %2964
      %2966 = vrot.lane.b32.xlu0 %v2886, 28
      %v2967 = vpop.permute.xlu0 %2966
      %2968 = vrot.lane.b32.xlu0 %v2895, 28
      %v2969 = vpop.permute.xlu0 %2968
      %2970 = vrot.lane.b32.xlu0 %v2896, 28
      %v2971 = vpop.permute.xlu0 %2970
      %2972 = vrot.lane.b32.xlu0 %v2905, 28
      %v2973 = vpop.permute.xlu0 %2972
      %2974 = vrot.lane.b32.xlu0 %v2906, 28
      %v2975 = vpop.permute.xlu0 %2974
      %2976 = vrot.lane.b32.xlu0 %v2915, 28
      %v2977 = vpop.permute.xlu0 %2976
      %2978 = vrot.lane.b32.xlu0 %v2916, 28
      %v2979 = vpop.permute.xlu0 %2978
      %2980 = vrot.lane.b32.xlu0 %v2925, 28
      %v2981 = vpop.permute.xlu0 %2980
      %2982 = vrot.lane.b32.xlu0 %v2926, 28
      %v2983 = vpop.permute.xlu0 %2982
      %2984 = vrot.lane.b32.xlu0 %v2935, 28
      %v2985 = vpop.permute.xlu0 %2984
      %2986 = vrot.lane.b32.xlu0 %v2936, 28
      %v2987 = vpop.permute.xlu0 %2986
      %2988 = vrot.lane.b32.xlu0 %v2939, 28
      %v2989 = vpop.permute.xlu0 %2988
      %vm3015 = vcmask 261344
      %3016 = vst.msk [vmem:[#allocation2] sm:$0xff] %vm3015, %v2941
      %3017 = vst.msk [vmem:[#allocation2 + $0x8] sm:$0xff] %vm3015, %v2943
      %3018 = vst.msk [vmem:[#allocation2 + $0x10] sm:$0xff] %vm3015, %v2945
      %3019 = vst.msk [vmem:[#allocation2 + $0x18] sm:$0xff] %vm3015, %v2947
      %3020 = vst.msk [vmem:[#allocation2 + $0x20] sm:$0xff] %vm3015, %v2949
      %3021 = vst.msk [vmem:[#allocation2 + $0x28] sm:$0xff] %vm3015, %v2951
      %3022 = vst.msk [vmem:[#allocation2 + $0x30] sm:$0xff] %vm3015, %v2953
      %3023 = vst.msk [vmem:[#allocation2 + $0x38] sm:$0xff] %vm3015, %v2955
      %3024 = vst.msk [vmem:[#allocation2 + $0x40] sm:$0xff] %vm3015, %v2957
      %3025 = vst.msk [vmem:[#allocation2 + $0x48] sm:$0xff] %vm3015, %v2959
      %3026 = vst.msk [vmem:[#allocation2 + $0x50] sm:$0xff] %vm3015, %v2961
      %3027 = vst.msk [vmem:[#allocation2 + $0x58] sm:$0xff] %vm3015, %v2963
      %3028 = vst.msk [vmem:[#allocation2 + $0x60] sm:$0xff] %vm3015, %v2965
      %3029 = vst.msk [vmem:[#allocation2 + $0x68] sm:$0xff] %vm3015, %v2967
      %3030 = vst.msk [vmem:[#allocation2 + $0x70] sm:$0xff] %vm3015, %v2969
      %3031 = vst.msk [vmem:[#allocation2 + $0x78] sm:$0xff] %vm3015, %v2971
      %3032 = vst.msk [vmem:[#allocation2 + $0x80] sm:$0xff] %vm3015, %v2973
      %3033 = vst.msk [vmem:[#allocation2 + $0x88] sm:$0xff] %vm3015, %v2975
      %3034 = vst.msk [vmem:[#allocation2 + $0x90] sm:$0xff] %vm3015, %v2977
      %3035 = vst.msk [vmem:[#allocation2 + $0x98] sm:$0xff] %vm3015, %v2979
      %3036 = vst.msk [vmem:[#allocation2 + $0xa0] sm:$0xff] %vm3015, %v2981
      %3037 = vst.msk [vmem:[#allocation2 + $0xa8] sm:$0xff] %vm3015, %v2983
      %3038 = vst.msk [vmem:[#allocation2 + $0xb0] sm:$0xff] %vm3015, %v2985
      %3039 = vst.msk [vmem:[#allocation2 + $0xb8] sm:$0xff] %vm3015, %v2987
      %vm3040 = vcmask 257248
      %3041 = vst.msk [vmem:[#allocation2 + $0xc0] sm:$0xf] %vm3040, %v2989
      %v3042 = vld [vmem:[%s2325 + $0x2] sm:$0xff]
      %v3043 = vld [vmem:[%s2325 + $0xa] sm:$0x3f]
      %v3044 = vld [vmem:[%s2325 + $0x12] sm:$0xff]
      %v3045 = vld [vmem:[%s2325 + $0x1a] sm:$0x3f]
      %v3046 = vld [vmem:[%s2325 + $0x22] sm:$0xff]
      %v3047 = vld [vmem:[%s2325 + $0x2a] sm:$0x3f]
      %v3048 = vld [vmem:[%s2325 + $0x32] sm:$0xff]
      %v3049 = vld [vmem:[%s2325 + $0x3a] sm:$0x3f]
      %v3050 = vld [vmem:[%s2325 + $0x42] sm:$0xff]
      %v3051 = vld [vmem:[%s2325 + $0x4a] sm:$0x3f]
      %v3052 = vld [vmem:[%s2325 + $0x52] sm:$0xff]
      %v3053 = vld [vmem:[%s2325 + $0x5a] sm:$0x3f]
      %v3054 = vld [vmem:[%s2325 + $0x62] sm:$0xff]
      %v3055 = vld [vmem:[%s2325 + $0x6a] sm:$0x3f]
      %v3056 = vld [vmem:[%s2325 + $0x72] sm:$0xff]
      %v3057 = vld [vmem:[%s2325 + $0x7a] sm:$0x3f]
      %v3058 = vld [vmem:[%s2325 + $0x82] sm:$0xff]
      %v3059 = vld [vmem:[%s2325 + $0x8a] sm:$0x3f]
      %v3060 = vld [vmem:[%s2325 + $0x92] sm:$0xff]
      %v3061 = vld [vmem:[%s2325 + $0x9a] sm:$0x3f]
      %v3062 = vld [vmem:[%s2325 + $0xa2] sm:$0xff]
      %v3063 = vld [vmem:[%s2325 + $0xaa] sm:$0x3f]
      %v3064 = vld [vmem:[%s2325 + $0xb2] sm:$0xff]
      %v3065 = vld [vmem:[%s2325 + $0xba] sm:$0x3f]
      %v3066 = vld [vmem:[%s2325 + $0xc2] sm:$0xff]
      %v3067 = vld [vmem:[%s2325 + $0xca] sm:$0x3f]
      %v3068 = vld [vmem:[%s2325 + $0xd2] sm:$0xff]
      %v3069 = vld [vmem:[%s2325 + $0xda] sm:$0x3f]
      %v3098 = vrot.slane %v3042, 2
      %v3099 = vrot.slane %v3042, 4
      %v3100 = vrot.slane %v3042, 6
      %v3101 = vrot.slane %v3043, 2
      %v3102 = vrot.slane %v3043, 4
      %v3103 = vrot.slane %v3044, 2
      %v3104 = vrot.slane %v3044, 4
      %v3105 = vrot.slane %v3044, 6
      %v3106 = vrot.slane %v3045, 2
      %v3107 = vrot.slane %v3045, 4
      %v3108 = vrot.slane %v3046, 2
      %v3109 = vrot.slane %v3046, 4
      %v3110 = vrot.slane %v3046, 6
      %v3111 = vrot.slane %v3047, 2
      %v3112 = vrot.slane %v3047, 4
      %v3113 = vrot.slane %v3048, 2
      %v3114 = vrot.slane %v3048, 4
      %v3115 = vrot.slane %v3048, 6
      %v3116 = vrot.slane %v3049, 2
      %v3117 = vrot.slane %v3049, 4
      %v3118 = vrot.slane %v3050, 2
      %v3119 = vrot.slane %v3050, 4
      %v3120 = vrot.slane %v3050, 6
      %v3121 = vrot.slane %v3051, 2
      %v3122 = vrot.slane %v3051, 4
      %v3123 = vrot.slane %v3052, 2
      %v3124 = vrot.slane %v3052, 4
      %v3125 = vrot.slane %v3052, 6
      %v3126 = vrot.slane %v3053, 2
      %v3127 = vrot.slane %v3053, 4
      %v3128 = vrot.slane %v3054, 2
      %v3129 = vrot.slane %v3054, 4
      %v3130 = vrot.slane %v3054, 6
      %v3131 = vrot.slane %v3055, 2
      %v3132 = vrot.slane %v3055, 4
      %v3133 = vrot.slane %v3056, 2
      %v3134 = vrot.slane %v3056, 4
      %v3135 = vrot.slane %v3056, 6
      %v3136 = vrot.slane %v3057, 2
      %v3137 = vrot.slane %v3057, 4
      %v3138 = vrot.slane %v3058, 2
      %v3139 = vrot.slane %v3058, 4
      %v3140 = vrot.slane %v3058, 6
      %v3141 = vrot.slane %v3059, 2
      %v3142 = vrot.slane %v3059, 4
      %v3143 = vrot.slane %v3060, 2
      %v3144 = vrot.slane %v3060, 4
      %v3145 = vrot.slane %v3060, 6
      %v3146 = vrot.slane %v3061, 2
      %v3147 = vrot.slane %v3061, 4
      %v3148 = vrot.slane %v3062, 2
      %v3149 = vrot.slane %v3062, 4
      %v3150 = vrot.slane %v3062, 6
      %v3151 = vrot.slane %v3063, 2
      %v3152 = vrot.slane %v3063, 4
      %v3153 = vrot.slane %v3064, 2
      %v3154 = vrot.slane %v3064, 4
      %v3155 = vrot.slane %v3064, 6
      %v3156 = vrot.slane %v3065, 2
      %v3157 = vrot.slane %v3065, 4
      %v3158 = vrot.slane %v3066, 2
      %v3159 = vrot.slane %v3066, 4
      %v3160 = vrot.slane %v3066, 6
      %v3161 = vrot.slane %v3067, 2
      %v3162 = vrot.slane %v3067, 4
      %v3163 = vrot.slane %v3068, 2
      %v3164 = vrot.slane %v3068, 4
      %v3165 = vrot.slane %v3068, 6
      %v3166 = vrot.slane %v3069, 2
      %v3167 = vrot.slane %v3069, 4
      %3168 = vst [vmem:[#allocation1] ss:$4 sm:$0xff] %v3042
      %s3169 = scalar_lea.vmem [#allocation1], 1
      %3170 = vst [vmem:[%s3169] ss:$4 sm:$0xff] %v3098
      %s3171 = scalar_lea.vmem [#allocation1], 2
      %3172 = vst [vmem:[%s3171] ss:$4 sm:$0xff] %v3099
      %s3173 = scalar_lea.vmem [#allocation1], 3
      %3174 = vst [vmem:[%s3173] ss:$4 sm:$0xff] %v3100
      %s3175 = scalar_lea.vmem [#allocation1], 32
      %3176 = vst [vmem:[%s3175] ss:$4 sm:$0xff] %v3043
      %s3177 = scalar_lea.vmem [#allocation1], 33
      %3178 = vst [vmem:[%s3177] ss:$4 sm:$0xff] %v3101
      %s3179 = scalar_lea.vmem [#allocation1], 34
      %3180 = vst [vmem:[%s3179] ss:$4 sm:$0xff] %v3102
      %s3181 = scalar_lea.vmem [#allocation1], 35
      %3182 = vst [vmem:[%s3181] ss:$4 sm:$0xff] %v3044
      %v3183 = vld.sshfl [vmem:[#allocation1] sm:$0xff pattern:$0x73625140]
      %v3184 = vld.sshfl [vmem:[#allocation1 + $0x20] sm:$0xff pattern:$0x73625140]
      %3185 = vst [vmem:[#allocation1] ss:$4 sm:$0xff] %v3103
      %3186 = vst [vmem:[%s3169] ss:$4 sm:$0xff] %v3104
      %3187 = vst [vmem:[%s3171] ss:$4 sm:$0xff] %v3105
      %3188 = vst [vmem:[%s3173] ss:$4 sm:$0xff] %v3045
      %3189 = vst [vmem:[%s3175] ss:$4 sm:$0xff] %v3106
      %3190 = vst [vmem:[%s3177] ss:$4 sm:$0xff] %v3107
      %3191 = vst [vmem:[%s3179] ss:$4 sm:$0xff] %v3046
      %3192 = vst [vmem:[%s3181] ss:$4 sm:$0xff] %v3108
      %v3193 = vld.sshfl [vmem:[#allocation1] sm:$0xff pattern:$0x73625140]
      %v3194 = vld.sshfl [vmem:[#allocation1 + $0x20] sm:$0xff pattern:$0x73625140]
      %3195 = vst [vmem:[#allocation1] ss:$4 sm:$0xff] %v3109
      %3196 = vst [vmem:[%s3169] ss:$4 sm:$0xff] %v3110
      %3197 = vst [vmem:[%s3171] ss:$4 sm:$0xff] %v3047
      %3198 = vst [vmem:[%s3173] ss:$4 sm:$0xff] %v3111
      %3199 = vst [vmem:[%s3175] ss:$4 sm:$0xff] %v3112
      %3200 = vst [vmem:[%s3177] ss:$4 sm:$0xff] %v3048
      %3201 = vst [vmem:[%s3179] ss:$4 sm:$0xff] %v3113
      %3202 = vst [vmem:[%s3181] ss:$4 sm:$0xff] %v3114
      %v3203 = vld.sshfl [vmem:[#allocation1] sm:$0xff pattern:$0x73625140]
      %v3204 = vld.sshfl [vmem:[#allocation1 + $0x20] sm:$0xff pattern:$0x73625140]
      %3205 = vst [vmem:[#allocation1] ss:$4 sm:$0xff] %v3115
      %3206 = vst [vmem:[%s3169] ss:$4 sm:$0xff] %v3049
      %3207 = vst [vmem:[%s3171] ss:$4 sm:$0xff] %v3116
      %3208 = vst [vmem:[%s3173] ss:$4 sm:$0xff] %v3117
      %3209 = vst [vmem:[%s3175] ss:$4 sm:$0xff] %v3050
      %3210 = vst [vmem:[%s3177] ss:$4 sm:$0xff] %v3118
      %3211 = vst [vmem:[%s3179] ss:$4 sm:$0xff] %v3119
      %3212 = vst [vmem:[%s3181] ss:$4 sm:$0xff] %v3120
      %v3213 = vld.sshfl [vmem:[#allocation1] sm:$0xff pattern:$0x73625140]
      %v3214 = vld.sshfl [vmem:[#allocation1 + $0x20] sm:$0xff pattern:$0x73625140]
      %3215 = vst [vmem:[#allocation1] ss:$4 sm:$0xff] %v3051
      %3216 = vst [vmem:[%s3169] ss:$4 sm:$0xff] %v3121
      %3217 = vst [vmem:[%s3171] ss:$4 sm:$0xff] %v3122
      %3218 = vst [vmem:[%s3173] ss:$4 sm:$0xff] %v3052
      %3219 = vst [vmem:[%s3175] ss:$4 sm:$0xff] %v3123
      %3220 = vst [vmem:[%s3177] ss:$4 sm:$0xff] %v3124
      %3221 = vst [vmem:[%s3179] ss:$4 sm:$0xff] %v3125
      %3222 = vst [vmem:[%s3181] ss:$4 sm:$0xff] %v3053
      %v3223 = vld.sshfl [vmem:[#allocation1] sm:$0xff pattern:$0x73625140]
      %v3224 = vld.sshfl [vmem:[#allocation1 + $0x20] sm:$0xff pattern:$0x73625140]
      %3225 = vst [vmem:[#allocation1] ss:$4 sm:$0xff] %v3126
      %3226 = vst [vmem:[%s3169] ss:$4 sm:$0xff] %v3127
      %3227 = vst [vmem:[%s3171] ss:$4 sm:$0xff] %v3054
      %3228 = vst [vmem:[%s3173] ss:$4 sm:$0xff] %v3128
      %3229 = vst [vmem:[%s3175] ss:$4 sm:$0xff] %v3129
      %3230 = vst [vmem:[%s3177] ss:$4 sm:$0xff] %v3130
      %3231 = vst [vmem:[%s3179] ss:$4 sm:$0xff] %v3055
      %3232 = vst [vmem:[%s3181] ss:$4 sm:$0xff] %v3131
      %v3233 = vld.sshfl [vmem:[#allocation1] sm:$0xff pattern:$0x73625140]
      %v3234 = vld.sshfl [vmem:[#allocation1 + $0x20] sm:$0xff pattern:$0x73625140]
      %3235 = vst [vmem:[#allocation1] ss:$4 sm:$0xff] %v3132
      %3236 = vst [vmem:[%s3169] ss:$4 sm:$0xff] %v3056
      %3237 = vst [vmem:[%s3171] ss:$4 sm:$0xff] %v3133
      %3238 = vst [vmem:[%s3173] ss:$4 sm:$0xff] %v3134
      %3239 = vst [vmem:[%s3175] ss:$4 sm:$0xff] %v3135
      %3240 = vst [vmem:[%s3177] ss:$4 sm:$0xff] %v3057
      %3241 = vst [vmem:[%s3179] ss:$4 sm:$0xff] %v3136
      %3242 = vst [vmem:[%s3181] ss:$4 sm:$0xff] %v3137
      %v3243 = vld.sshfl [vmem:[#allocation1] sm:$0xff pattern:$0x73625140]
      %v3244 = vld.sshfl [vmem:[#allocation1 + $0x20] sm:$0xff pattern:$0x73625140]
      %3245 = vst [vmem:[#allocation1] ss:$4 sm:$0xff] %v3058
      %3246 = vst [vmem:[%s3169] ss:$4 sm:$0xff] %v3138
      %3247 = vst [vmem:[%s3171] ss:$4 sm:$0xff] %v3139
      %3248 = vst [vmem:[%s3173] ss:$4 sm:$0xff] %v3140
      %3249 = vst [vmem:[%s3175] ss:$4 sm:$0xff] %v3059
      %3250 = vst [vmem:[%s3177] ss:$4 sm:$0xff] %v3141
      %3251 = vst [vmem:[%s3179] ss:$4 sm:$0xff] %v3142
      %3252 = vst [vmem:[%s3181] ss:$4 sm:$0xff] %v3060
      %v3253 = vld.sshfl [vmem:[#allocation1] sm:$0xff pattern:$0x73625140]
      %v3254 = vld.sshfl [vmem:[#allocation1 + $0x20] sm:$0xff pattern:$0x73625140]
      %3255 = vst [vmem:[#allocation1] ss:$4 sm:$0xff] %v3143
      %3256 = vst [vmem:[%s3169] ss:$4 sm:$0xff] %v3144
      %3257 = vst [vmem:[%s3171] ss:$4 sm:$0xff] %v3145
      %3258 = vst [vmem:[%s3173] ss:$4 sm:$0xff] %v3061
      %3259 = vst [vmem:[%s3175] ss:$4 sm:$0xff] %v3146
      %3260 = vst [vmem:[%s3177] ss:$4 sm:$0xff] %v3147
      %3261 = vst [vmem:[%s3179] ss:$4 sm:$0xff] %v3062
      %3262 = vst [vmem:[%s3181] ss:$4 sm:$0xff] %v3148
      %v3263 = vld.sshfl [vmem:[#allocation1] sm:$0xff pattern:$0x73625140]
      %v3264 = vld.sshfl [vmem:[#allocation1 + $0x20] sm:$0xff pattern:$0x73625140]
      %3265 = vst [vmem:[#allocation1] ss:$4 sm:$0xff] %v3149
      %3266 = vst [vmem:[%s3169] ss:$4 sm:$0xff] %v3150
      %3267 = vst [vmem:[%s3171] ss:$4 sm:$0xff] %v3063
      %3268 = vst [vmem:[%s3173] ss:$4 sm:$0xff] %v3151
      %3269 = vst [vmem:[%s3175] ss:$4 sm:$0xff] %v3152
      %3270 = vst [vmem:[%s3177] ss:$4 sm:$0xff] %v3064
      %3271 = vst [vmem:[%s3179] ss:$4 sm:$0xff] %v3153
      %3272 = vst [vmem:[%s3181] ss:$4 sm:$0xff] %v3154
      %v3273 = vld.sshfl [vmem:[#allocation1] sm:$0xff pattern:$0x73625140]
      %v3274 = vld.sshfl [vmem:[#allocation1 + $0x20] sm:$0xff pattern:$0x73625140]
      %3275 = vst [vmem:[#allocation1] ss:$4 sm:$0xff] %v3155
      %3276 = vst [vmem:[%s3169] ss:$4 sm:$0xff] %v3065
      %3277 = vst [vmem:[%s3171] ss:$4 sm:$0xff] %v3156
      %3278 = vst [vmem:[%s3173] ss:$4 sm:$0xff] %v3157
      %3279 = vst [vmem:[%s3175] ss:$4 sm:$0xff] %v3066
      %3280 = vst [vmem:[%s3177] ss:$4 sm:$0xff] %v3158
      %3281 = vst [vmem:[%s3179] ss:$4 sm:$0xff] %v3159
      %3282 = vst [vmem:[%s3181] ss:$4 sm:$0xff] %v3160
      %v3283 = vld.sshfl [vmem:[#allocation1] sm:$0xff pattern:$0x73625140]
      %v3284 = vld.sshfl [vmem:[#allocation1 + $0x20] sm:$0xff pattern:$0x73625140]
      %3285 = vst [vmem:[#allocation1] ss:$4 sm:$0xff] %v3067
      %3286 = vst [vmem:[%s3169] ss:$4 sm:$0xff] %v3161
      %3287 = vst [vmem:[%s3171] ss:$4 sm:$0xff] %v3162
      %3288 = vst [vmem:[%s3173] ss:$4 sm:$0xff] %v3068
      %3289 = vst [vmem:[%s3175] ss:$4 sm:$0xff] %v3163
      %3290 = vst [vmem:[%s3177] ss:$4 sm:$0xff] %v3164
      %3291 = vst [vmem:[%s3179] ss:$4 sm:$0xff] %v3165
      %3292 = vst [vmem:[%s3181] ss:$4 sm:$0xff] %v3069
      %v3293 = vld.sshfl [vmem:[#allocation1] sm:$0xff pattern:$0x73625140]
      %v3294 = vld.sshfl [vmem:[#allocation1 + $0x20] sm:$0xff pattern:$0x73625140]
      %3295 = vst [vmem:[#allocation1] ss:$4 sm:$0xff] %v3166
      %3296 = vst [vmem:[%s3169] ss:$4 sm:$0xff] %v3167
      %v3297 = vld.sshfl [vmem:[#allocation1] sm:$0xff pattern:$0x73625140]
      %3298 = vrot.lane.b32.xlu0 %v3183, 32
      %v3299 = vpop.permute.xlu0 %3298
      %3300 = vrot.lane.b32.xlu0 %v3184, 32
      %v3301 = vpop.permute.xlu0 %3300
      %3302 = vrot.lane.b32.xlu0 %v3193, 32
      %v3303 = vpop.permute.xlu0 %3302
      %3304 = vrot.lane.b32.xlu0 %v3194, 32
      %v3305 = vpop.permute.xlu0 %3304
      %3306 = vrot.lane.b32.xlu0 %v3203, 32
      %v3307 = vpop.permute.xlu0 %3306
      %3308 = vrot.lane.b32.xlu0 %v3204, 32
      %v3309 = vpop.permute.xlu0 %3308
      %3310 = vrot.lane.b32.xlu0 %v3213, 32
      %v3311 = vpop.permute.xlu0 %3310
      %3312 = vrot.lane.b32.xlu0 %v3214, 32
      %v3313 = vpop.permute.xlu0 %3312
      %3314 = vrot.lane.b32.xlu0 %v3223, 32
      %v3315 = vpop.permute.xlu0 %3314
      %3316 = vrot.lane.b32.xlu0 %v3224, 32
      %v3317 = vpop.permute.xlu0 %3316
      %3318 = vrot.lane.b32.xlu0 %v3233, 32
      %v3319 = vpop.permute.xlu0 %3318
      %3320 = vrot.lane.b32.xlu0 %v3234, 32
      %v3321 = vpop.permute.xlu0 %3320
      %3322 = vrot.lane.b32.xlu0 %v3243, 32
      %v3323 = vpop.permute.xlu0 %3322
      %3324 = vrot.lane.b32.xlu0 %v3244, 32
      %v3325 = vpop.permute.xlu0 %3324
      %3326 = vrot.lane.b32.xlu0 %v3253, 32
      %v3327 = vpop.permute.xlu0 %3326
      %3328 = vrot.lane.b32.xlu0 %v3254, 32
      %v3329 = vpop.permute.xlu0 %3328
      %3330 = vrot.lane.b32.xlu0 %v3263, 32
      %v3331 = vpop.permute.xlu0 %3330
      %3332 = vrot.lane.b32.xlu0 %v3264, 32
      %v3333 = vpop.permute.xlu0 %3332
      %3334 = vrot.lane.b32.xlu0 %v3273, 32
      %v3335 = vpop.permute.xlu0 %3334
      %3336 = vrot.lane.b32.xlu0 %v3274, 32
      %v3337 = vpop.permute.xlu0 %3336
      %3338 = vrot.lane.b32.xlu0 %v3283, 32
      %v3339 = vpop.permute.xlu0 %3338
      %3340 = vrot.lane.b32.xlu0 %v3284, 32
      %v3341 = vpop.permute.xlu0 %3340
      %3342 = vrot.lane.b32.xlu0 %v3293, 32
      %v3343 = vpop.permute.xlu0 %3342
      %3344 = vrot.lane.b32.xlu0 %v3294, 32
      %v3345 = vpop.permute.xlu0 %3344
      %3346 = vrot.lane.b32.xlu0 %v3297, 32
      %v3347 = vpop.permute.xlu0 %3346
      %vm3373 = vcmask 294144
      %3374 = vst.msk [vmem:[#allocation2] sm:$0xff] %vm3373, %v3299
      %3375 = vst.msk [vmem:[#allocation2 + $0x8] sm:$0xff] %vm3373, %v3301
      %3376 = vst.msk [vmem:[#allocation2 + $0x10] sm:$0xff] %vm3373, %v3303
      %3377 = vst.msk [vmem:[#allocation2 + $0x18] sm:$0xff] %vm3373, %v3305
      %3378 = vst.msk [vmem:[#allocation2 + $0x20] sm:$0xff] %vm3373, %v3307
      %3379 = vst.msk [vmem:[#allocation2 + $0x28] sm:$0xff] %vm3373, %v3309
      %3380 = vst.msk [vmem:[#allocation2 + $0x30] sm:$0xff] %vm3373, %v3311
      %3381 = vst.msk [vmem:[#allocation2 + $0x38] sm:$0xff] %vm3373, %v3313
      %3382 = vst.msk [vmem:[#allocation2 + $0x40] sm:$0xff] %vm3373, %v3315
      %3383 = vst.msk [vmem:[#allocation2 + $0x48] sm:$0xff] %vm3373, %v3317
      %3384 = vst.msk [vmem:[#allocation2 + $0x50] sm:$0xff] %vm3373, %v3319
      %3385 = vst.msk [vmem:[#allocation2 + $0x58] sm:$0xff] %vm3373, %v3321
      %3386 = vst.msk [vmem:[#allocation2 + $0x60] sm:$0xff] %vm3373, %v3323
      %3387 = vst.msk [vmem:[#allocation2 + $0x68] sm:$0xff] %vm3373, %v3325
      %3388 = vst.msk [vmem:[#allocation2 + $0x70] sm:$0xff] %vm3373, %v3327
      %3389 = vst.msk [vmem:[#allocation2 + $0x78] sm:$0xff] %vm3373, %v3329
      %3390 = vst.msk [vmem:[#allocation2 + $0x80] sm:$0xff] %vm3373, %v3331
      %3391 = vst.msk [vmem:[#allocation2 + $0x88] sm:$0xff] %vm3373, %v3333
      %3392 = vst.msk [vmem:[#allocation2 + $0x90] sm:$0xff] %vm3373, %v3335
      %3393 = vst.msk [vmem:[#allocation2 + $0x98] sm:$0xff] %vm3373, %v3337
      %3394 = vst.msk [vmem:[#allocation2 + $0xa0] sm:$0xff] %vm3373, %v3339
      %3395 = vst.msk [vmem:[#allocation2 + $0xa8] sm:$0xff] %vm3373, %v3341
      %3396 = vst.msk [vmem:[#allocation2 + $0xb0] sm:$0xff] %vm3373, %v3343
      %3397 = vst.msk [vmem:[#allocation2 + $0xb8] sm:$0xff] %vm3373, %v3345
      %vm3398 = vcmask 290048
      %3399 = vst.msk [vmem:[#allocation2 + $0xc0] sm:$0xf] %vm3398, %v3347
      %v3400 = vld [vmem:[#allocation2] sm:$0xff]
      %v3401 = vld [vmem:[#allocation2 + $0x8] sm:$0xff]
      %v3402 = vld [vmem:[#allocation2 + $0x10] sm:$0xff]
      %v3403 = vld [vmem:[#allocation2 + $0x18] sm:$0xff]
      %v3404 = vld [vmem:[#allocation2 + $0x20] sm:$0xff]
      %v3405 = vld [vmem:[#allocation2 + $0x28] sm:$0xff]
      %v3406 = vld [vmem:[#allocation2 + $0x30] sm:$0xff]
      %v3407 = vld [vmem:[#allocation2 + $0x38] sm:$0xff]
      %v3408 = vld [vmem:[#allocation2 + $0x40] sm:$0xff]
      %v3409 = vld [vmem:[#allocation2 + $0x48] sm:$0xff]
      %v3410 = vld [vmem:[#allocation2 + $0x50] sm:$0xff]
      %v3411 = vld [vmem:[#allocation2 + $0x58] sm:$0xff]
      %v3412 = vld [vmem:[#allocation2 + $0x60] sm:$0xff]
      %v3413 = vld [vmem:[#allocation2 + $0x68] sm:$0xff]
      %v3414 = vld [vmem:[#allocation2 + $0x70] sm:$0xff]
      %v3415 = vld [vmem:[#allocation2 + $0x78] sm:$0xff]
      %v3416 = vld [vmem:[#allocation2 + $0x80] sm:$0xff]
      %v3417 = vld [vmem:[#allocation2 + $0x88] sm:$0xff]
      %v3418 = vld [vmem:[#allocation2 + $0x90] sm:$0xff]
      %v3419 = vld [vmem:[#allocation2 + $0x98] sm:$0xff]
      %v3420 = vld [vmem:[#allocation2 + $0xa0] sm:$0xff]
      %v3421 = vld [vmem:[#allocation2 + $0xa8] sm:$0xff]
      %v3422 = vld [vmem:[#allocation2 + $0xb0] sm:$0xff]
      %v3423 = vld [vmem:[#allocation2 + $0xb8] sm:$0xff]
      %v3424 = vld [vmem:[#allocation2 + $0xc0] sm:$0xf]
      %v3425 = vld [vmem:[%s1] sm:$0xff]
      %v3426 = vld [vmem:[%s1 + $0x8] sm:$0xff]
      %v3427 = vld [vmem:[%s1 + $0x10] sm:$0xff]
      %v3428 = vld [vmem:[%s1 + $0x18] sm:$0xff]
      %v3429 = vld [vmem:[%s1 + $0x20] sm:$0xf]
      %vm3430 = vcmask 293888
      %v3432 = vsel %vm3430, %v3400, 0
      %v3435 = vsel %vm3430, %v3401, 0
      %v3438 = vsel %vm3430, %v3402, 0
      %v3441 = vsel %vm3430, %v3403, 0
      %v3444 = vsel %vm3430, %v3404, 0
      %v3447 = vsel %vm3430, %v3405, 0
      %v3450 = vsel %vm3430, %v3406, 0
      %v3453 = vsel %vm3430, %v3407, 0
      %v3456 = vsel %vm3430, %v3408, 0
      %v3459 = vsel %vm3430, %v3409, 0
      %v3462 = vsel %vm3430, %v3410, 0
      %v3465 = vsel %vm3430, %v3411, 0
      %v3468 = vsel %vm3430, %v3412, 0
      %v3471 = vsel %vm3430, %v3413, 0
      %v3474 = vsel %vm3430, %v3414, 0
      %v3477 = vsel %vm3430, %v3415, 0
      %v3480 = vsel %vm3430, %v3416, 0
      %v3483 = vsel %vm3430, %v3417, 0
      %v3486 = vsel %vm3430, %v3418, 0
      %v3489 = vsel %vm3430, %v3419, 0
      %v3492 = vsel %vm3430, %v3420, 0
      %v3495 = vsel %vm3430, %v3421, 0
      %v3498 = vsel %vm3430, %v3422, 0
      %v3501 = vsel %vm3430, %v3423, 0
      %v3504 = vsel %vm3430, %v3424, 0
      %vm3506 = vcmask 1043456
      %v3508 = vsel %vm3506, %v3429, 0
      %3510 = vmatpush.msra.mxu0 0.0
      %3511 = vmatpush.msra.mxu0 0.0
      %3512 = vmatpush.msra.mxu0 0.0
      %3513 = vmatpush.msra.mxu0 0.0
      %3514 = vmatpush.msra.mxu0 0.0
      %3515 = vmatpush.msra.mxu0 0.0
      %3516 = vmatpush.msra.mxu0 0.0
      %3517 = vmatpush.msra.mxu0 0.0
      %3518 = vmatpush.msra.mxu0 0.0
      %3519 = vmatpush.msra.mxu0 0.0
      %3520 = vmatpush.msra.mxu0 0.0
      %3521 = vmatpush.msra.mxu0 %v3508
      %3522 = vmatpush.msra.mxu0 %v3428
      %3523 = vmatpush.msra.mxu0 %v3427
      %3524 = vmatpush.msra.mxu0 %v3426
      %3525 = vmatpush.msra.mxu0 %v3425
      %3526 = vmatmul.f32.gmra.mxu0 %v3432
      %v3527 = vpop.f32.mrf.mxu0
      %v3528 = vadd.f32 0.0, %v3527
      %3529 = vmatmul.f32.gmra.mxu0 %v3435
      %v3530 = vpop.f32.mrf.mxu0
      %v3531 = vadd.f32 0.0, %v3530
      %3532 = vmatmul.f32.gmra.mxu0 %v3438
      %v3533 = vpop.f32.mrf.mxu0
      %v3534 = vadd.f32 0.0, %v3533
      %3535 = vmatmul.f32.gmra.mxu0 %v3441
      %v3536 = vpop.f32.mrf.mxu0
      %v3537 = vadd.f32 0.0, %v3536
      %3538 = vmatmul.f32.gmra.mxu0 %v3444
      %v3539 = vpop.f32.mrf.mxu0
      %v3540 = vadd.f32 0.0, %v3539
      %3541 = vmatmul.f32.gmra.mxu0 %v3447
      %v3542 = vpop.f32.mrf.mxu0
      %v3543 = vadd.f32 0.0, %v3542
      %3544 = vmatmul.f32.gmra.mxu0 %v3450
      %v3545 = vpop.f32.mrf.mxu0
      %v3546 = vadd.f32 0.0, %v3545
      %3547 = vmatmul.f32.gmra.mxu0 %v3453
      %v3548 = vpop.f32.mrf.mxu0
      %v3549 = vadd.f32 0.0, %v3548
      %3550 = vmatmul.f32.gmra.mxu0 %v3456
      %v3551 = vpop.f32.mrf.mxu0
      %v3552 = vadd.f32 0.0, %v3551
      %3553 = vmatmul.f32.gmra.mxu0 %v3459
      %v3554 = vpop.f32.mrf.mxu0
      %v3555 = vadd.f32 0.0, %v3554
      %3556 = vmatmul.f32.gmra.mxu0 %v3462
      %v3557 = vpop.f32.mrf.mxu0
      %v3558 = vadd.f32 0.0, %v3557
      %3559 = vmatmul.f32.gmra.mxu0 %v3465
      %v3560 = vpop.f32.mrf.mxu0
      %v3561 = vadd.f32 0.0, %v3560
      %3562 = vmatmul.f32.gmra.mxu0 %v3468
      %v3563 = vpop.f32.mrf.mxu0
      %v3564 = vadd.f32 0.0, %v3563
      %3565 = vmatmul.f32.gmra.mxu0 %v3471
      %v3566 = vpop.f32.mrf.mxu0
      %v3567 = vadd.f32 0.0, %v3566
      %3568 = vmatmul.f32.gmra.mxu0 %v3474
      %v3569 = vpop.f32.mrf.mxu0
      %v3570 = vadd.f32 0.0, %v3569
      %3571 = vmatmul.f32.gmra.mxu0 %v3477
      %v3572 = vpop.f32.mrf.mxu0
      %v3573 = vadd.f32 0.0, %v3572
      %3574 = vmatmul.f32.gmra.mxu0 %v3480
      %v3575 = vpop.f32.mrf.mxu0
      %v3576 = vadd.f32 0.0, %v3575
      %3577 = vmatmul.f32.gmra.mxu0 %v3483
      %v3578 = vpop.f32.mrf.mxu0
      %v3579 = vadd.f32 0.0, %v3578
      %3580 = vmatmul.f32.gmra.mxu0 %v3486
      %v3581 = vpop.f32.mrf.mxu0
      %v3582 = vadd.f32 0.0, %v3581
      %3583 = vmatmul.f32.gmra.mxu0 %v3489
      %v3584 = vpop.f32.mrf.mxu0
      %v3585 = vadd.f32 0.0, %v3584
      %3586 = vmatmul.f32.gmra.mxu0 %v3492
      %v3587 = vpop.f32.mrf.mxu0
      %v3588 = vadd.f32 0.0, %v3587
      %3589 = vmatmul.f32.gmra.mxu0 %v3495
      %v3590 = vpop.f32.mrf.mxu0
      %v3591 = vadd.f32 0.0, %v3590
      %3592 = vmatmul.f32.gmra.mxu0 %v3498
      %v3593 = vpop.f32.mrf.mxu0
      %v3594 = vadd.f32 0.0, %v3593
      %3595 = vmatmul.f32.gmra.mxu0 %v3501
      %v3596 = vpop.f32.mrf.mxu0
      %v3597 = vadd.f32 0.0, %v3596
      %3598 = vmatmul.f32.gmra.mxu0 %v3504
      %v3599 = vpop.f32.mrf.mxu0
      %v3600 = vadd.f32 0.0, %v3599
      %3601 = vdwg.mxu0
      %v3602 = vld [vmem:[%s217] sm:$0x1]
      %v3604 = vperm.slane %v3602, 0
      %v3606 = vmul.f32 %v3528, %v3604
      %v3607 = vmul.f32 %v3531, %v3604
      %v3608 = vmul.f32 %v3534, %v3604
      %v3609 = vmul.f32 %v3537, %v3604
      %v3610 = vmul.f32 %v3540, %v3604
      %v3611 = vmul.f32 %v3543, %v3604
      %v3612 = vmul.f32 %v3546, %v3604
      %v3613 = vmul.f32 %v3549, %v3604
      %v3614 = vmul.f32 %v3552, %v3604
      %v3615 = vmul.f32 %v3555, %v3604
      %v3616 = vmul.f32 %v3558, %v3604
      %v3617 = vmul.f32 %v3561, %v3604
      %v3618 = vmul.f32 %v3564, %v3604
      %v3619 = vmul.f32 %v3567, %v3604
      %v3620 = vmul.f32 %v3570, %v3604
      %v3621 = vmul.f32 %v3573, %v3604
      %v3622 = vmul.f32 %v3576, %v3604
      %v3623 = vmul.f32 %v3579, %v3604
      %v3624 = vmul.f32 %v3582, %v3604
      %v3625 = vmul.f32 %v3585, %v3604
      %v3626 = vmul.f32 %v3588, %v3604
      %v3627 = vmul.f32 %v3591, %v3604
      %v3628 = vmul.f32 %v3594, %v3604
      %v3629 = vmul.f32 %v3597, %v3604
      %v3630 = vmul.f32 %v3600, %v3604
      %v3631 = vld [vmem:[%s220] sm:$0x1]
      %v3633 = vperm.slane %v3631, 0
      %v3635 = vadd.f32 %v3606, %v3633
      %v3636 = vadd.f32 %v3607, %v3633
      %v3637 = vadd.f32 %v3608, %v3633
      %v3638 = vadd.f32 %v3609, %v3633
      %v3639 = vadd.f32 %v3610, %v3633
      %v3640 = vadd.f32 %v3611, %v3633
      %v3641 = vadd.f32 %v3612, %v3633
      %v3642 = vadd.f32 %v3613, %v3633
      %v3643 = vadd.f32 %v3614, %v3633
      %v3644 = vadd.f32 %v3615, %v3633
      %v3645 = vadd.f32 %v3616, %v3633
      %v3646 = vadd.f32 %v3617, %v3633
      %v3647 = vadd.f32 %v3618, %v3633
      %v3648 = vadd.f32 %v3619, %v3633
      %v3649 = vadd.f32 %v3620, %v3633
      %v3650 = vadd.f32 %v3621, %v3633
      %v3651 = vadd.f32 %v3622, %v3633
      %v3652 = vadd.f32 %v3623, %v3633
      %v3653 = vadd.f32 %v3624, %v3633
      %v3654 = vadd.f32 %v3625, %v3633
      %v3655 = vadd.f32 %v3626, %v3633
      %v3656 = vadd.f32 %v3627, %v3633
      %v3657 = vadd.f32 %v3628, %v3633
      %v3658 = vadd.f32 %v3629, %v3633
      %v3659 = vadd.f32 %v3630, %v3633
      %v3685 = vrot.slane %v3635, 2
      %v3686 = vrot.slane %v3635, 4
      %v3687 = vrot.slane %v3635, 6
      %v3688 = vrot.slane %v3636, 2
      %v3689 = vrot.slane %v3636, 4
      %v3690 = vrot.slane %v3636, 6
      %v3691 = vrot.slane %v3637, 2
      %v3692 = vrot.slane %v3637, 4
      %v3693 = vrot.slane %v3637, 6
      %v3694 = vrot.slane %v3638, 2
      %v3695 = vrot.slane %v3638, 4
      %v3696 = vrot.slane %v3638, 6
      %v3697 = vrot.slane %v3639, 2
      %v3698 = vrot.slane %v3639, 4
      %v3699 = vrot.slane %v3639, 6
      %v3700 = vrot.slane %v3640, 2
      %v3701 = vrot.slane %v3640, 4
      %v3702 = vrot.slane %v3640, 6
      %v3703 = vrot.slane %v3641, 2
      %v3704 = vrot.slane %v3641, 4
      %v3705 = vrot.slane %v3641, 6
      %v3706 = vrot.slane %v3642, 2
      %v3707 = vrot.slane %v3642, 4
      %v3708 = vrot.slane %v3642, 6
      %v3709 = vrot.slane %v3643, 2
      %v3710 = vrot.slane %v3643, 4
      %v3711 = vrot.slane %v3643, 6
      %v3712 = vrot.slane %v3644, 2
      %v3713 = vrot.slane %v3644, 4
      %v3714 = vrot.slane %v3644, 6
      %v3715 = vrot.slane %v3645, 2
      %v3716 = vrot.slane %v3645, 4
      %v3717 = vrot.slane %v3645, 6
      %v3718 = vrot.slane %v3646, 2
      %v3719 = vrot.slane %v3646, 4
      %v3720 = vrot.slane %v3646, 6
      %v3721 = vrot.slane %v3647, 2
      %v3722 = vrot.slane %v3647, 4
      %v3723 = vrot.slane %v3647, 6
      %v3724 = vrot.slane %v3648, 2
      %v3725 = vrot.slane %v3648, 4
      %v3726 = vrot.slane %v3648, 6
      %v3727 = vrot.slane %v3649, 2
      %v3728 = vrot.slane %v3649, 4
      %v3729 = vrot.slane %v3649, 6
      %v3730 = vrot.slane %v3650, 2
      %v3731 = vrot.slane %v3650, 4
      %v3732 = vrot.slane %v3650, 6
      %v3733 = vrot.slane %v3651, 2
      %v3734 = vrot.slane %v3651, 4
      %v3735 = vrot.slane %v3651, 6
      %v3736 = vrot.slane %v3652, 2
      %v3737 = vrot.slane %v3652, 4
      %v3738 = vrot.slane %v3652, 6
      %v3739 = vrot.slane %v3653, 2
      %v3740 = vrot.slane %v3653, 4
      %v3741 = vrot.slane %v3653, 6
      %v3742 = vrot.slane %v3654, 2
      %v3743 = vrot.slane %v3654, 4
      %v3744 = vrot.slane %v3654, 6
      %v3745 = vrot.slane %v3655, 2
      %v3746 = vrot.slane %v3655, 4
      %v3747 = vrot.slane %v3655, 6
      %v3748 = vrot.slane %v3656, 2
      %v3749 = vrot.slane %v3656, 4
      %v3750 = vrot.slane %v3656, 6
      %v3751 = vrot.slane %v3657, 2
      %v3752 = vrot.slane %v3657, 4
      %v3753 = vrot.slane %v3657, 6
      %v3754 = vrot.slane %v3658, 2
      %v3755 = vrot.slane %v3658, 4
      %v3756 = vrot.slane %v3658, 6
      %v3757 = vrot.slane %v3659, 2
      %3758 = vst [vmem:[#allocation1] ss:$4 sm:$0xff] %v3635
      %s3759 = scalar_lea.vmem [#allocation1], 1
      %3760 = vst [vmem:[%s3759] ss:$4 sm:$0xff] %v3685
      %s3761 = scalar_lea.vmem [#allocation1], 2
      %3762 = vst [vmem:[%s3761] ss:$4 sm:$0xff] %v3686
      %s3763 = scalar_lea.vmem [#allocation1], 3
      %3764 = vst [vmem:[%s3763] ss:$4 sm:$0xff] %v3687
      %s3765 = scalar_lea.vmem [#allocation1], 32
      %3766 = vst [vmem:[%s3765] ss:$4 sm:$0xff] %v3636
      %s3767 = scalar_lea.vmem [#allocation1], 33
      %3768 = vst [vmem:[%s3767] ss:$4 sm:$0xff] %v3688
      %s3769 = scalar_lea.vmem [#allocation1], 34
      %3770 = vst [vmem:[%s3769] ss:$4 sm:$0xff] %v3689
      %v3771 = vld.sshfl [vmem:[#allocation1] sm:$0xff pattern:$0x73625140]
      %v3772 = vld.sshfl [vmem:[#allocation1 + $0x20] sm:$0xff pattern:$0x73625140]
      %3773 = vst [vmem:[#allocation1] ss:$4 sm:$0xff] %v3690
      %3774 = vst [vmem:[%s3759] ss:$4 sm:$0xff] %v3637
      %3775 = vst [vmem:[%s3761] ss:$4 sm:$0xff] %v3691
      %3776 = vst [vmem:[%s3763] ss:$4 sm:$0xff] %v3692
      %3777 = vst [vmem:[%s3765] ss:$4 sm:$0xff] %v3693
      %3778 = vst [vmem:[%s3767] ss:$4 sm:$0xff] %v3638
      %3779 = vst [vmem:[%s3769] ss:$4 sm:$0xff] %v3694
      %v3780 = vld.sshfl [vmem:[#allocation1] sm:$0xff pattern:$0x73625140]
      %v3781 = vld.sshfl [vmem:[#allocation1 + $0x20] sm:$0xff pattern:$0x73625140]
      %3782 = vst [vmem:[#allocation1] ss:$4 sm:$0xff] %v3695
      %3783 = vst [vmem:[%s3759] ss:$4 sm:$0xff] %v3696
      %3784 = vst [vmem:[%s3761] ss:$4 sm:$0xff] %v3639
      %3785 = vst [vmem:[%s3763] ss:$4 sm:$0xff] %v3697
      %3786 = vst [vmem:[%s3765] ss:$4 sm:$0xff] %v3698
      %3787 = vst [vmem:[%s3767] ss:$4 sm:$0xff] %v3699
      %3788 = vst [vmem:[%s3769] ss:$4 sm:$0xff] %v3640
      %v3789 = vld.sshfl [vmem:[#allocation1] sm:$0xff pattern:$0x73625140]
      %v3790 = vld.sshfl [vmem:[#allocation1 + $0x20] sm:$0xff pattern:$0x73625140]
      %3791 = vst [vmem:[#allocation1] ss:$4 sm:$0xff] %v3700
      %3792 = vst [vmem:[%s3759] ss:$4 sm:$0xff] %v3701
      %3793 = vst [vmem:[%s3761] ss:$4 sm:$0xff] %v3702
      %3794 = vst [vmem:[%s3763] ss:$4 sm:$0xff] %v3641
      %3795 = vst [vmem:[%s3765] ss:$4 sm:$0xff] %v3703
      %3796 = vst [vmem:[%s3767] ss:$4 sm:$0xff] %v3704
      %3797 = vst [vmem:[%s3769] ss:$4 sm:$0xff] %v3705
      %v3798 = vld.sshfl [vmem:[#allocation1] sm:$0xff pattern:$0x73625140]
      %v3799 = vld.sshfl [vmem:[#allocation1 + $0x20] sm:$0xff pattern:$0x73625140]
      %3800 = vst [vmem:[#allocation1] ss:$4 sm:$0xff] %v3642
      %3801 = vst [vmem:[%s3759] ss:$4 sm:$0xff] %v3706
      %3802 = vst [vmem:[%s3761] ss:$4 sm:$0xff] %v3707
      %3803 = vst [vmem:[%s3763] ss:$4 sm:$0xff] %v3708
      %3804 = vst [vmem:[%s3765] ss:$4 sm:$0xff] %v3643
      %3805 = vst [vmem:[%s3767] ss:$4 sm:$0xff] %v3709
      %3806 = vst [vmem:[%s3769] ss:$4 sm:$0xff] %v3710
      %v3807 = vld.sshfl [vmem:[#allocation1] sm:$0xff pattern:$0x73625140]
      %v3808 = vld.sshfl [vmem:[#allocation1 + $0x20] sm:$0xff pattern:$0x73625140]
      %3809 = vst [vmem:[#allocation1] ss:$4 sm:$0xff] %v3711
      %3810 = vst [vmem:[%s3759] ss:$4 sm:$0xff] %v3644
      %3811 = vst [vmem:[%s3761] ss:$4 sm:$0xff] %v3712
      %3812 = vst [vmem:[%s3763] ss:$4 sm:$0xff] %v3713
      %3813 = vst [vmem:[%s3765] ss:$4 sm:$0xff] %v3714
      %3814 = vst [vmem:[%s3767] ss:$4 sm:$0xff] %v3645
      %3815 = vst [vmem:[%s3769] ss:$4 sm:$0xff] %v3715
      %v3816 = vld.sshfl [vmem:[#allocation1] sm:$0xff pattern:$0x73625140]
      %v3817 = vld.sshfl [vmem:[#allocation1 + $0x20] sm:$0xff pattern:$0x73625140]
      %3818 = vst [vmem:[#allocation1] ss:$4 sm:$0xff] %v3716
      %3819 = vst [vmem:[%s3759] ss:$4 sm:$0xff] %v3717
      %3820 = vst [vmem:[%s3761] ss:$4 sm:$0xff] %v3646
      %3821 = vst [vmem:[%s3763] ss:$4 sm:$0xff] %v3718
      %3822 = vst [vmem:[%s3765] ss:$4 sm:$0xff] %v3719
      %3823 = vst [vmem:[%s3767] ss:$4 sm:$0xff] %v3720
      %3824 = vst [vmem:[%s3769] ss:$4 sm:$0xff] %v3647
      %v3825 = vld.sshfl [vmem:[#allocation1] sm:$0xff pattern:$0x73625140]
      %v3826 = vld.sshfl [vmem:[#allocation1 + $0x20] sm:$0xff pattern:$0x73625140]
      %3827 = vst [vmem:[#allocation1] ss:$4 sm:$0xff] %v3721
      %3828 = vst [vmem:[%s3759] ss:$4 sm:$0xff] %v3722
      %3829 = vst [vmem:[%s3761] ss:$4 sm:$0xff] %v3723
      %3830 = vst [vmem:[%s3763] ss:$4 sm:$0xff] %v3648
      %3831 = vst [vmem:[%s3765] ss:$4 sm:$0xff] %v3724
      %3832 = vst [vmem:[%s3767] ss:$4 sm:$0xff] %v3725
      %3833 = vst [vmem:[%s3769] ss:$4 sm:$0xff] %v3726
      %v3834 = vld.sshfl [vmem:[#allocation1] sm:$0xff pattern:$0x73625140]
      %v3835 = vld.sshfl [vmem:[#allocation1 + $0x20] sm:$0xff pattern:$0x73625140]
      %3836 = vst [vmem:[#allocation1] ss:$4 sm:$0xff] %v3649
      %3837 = vst [vmem:[%s3759] ss:$4 sm:$0xff] %v3727
      %3838 = vst [vmem:[%s3761] ss:$4 sm:$0xff] %v3728
      %3839 = vst [vmem:[%s3763] ss:$4 sm:$0xff] %v3729
      %3840 = vst [vmem:[%s3765] ss:$4 sm:$0xff] %v3650
      %3841 = vst [vmem:[%s3767] ss:$4 sm:$0xff] %v3730
      %3842 = vst [vmem:[%s3769] ss:$4 sm:$0xff] %v3731
      %v3843 = vld.sshfl [vmem:[#allocation1] sm:$0xff pattern:$0x73625140]
      %v3844 = vld.sshfl [vmem:[#allocation1 + $0x20] sm:$0xff pattern:$0x73625140]
      %3845 = vst [vmem:[#allocation1] ss:$4 sm:$0xff] %v3732
      %3846 = vst [vmem:[%s3759] ss:$4 sm:$0xff] %v3651
      %3847 = vst [vmem:[%s3761] ss:$4 sm:$0xff] %v3733
      %3848 = vst [vmem:[%s3763] ss:$4 sm:$0xff] %v3734
      %3849 = vst [vmem:[%s3765] ss:$4 sm:$0xff] %v3735
      %3850 = vst [vmem:[%s3767] ss:$4 sm:$0xff] %v3652
      %3851 = vst [vmem:[%s3769] ss:$4 sm:$0xff] %v3736
      %v3852 = vld.sshfl [vmem:[#allocation1] sm:$0xff pattern:$0x73625140]
      %v3853 = vld.sshfl [vmem:[#allocation1 + $0x20] sm:$0xff pattern:$0x73625140]
      %3854 = vst [vmem:[#allocation1] ss:$4 sm:$0xff] %v3737
      %3855 = vst [vmem:[%s3759] ss:$4 sm:$0xff] %v3738
      %3856 = vst [vmem:[%s3761] ss:$4 sm:$0xff] %v3653
      %3857 = vst [vmem:[%s3763] ss:$4 sm:$0xff] %v3739
      %3858 = vst [vmem:[%s3765] ss:$4 sm:$0xff] %v3740
      %3859 = vst [vmem:[%s3767] ss:$4 sm:$0xff] %v3741
      %3860 = vst [vmem:[%s3769] ss:$4 sm:$0xff] %v3654
      %v3861 = vld.sshfl [vmem:[#allocation1] sm:$0xff pattern:$0x73625140]
      %v3862 = vld.sshfl [vmem:[#allocation1 + $0x20] sm:$0xff pattern:$0x73625140]
      %3863 = vst [vmem:[#allocation1] ss:$4 sm:$0xff] %v3742
      %3864 = vst [vmem:[%s3759] ss:$4 sm:$0xff] %v3743
      %3865 = vst [vmem:[%s3761] ss:$4 sm:$0xff] %v3744
      %3866 = vst [vmem:[%s3763] ss:$4 sm:$0xff] %v3655
      %3867 = vst [vmem:[%s3765] ss:$4 sm:$0xff] %v3745
      %3868 = vst [vmem:[%s3767] ss:$4 sm:$0xff] %v3746
      %3869 = vst [vmem:[%s3769] ss:$4 sm:$0xff] %v3747
      %v3870 = vld.sshfl [vmem:[#allocation1] sm:$0xff pattern:$0x73625140]
      %v3871 = vld.sshfl [vmem:[#allocation1 + $0x20] sm:$0xff pattern:$0x73625140]
      %3872 = vst [vmem:[#allocation1] ss:$4 sm:$0xff] %v3656
      %3873 = vst [vmem:[%s3759] ss:$4 sm:$0xff] %v3748
      %3874 = vst [vmem:[%s3761] ss:$4 sm:$0xff] %v3749
      %3875 = vst [vmem:[%s3763] ss:$4 sm:$0xff] %v3750
      %3876 = vst [vmem:[%s3765] ss:$4 sm:$0xff] %v3657
      %3877 = vst [vmem:[%s3767] ss:$4 sm:$0xff] %v3751
      %3878 = vst [vmem:[%s3769] ss:$4 sm:$0xff] %v3752
      %v3879 = vld.sshfl [vmem:[#allocation1] sm:$0xff pattern:$0x73625140]
      %v3880 = vld.sshfl [vmem:[#allocation1 + $0x20] sm:$0xff pattern:$0x73625140]
      %3881 = vst [vmem:[#allocation1] ss:$4 sm:$0xff] %v3753
      %3882 = vst [vmem:[%s3759] ss:$4 sm:$0xff] %v3658
      %3883 = vst [vmem:[%s3761] ss:$4 sm:$0xff] %v3754
      %3884 = vst [vmem:[%s3763] ss:$4 sm:$0xff] %v3755
      %3885 = vst [vmem:[%s3765] ss:$4 sm:$0xff] %v3756
      %3886 = vst [vmem:[%s3767] ss:$4 sm:$0xff] %v3659
      %3887 = vst [vmem:[%s3769] ss:$4 sm:$0xff] %v3757
      %v3888 = vld.sshfl [vmem:[#allocation1] sm:$0xff pattern:$0x73625140]
      %v3889 = vld.sshfl [vmem:[#allocation1 + $0x20] sm:$0xff pattern:$0x73625140]
      %3918 = vst.msk [vmem:[%s225] sm:$0xff] %vm507, %v3771
      %vm3919 = vcmask 29696
      %3920 = vst.msk [vmem:[%s225 + $0x8] sm:$0x3f] %vm3919, %v3772
      %3921 = vst.msk [vmem:[%s225 + $0x10] sm:$0xff] %vm507, %v3780
      %3922 = vst.msk [vmem:[%s225 + $0x18] sm:$0x3f] %vm3919, %v3781
      %3923 = vst.msk [vmem:[%s225 + $0x20] sm:$0xff] %vm507, %v3789
      %3924 = vst.msk [vmem:[%s225 + $0x28] sm:$0x3f] %vm3919, %v3790
      %3925 = vst.msk [vmem:[%s225 + $0x30] sm:$0xff] %vm507, %v3798
      %3926 = vst.msk [vmem:[%s225 + $0x38] sm:$0x3f] %vm3919, %v3799
      %3927 = vst.msk [vmem:[%s225 + $0x40] sm:$0xff] %vm507, %v3807
      %3928 = vst.msk [vmem:[%s225 + $0x48] sm:$0x3f] %vm3919, %v3808
      %3929 = vst.msk [vmem:[%s225 + $0x50] sm:$0xff] %vm507, %v3816
      %3930 = vst.msk [vmem:[%s225 + $0x58] sm:$0x3f] %vm3919, %v3817
      %3931 = vst.msk [vmem:[%s225 + $0x60] sm:$0xff] %vm507, %v3825
      %3932 = vst.msk [vmem:[%s225 + $0x68] sm:$0x3f] %vm3919, %v3826
      %3933 = vst.msk [vmem:[%s225 + $0x70] sm:$0xff] %vm507, %v3834
      %3934 = vst.msk [vmem:[%s225 + $0x78] sm:$0x3f] %vm3919, %v3835
      %3935 = vst.msk [vmem:[%s225 + $0x80] sm:$0xff] %vm507, %v3843
      %3936 = vst.msk [vmem:[%s225 + $0x88] sm:$0x3f] %vm3919, %v3844
      %3937 = vst.msk [vmem:[%s225 + $0x90] sm:$0xff] %vm507, %v3852
      %3938 = vst.msk [vmem:[%s225 + $0x98] sm:$0x3f] %vm3919, %v3853
      %3939 = vst.msk [vmem:[%s225 + $0xa0] sm:$0xff] %vm507, %v3861
      %3940 = vst.msk [vmem:[%s225 + $0xa8] sm:$0x3f] %vm3919, %v3862
      %3941 = vst.msk [vmem:[%s225 + $0xb0] sm:$0xff] %vm507, %v3870
      %3942 = vst.msk [vmem:[%s225 + $0xb8] sm:$0x3f] %vm3919, %v3871
      %3943 = vst.msk [vmem:[%s225 + $0xc0] sm:$0xff] %vm507, %v3879
      %3944 = vst.msk [vmem:[%s225 + $0xc8] sm:$0x3f] %vm3919, %v3880
      %3945 = vst.msk [vmem:[%s225 + $0xd0] sm:$0xff] %vm507, %v3888
      %3946 = vst.msk [vmem:[%s225 + $0xd8] sm:$0x3f] %vm3919, %v3889
      %p3947 = scmp.lt.s32.totalorder %s15, 1
      %s3948 = scalar_select %p3947, %s15, 1
      %s3949 = smul.addr %s3948, 28
      %s3950 = smul.addr %s3949, 8
      %s3951 = scalar_lea.vmem %s4, %s3950
      // Predicated region
      $region37: #{tpu_custom_call.1} parent=35 // pred_check
        %p3952 = pneg %p132
      $region38: #{tpu_custom_call.1} parent=35 // pred_check_branch
        %3954 = sbr.rel (%p3952) target = $region40
      $region39: #{tpu_custom_call.1} parent=35 // pred_region
        _
      $region40: #{tpu_custom_call.1} parent=35 // pred_fallthru
        _
    $region36: #{tpu_custom_call.1} parent=5 // pred_fallthru
      _
    %p3955 = scmp.le.s32.totalorder 2, %s10
    // Predicated region
    $region41: #{tpu_custom_call.1} parent=5 // pred_check
      %p3956 = pneg %p3955
    $region42: #{tpu_custom_call.1} parent=5 // pred_check_branch
      %3958 = sbr.rel (%p3956) target = $region44
    $region43: #{tpu_custom_call.1} parent=5 // pred_region
      %s3959 = ssub.s32 %s10, 2
      // Predicated region
      $region45: #{tpu_custom_call.1} parent=43 // pred_check
        %p3960 = pneg %p138
      $region46: #{tpu_custom_call.1} parent=43 // pred_check_branch
        %3962 = sbr.rel (%p3960) target = $region48
      $region47: #{tpu_custom_call.1} parent=43 // pred_region
        %p3963 = scmp.lt.s32.totalorder %s16, 1
        %s3964 = scalar_select %p3963, %s16, 1
        %s3965 = smul.addr %s3964, 28
        %s3966 = smul.addr %s3965, 8
        %s3967 = scalar_lea.vmem %s4, %s3966
      $region48: #{tpu_custom_call.1} parent=43 // pred_fallthru
        _
    $region44: #{tpu_custom_call.1} parent=5 // pred_fallthru
      _
  $region6: #{tpu_custom_call.1} parent=0 // loop_footer
    %s14 = sadd.s32 1, %s10
  $region7: #{tpu_custom_call.1} parent=0 // loop_footer_branch
    %9 = sbr.rel target = $region3
  $region8: #{tpu_custom_call.1} parent=0 // loop_exit
    _

</llo_original>
